<compile_context>
chip_gen: v7x
topology: tpu7x:2x2x1
jax: 0.10.0
libtpu: 0.0.40
codegen_flags: <defaults>
</compile_context>

<pallas_src>
import functools
import math

import numpy as np
import jax
import jax.numpy as jnp
from jax import lax
from jax.experimental import pallas as pl
from jax.experimental.pallas import tpu as pltpu


# ------------------------------ fused kernel --------------------------------

def _layernorm(v, gamma, beta, eps=1e-5):
    mean = jnp.mean(v, axis=-1, keepdims=True)
    cen = v - mean
    var = jnp.mean(cen * cen, axis=-1, keepdims=True)
    return cen * lax.rsqrt(var + eps) * gamma + beta


def decoder_fused_kernel(
        # activations / constants
        x_ref, enc_ref, smask_ref, cmask_ref, gq_ref, g_ref,
        # DecoderLayer.attention (masked self-attention over enc_out)
        sa_w_ref, sa_wo_ref, sa_bo_ref, nrm_g_ref, nrm_b_ref,
        # TransformerBlock.attention (key=enc_out, query=x, value=value)
        ca_w_ref, ca_wo_ref, ca_bo_ref, n1_g_ref, n1_b_ref,
        # feed-forward + norm2
        ff_w1_ref, ff_b1_ref, ff_w2_ref, ff_b2_ref, n2_g_ref, n2_b_ref,
        # final projection (vocab zero-padded to a multiple of 128 lanes)
        fc_w_ref, fc_b_ref,
        # output (B, S, Vpad) -- lane-dense store, sliced back to V in wrapper
        out_ref,
        *, batch, seq, embed, heads, layers):
    B, S, E, H = batch, seq, embed, heads
    BS, BHS = B * S, B * H * S
    f32 = jnp.float32

    x = x_ref[...]            # (B*S, E)    decoder stream (embedded tokens)
    enc = enc_ref[...]        # (B*S, E)    encoder output (constant per layer)
    smask = smask_ref[...]    # (B*H*S, B*S) additive: causal + cross-batch block
    cmask = cmask_ref[...]    # (B*H*S, B*S) additive: cross-batch block only
    gq = gq_ref[...]          # (B*H*S, E)  head indicator * 1/sqrt(head_dim)
    gch = g_ref[...]          # (B*H*S, E)  head indicator (0/1)

    def attention(q, k, v, wo_t, bo, mask_add):
        """All-heads MHA on (B*S, E) per-head-projected activations.

        The (b, h) batch axis is folded into sublanes: masking Q with the
        per-head channel indicator (scale folded in) and contracting the full
        E width against ALL keys gives every head's scaled scores in one
        (B*H*S, B*S) MXU matmul; cross-batch entries are killed by the
        additive mask.  PV is one (B*H*S, B*S)@(B*S, E) matmul; masking the
        result with the indicator and summing over the head axis rebuilds the
        concatenated head output.  Only leading-dim reshapes are used.
        """
        qg = jnp.broadcast_to(q.reshape(B, 1, S, E), (B, H, S, E)).reshape(BHS, E) * gq
        sc = lax.dot_general(qg, k, (((1,), (1,)), ((), ())),
                             preferred_element_type=f32)            # (BHS, BS)
        sc = sc + mask_add
        sc = sc - jnp.max(sc, axis=-1, keepdims=True)
        p = jnp.exp(sc)
        p = p * pl.reciprocal(jnp.sum(p, axis=-1, keepdims=True), approx=True)
        o = jnp.dot(p, v, preferred_element_type=f32)               # (BHS, E)
        concat = jnp.sum((o * gch).reshape(B, H, S, E), axis=1).reshape(BS, E)
        return jnp.dot(concat, wo_t, preferred_element_type=f32) + bo

    # TODO(synk): nn.Dropout(0.2) layers are treated as identity (eval mode).
    for l in range(layers):
        # ---- DecoderLayer.attention: MHA(enc, enc, enc, mask) ----
        q = jnp.dot(enc, sa_w_ref[l, 0], preferred_element_type=f32)
        k = jnp.dot(enc, sa_w_ref[l, 1], preferred_element_type=f32)
        v = jnp.dot(enc, sa_w_ref[l, 2], preferred_element_type=f32)
        attn = attention(q, k, v, sa_wo_ref[l], sa_bo_ref[l], smask)
        value = _layernorm(attn + enc, nrm_g_ref[l], nrm_b_ref[l])

        # ---- TransformerBlock.attention: key=enc, query=x, value=value (no causal mask) ----
        qp = jnp.dot(x, ca_w_ref[l, 0], preferred_element_type=f32)
        kp = jnp.dot(enc, ca_w_ref[l, 1], preferred_element_type=f32)
        vp = jnp.dot(value, ca_w_ref[l, 2], preferred_element_type=f32)
        attn2 = attention(qp, kp, vp, ca_wo_ref[l], ca_bo_ref[l], cmask)
        norm1 = _layernorm(attn2 + value, n1_g_ref[l], n1_b_ref[l])

        # ---- feed-forward + residual + norm2 ----
        h1 = jnp.maximum(
            jnp.dot(norm1, ff_w1_ref[l], preferred_element_type=f32) + ff_b1_ref[l], 0.0)
        ff = jnp.dot(h1, ff_w2_ref[l], preferred_element_type=f32) + ff_b2_ref[l]
        x = _layernorm(ff + norm1, n2_g_ref[l], n2_b_ref[l])

    # ---- fc_out + softmax over dim 0 (PyTorch implicit dim for a 3-D tensor) ----
    logits = jnp.dot(x, fc_w_ref[...], preferred_element_type=f32) + fc_b_ref[...]  # (BS, Vp)
    lg = logits.reshape(B, S, -1)                       # leading split only (layout-free)
    m = jnp.max(lg, axis=0, keepdims=True)
    e = jnp.exp(lg - m)
    out_ref[...] = e * pl.reciprocal(jnp.sum(e, axis=0, keepdims=True), approx=True)


# ------------------------------ wrapper (glue) -------------------------------

@functools.partial(jax.jit, static_argnames=("n_heads",))
def decoder_forward(tokens, enc_out, mask, params, *, n_heads):
    B, S = tokens.shape
    E = params["embed"].shape[1]
    H = n_heads
    hd = E // H
    L = params["sa_w"].shape[0]
    V = params["fc_w_t"].shape[1]
    Vp = ((V + 127) // 128) * 128        # lane-dense padded vocab

    # Cheap glue ops (embedding lookup + positional embedding); dropout = identity.
    x = jnp.take(params["embed"], tokens, axis=0)                     # (B, S, E)
    x = x * math.sqrt(E) + params["pe"][None, :S, :]
    x = x.reshape(B * S, E)
    enc = enc_out.reshape(B * S, E)

    # Head channel indicators, built once (hoisted out of the layer loop);
    # the 1/sqrt(head_dim) score scale is folded into the query mask.
    g = jnp.repeat(jnp.eye(H, dtype=jnp.float32), hd, axis=1)         # (H, E)
    gq_full = jnp.broadcast_to((g / math.sqrt(hd))[None, :, None, :],
                               (B, H, S, E)).reshape(B * H * S, E)
    g_full = jnp.broadcast_to(g[None, :, None, :],
                              (B, H, S, E)).reshape(B * H * S, E)

    # Additive masks for the sublane-folded (B*H*S, B*S) score matrix:
    # block cross-batch scores everywhere; add the causal mask for self-attn.
    NEG = jnp.float32(-1e20)
    row_b = jnp.arange(B * H * S) // (H * S)
    row_s = jnp.arange(B * H * S) % S
    col_b = jnp.arange(B * S) // S
    col_s = jnp.arange(B * S) % S
    block = jnp.where(row_b[:, None] == col_b[None, :], 0.0, NEG).astype(jnp.float32)
    causal = jnp.where(mask[row_s[:, None], col_s[None, :]] == 0, NEG, 0.0).astype(jnp.float32)
    smask = block + causal
    cmask = block

    # Lane-dense final projection: zero-pad vocab so the output store is an
    # unmasked full-lane vst; slice back to V after the call.
    fc_w = jnp.pad(params["fc_w_t"], ((0, 0), (0, Vp - V)))
    fc_b = jnp.pad(params["fc_b"], ((0, 0), (0, Vp - V)))

    kernel = functools.partial(decoder_fused_kernel,
                               batch=B, seq=S, embed=E, heads=H, layers=L)
    operands = (
        x, enc, smask, cmask, gq_full, g_full,
        params["sa_w"], params["sa_wo_t"], params["sa_bo"],
        params["norm_g"], params["norm_b"],
        params["ca_w"], params["ca_wo_t"], params["ca_bo"],
        params["n1_g"], params["n1_b"],
        params["ff_w1_t"], params["ff_b1"], params["ff_w2_t"], params["ff_b2"],
        params["n2_g"], params["n2_b"],
        fc_w, fc_b,
    )
    vmem_spec = pl.BlockSpec(memory_space=pltpu.MemorySpace.VMEM)
    out = pl.pallas_call(
        kernel,
        out_shape=jax.ShapeDtypeStruct((B, S, Vp), jnp.float32),
        in_specs=[vmem_spec] * len(operands),
        out_specs=vmem_spec,
    )(*operands)
    return out[:, :, :V]


# ------------------------- parameter construction ---------------------------

def positional_embedding(seq_len, embed_dim):
    # Exact formula of the tutorial PositionalEmbedding (with its 2*i quirk).
    pe = np.zeros((seq_len, embed_dim), dtype=np.float32)
    for pos in range(seq_len):
        for i in range(0, embed_dim, 2):
            pe[pos, i] = math.sin(pos / (10000 ** ((2 * i) / embed_dim)))
            pe[pos, i + 1] = math.cos(pos / (10000 ** ((2 * (i + 1)) / embed_dim)))
    return jnp.asarray(pe)


def init_decoder_params(key, vocab, embed_dim, seq_len, num_layers, expansion, n_heads):
    E = embed_dim
    hd = E // n_heads
    hidden = expansion * E
    keys = jax.random.split(key, 3 + num_layers)

    def lin(k, shape, fan_in):
        # PyTorch Linear default: U(-1/sqrt(fan_in), 1/sqrt(fan_in)) for weight & bias.
        bound = 1.0 / math.sqrt(fan_in)
        return jax.random.uniform(k, shape, jnp.float32, -bound, bound)

    def head_blockdiag(k):
        # Per-head Linear(hd, hd, bias=False) weight, shared across heads,
        # folded into an (E, E) block-diagonal right-multiply matrix.
        w = lin(k, (hd, hd), hd)
        return jnp.kron(jnp.eye(n_heads, dtype=jnp.float32), w.T)

    ones = jnp.ones((1, E), jnp.float32)
    zeros = jnp.zeros((1, E), jnp.float32)

    names = ("sa_w", "sa_wo_t", "sa_bo", "norm_g", "norm_b",
             "ca_w", "ca_wo_t", "ca_bo", "n1_g", "n1_b",
             "ff_w1_t", "ff_b1", "ff_w2_t", "ff_b2", "n2_g", "n2_b")
    per_layer = {n: [] for n in names}

    for l in range(num_layers):
        lk = jax.random.split(keys[3 + l], 14)
        # (3, E, E): q-, k-, v- projections, leading-axis indexed in the kernel.
        per_layer["sa_w"].append(jnp.stack(
            [head_blockdiag(lk[0]), head_blockdiag(lk[1]), head_blockdiag(lk[2])], axis=0))
        per_layer["sa_wo_t"].append(lin(lk[3], (E, E), E))          # right-mul form
        per_layer["sa_bo"].append(lin(lk[4], (1, E), E))
        per_layer["norm_g"].append(ones); per_layer["norm_b"].append(zeros)
        per_layer["ca_w"].append(jnp.stack(
            [head_blockdiag(lk[5]), head_blockdiag(lk[6]), head_blockdiag(lk[7])], axis=0))
        per_layer["ca_wo_t"].append(lin(lk[8], (E, E), E))
        per_layer["ca_bo"].append(lin(lk[9], (1, E), E))
        per_layer["n1_g"].append(ones); per_layer["n1_b"].append(zeros)
        per_layer["ff_w1_t"].append(lin(lk[10], (E, hidden), E))
        per_layer["ff_b1"].append(lin(lk[11], (1, hidden), E))
        per_layer["ff_w2_t"].append(lin(lk[12], (hidden, E), hidden))
        per_layer["ff_b2"].append(lin(lk[13], (1, E), hidden))
        per_layer["n2_g"].append(ones); per_layer["n2_b"].append(zeros)

    params = {
        "embed": jax.random.normal(keys[0], (vocab, E), jnp.float32),
        "pe": positional_embedding(seq_len, E),
        "fc_w_t": lin(keys[1], (E, vocab), E),
        "fc_b": lin(keys[2], (1, vocab), E),
    }
    for n in names:
        params[n] = jnp.stack(per_layer[n], axis=0)                 # stack over layers
    return params


# ----------------------------------- main ------------------------------------

if __name__ == "__main__":
    B, S, E, H, V, L, EXP = 2, 8, 32, 8, 16, 2, 4   # batch, seq, embed, heads, vocab, layers, expansion
    key = jax.random.PRNGKey(0)
    k_tok, k_enc, k_par = jax.random.split(key, 3)

    tokens = jax.random.randint(k_tok, (B, S), 0, V, dtype=jnp.int32)
    enc_out = jax.random.normal(k_enc, (B, S, E), jnp.float32)
    mask = jnp.tril(jnp.ones((S, S), jnp.float32))   # causal target mask

    params = init_decoder_params(k_par, V, E, S, L, EXP, H)

    out = decoder_forward(tokens, enc_out, mask, params, n_heads=H)
    out = jax.block_until_ready(out)
    assert out.shape == (B, S, V)
    assert bool(jnp.all(jnp.isfinite(out)))
    print("KERNEL_OK")
</pallas_src>

<mosaic_0001>
module attributes {stable_mosaic.version = 11 : i64} {
  func.func @decoder_fused_kernel(%arg0: memref<16x32xf32, #tpu.memory_space<vmem>>, %arg1: memref<16x32xf32, #tpu.memory_space<vmem>>, %arg2: memref<128x16xf32, #tpu.memory_space<vmem>>, %arg3: memref<128x16xf32, #tpu.memory_space<vmem>>, %arg4: memref<128x32xf32, #tpu.memory_space<vmem>>, %arg5: memref<128x32xf32, #tpu.memory_space<vmem>>, %arg6: memref<2x3x32x32xf32, #tpu.memory_space<vmem>>, %arg7: memref<2x32x32xf32, #tpu.memory_space<vmem>>, %arg8: memref<2x1x32xf32, #tpu.memory_space<vmem>>, %arg9: memref<2x1x32xf32, #tpu.memory_space<vmem>>, %arg10: memref<2x1x32xf32, #tpu.memory_space<vmem>>, %arg11: memref<2x3x32x32xf32, #tpu.memory_space<vmem>>, %arg12: memref<2x32x32xf32, #tpu.memory_space<vmem>>, %arg13: memref<2x1x32xf32, #tpu.memory_space<vmem>>, %arg14: memref<2x1x32xf32, #tpu.memory_space<vmem>>, %arg15: memref<2x1x32xf32, #tpu.memory_space<vmem>>, %arg16: memref<2x32x128xf32, #tpu.memory_space<vmem>>, %arg17: memref<2x1x128xf32, #tpu.memory_space<vmem>>, %arg18: memref<2x128x32xf32, #tpu.memory_space<vmem>>, %arg19: memref<2x1x32xf32, #tpu.memory_space<vmem>>, %arg20: memref<2x1x32xf32, #tpu.memory_space<vmem>>, %arg21: memref<2x1x32xf32, #tpu.memory_space<vmem>>, %arg22: memref<32x128xf32, #tpu.memory_space<vmem>>, %arg23: memref<1x128xf32, #tpu.memory_space<vmem>>, %arg24: memref<2x8x128xf32, #tpu.memory_space<vmem>>) attributes {dimension_semantics = [], scalar_prefetch = 0 : i64, scratch_operands = 0 : i64, tpu.core_type = #tpu.core_type<tc>} {
    %c0 = arith.constant 0 : index
    %c0_0 = arith.constant 0 : index
    %0 = vector.load %arg0[%c0, %c0_0] : memref<16x32xf32, #tpu.memory_space<vmem>>, vector<16x32xf32>
    %c0_1 = arith.constant 0 : index
    %c0_2 = arith.constant 0 : index
    %1 = vector.load %arg1[%c0_1, %c0_2] : memref<16x32xf32, #tpu.memory_space<vmem>>, vector<16x32xf32>
    %c0_3 = arith.constant 0 : index
    %c0_4 = arith.constant 0 : index
    %2 = vector.load %arg2[%c0_3, %c0_4] : memref<128x16xf32, #tpu.memory_space<vmem>>, vector<128x16xf32>
    %c0_5 = arith.constant 0 : index
    %c0_6 = arith.constant 0 : index
    %3 = vector.load %arg3[%c0_5, %c0_6] : memref<128x16xf32, #tpu.memory_space<vmem>>, vector<128x16xf32>
    %c0_7 = arith.constant 0 : index
    %c0_8 = arith.constant 0 : index
    %4 = vector.load %arg4[%c0_7, %c0_8] : memref<128x32xf32, #tpu.memory_space<vmem>>, vector<128x32xf32>
    %c0_9 = arith.constant 0 : index
    %c0_10 = arith.constant 0 : index
    %5 = vector.load %arg5[%c0_9, %c0_10] : memref<128x32xf32, #tpu.memory_space<vmem>>, vector<128x32xf32>
    %c0_11 = arith.constant 0 : index
    %c0_12 = arith.constant 0 : index
    %c0_13 = arith.constant 0 : index
    %c0_14 = arith.constant 0 : index
    %6 = vector.load %arg6[%c0_11, %c0_12, %c0_13, %c0_14] : memref<2x3x32x32xf32, #tpu.memory_space<vmem>>, vector<1x1x32x32xf32>
    %7 = vector.shape_cast %6 : vector<1x1x32x32xf32> to vector<32x32xf32>
    %cst = arith.constant dense<0.000000e+00> : vector<16x32xf32>
    %8 = tpu.matmul %1, %7, %cst {dimension_numbers = #tpu.dot_dimension_numbers<[1], [0], [0], [1], [0, 0, 1, 1], [], []>} : vector<16x32xf32>, vector<32x32xf32>, vector<16x32xf32> -> vector<16x32xf32>
    %c0_15 = arith.constant 0 : index
    %c1 = arith.constant 1 : index
    %c0_16 = arith.constant 0 : index
    %c0_17 = arith.constant 0 : index
    %9 = vector.load %arg6[%c0_15, %c1, %c0_16, %c0_17] : memref<2x3x32x32xf32, #tpu.memory_space<vmem>>, vector<1x1x32x32xf32>
    %10 = vector.shape_cast %9 : vector<1x1x32x32xf32> to vector<32x32xf32>
    %cst_18 = arith.constant dense<0.000000e+00> : vector<16x32xf32>
    %11 = tpu.matmul %1, %10, %cst_18 {dimension_numbers = #tpu.dot_dimension_numbers<[1], [0], [0], [1], [0, 0, 1, 1], [], []>} : vector<16x32xf32>, vector<32x32xf32>, vector<16x32xf32> -> vector<16x32xf32>
    %c0_19 = arith.constant 0 : index
    %c2 = arith.constant 2 : index
    %c0_20 = arith.constant 0 : index
    %c0_21 = arith.constant 0 : index
    %12 = vector.load %arg6[%c0_19, %c2, %c0_20, %c0_21] : memref<2x3x32x32xf32, #tpu.memory_space<vmem>>, vector<1x1x32x32xf32>
    %13 = vector.shape_cast %12 : vector<1x1x32x32xf32> to vector<32x32xf32>
    %cst_22 = arith.constant dense<0.000000e+00> : vector<16x32xf32>
    %14 = tpu.matmul %1, %13, %cst_22 {dimension_numbers = #tpu.dot_dimension_numbers<[1], [0], [0], [1], [0, 0, 1, 1], [], []>} : vector<16x32xf32>, vector<32x32xf32>, vector<16x32xf32> -> vector<16x32xf32>
    %c0_23 = arith.constant 0 : index
    %c0_24 = arith.constant 0 : index
    %c0_25 = arith.constant 0 : index
    %15 = vector.load %arg7[%c0_23, %c0_24, %c0_25] : memref<2x32x32xf32, #tpu.memory_space<vmem>>, vector<1x32x32xf32>
    %16 = vector.shape_cast %15 : vector<1x32x32xf32> to vector<32x32xf32>
    %c0_26 = arith.constant 0 : index
    %c0_27 = arith.constant 0 : index
    %c0_28 = arith.constant 0 : index
    %17 = vector.load %arg8[%c0_26, %c0_27, %c0_28] : memref<2x1x32xf32, #tpu.memory_space<vmem>>, vector<1x1x32xf32>
    %18 = vector.shape_cast %17 : vector<1x1x32xf32> to vector<1x32xf32>
    %19 = vector.shape_cast %8 : vector<16x32xf32> to vector<2x1x8x32xf32>
    %20 = vector.shape_cast %19 : vector<2x1x8x32xf32> to vector<2x1x8x32xf32>
    %21 = vector.broadcast %20 : vector<2x1x8x32xf32> to vector<2x8x8x32xf32>
    %22 = vector.shape_cast %21 : vector<2x8x8x32xf32> to vector<128x32xf32>
    %23 = arith.mulf %22, %4 : vector<128x32xf32>
    %cst_29 = arith.constant dense<0.000000e+00> : vector<128x16xf32>
    %24 = tpu.matmul %23, %11, %cst_29 {dimension_numbers = #tpu.dot_dimension_numbers<[1], [1], [0], [0], [0, 0, 1, 0], [], []>} : vector<128x32xf32>, vector<16x32xf32>, vector<128x16xf32> -> vector<128x16xf32>
    %25 = arith.addf %24, %2 : vector<128x16xf32>
    %cst_30 = arith.constant dense<0xFF800000> : vector<128xf32>
    %26 = vector.multi_reduction <maximumf>, %25, %cst_30 [1] : vector<128x16xf32> to vector<128xf32>
    %27 = vector.shape_cast %26 : vector<128xf32> to vector<128x1xf32>
    %28 = vector.broadcast %27 : vector<128x1xf32> to vector<128x16xf32>
    %29 = arith.subf %25, %28 : vector<128x16xf32>
    %30 = math.exp %29 : vector<128x16xf32>
    %cst_31 = arith.constant dense<0.000000e+00> : vector<128xf32>
    %31 = vector.multi_reduction <add>, %30, %cst_31 [1] : vector<128x16xf32> to vector<128xf32>
    %32 = vector.shape_cast %31 : vector<128xf32> to vector<128x1xf32>
    %33 = tpu.reciprocal %32 {approx = true} : vector<128x1xf32> -> vector<128x1xf32>
    %34 = vector.broadcast %33 : vector<128x1xf32> to vector<128x16xf32>
    %35 = arith.mulf %30, %34 : vector<128x16xf32>
    %cst_32 = arith.constant dense<0.000000e+00> : vector<128x32xf32>
    %36 = tpu.matmul %35, %14, %cst_32 {dimension_numbers = #tpu.dot_dimension_numbers<[1], [0], [0], [1], [0, 0, 1, 1], [], []>} : vector<128x16xf32>, vector<16x32xf32>, vector<128x32xf32> -> vector<128x32xf32>
    %37 = arith.mulf %36, %5 : vector<128x32xf32>
    %38 = vector.shape_cast %37 : vector<128x32xf32> to vector<2x8x8x32xf32>
    %cst_33 = arith.constant dense<0.000000e+00> : vector<2x8x32xf32>
    %39 = vector.multi_reduction <add>, %38, %cst_33 [1] : vector<2x8x8x32xf32> to vector<2x8x32xf32>
    %40 = vector.shape_cast %39 : vector<2x8x32xf32> to vector<16x32xf32>
    %cst_34 = arith.constant dense<0.000000e+00> : vector<16x32xf32>
    %41 = tpu.matmul %40, %16, %cst_34 {dimension_numbers = #tpu.dot_dimension_numbers<[1], [0], [0], [1], [0, 0, 1, 1], [], []>} : vector<16x32xf32>, vector<32x32xf32>, vector<16x32xf32> -> vector<16x32xf32>
    %42 = vector.broadcast %18 : vector<1x32xf32> to vector<16x32xf32>
    %43 = arith.addf %41, %42 : vector<16x32xf32>
    %44 = arith.addf %43, %1 : vector<16x32xf32>
    %c0_35 = arith.constant 0 : index
    %c0_36 = arith.constant 0 : index
    %c0_37 = arith.constant 0 : index
    %45 = vector.load %arg9[%c0_35, %c0_36, %c0_37] : memref<2x1x32xf32, #tpu.memory_space<vmem>>, vector<1x1x32xf32>
    %46 = vector.shape_cast %45 : vector<1x1x32xf32> to vector<1x32xf32>
    %c0_38 = arith.constant 0 : index
    %c0_39 = arith.constant 0 : index
    %c0_40 = arith.constant 0 : index
    %47 = vector.load %arg10[%c0_38, %c0_39, %c0_40] : memref<2x1x32xf32, #tpu.memory_space<vmem>>, vector<1x1x32xf32>
    %48 = vector.shape_cast %47 : vector<1x1x32xf32> to vector<1x32xf32>
    %cst_41 = arith.constant dense<0.000000e+00> : vector<16xf32>
    %49 = vector.multi_reduction <add>, %44, %cst_41 [1] : vector<16x32xf32> to vector<16xf32>
    %50 = vector.shape_cast %49 : vector<16xf32> to vector<16x1xf32>
    %cst_42 = arith.constant 3.200000e+01 : f32
    %51 = vector.broadcast %cst_42 : f32 to vector<16x1xf32>
    %52 = arith.divf %50, %51 : vector<16x1xf32>
    %53 = vector.broadcast %52 : vector<16x1xf32> to vector<16x32xf32>
    %54 = arith.subf %44, %53 : vector<16x32xf32>
    %55 = arith.mulf %54, %54 : vector<16x32xf32>
    %cst_43 = arith.constant dense<0.000000e+00> : vector<16xf32>
    %56 = vector.multi_reduction <add>, %55, %cst_43 [1] : vector<16x32xf32> to vector<16xf32>
    %57 = vector.shape_cast %56 : vector<16xf32> to vector<16x1xf32>
    %cst_44 = arith.constant 3.200000e+01 : f32
    %58 = vector.broadcast %cst_44 : f32 to vector<16x1xf32>
    %59 = arith.divf %57, %58 : vector<16x1xf32>
    %cst_45 = arith.constant 9.99999974E-6 : f32
    %60 = vector.broadcast %cst_45 : f32 to vector<16x1xf32>
    %61 = arith.addf %59, %60 : vector<16x1xf32>
    %62 = math.rsqrt %61 : vector<16x1xf32>
    %63 = vector.broadcast %62 : vector<16x1xf32> to vector<16x32xf32>
    %64 = arith.mulf %54, %63 : vector<16x32xf32>
    %65 = vector.broadcast %46 : vector<1x32xf32> to vector<16x32xf32>
    %66 = arith.mulf %64, %65 : vector<16x32xf32>
    %67 = vector.broadcast %48 : vector<1x32xf32> to vector<16x32xf32>
    %68 = arith.addf %66, %67 : vector<16x32xf32>
    %c0_46 = arith.constant 0 : index
    %c0_47 = arith.constant 0 : index
    %c0_48 = arith.constant 0 : index
    %c0_49 = arith.constant 0 : index
    %69 = vector.load %arg11[%c0_46, %c0_47, %c0_48, %c0_49] : memref<2x3x32x32xf32, #tpu.memory_space<vmem>>, vector<1x1x32x32xf32>
    %70 = vector.shape_cast %69 : vector<1x1x32x32xf32> to vector<32x32xf32>
    %cst_50 = arith.constant dense<0.000000e+00> : vector<16x32xf32>
    %71 = tpu.matmul %0, %70, %cst_50 {dimension_numbers = #tpu.dot_dimension_numbers<[1], [0], [0], [1], [0, 0, 1, 1], [], []>} : vector<16x32xf32>, vector<32x32xf32>, vector<16x32xf32> -> vector<16x32xf32>
    %c0_51 = arith.constant 0 : index
    %c1_52 = arith.constant 1 : index
    %c0_53 = arith.constant 0 : index
    %c0_54 = arith.constant 0 : index
    %72 = vector.load %arg11[%c0_51, %c1_52, %c0_53, %c0_54] : memref<2x3x32x32xf32, #tpu.memory_space<vmem>>, vector<1x1x32x32xf32>
    %73 = vector.shape_cast %72 : vector<1x1x32x32xf32> to vector<32x32xf32>
    %cst_55 = arith.constant dense<0.000000e+00> : vector<16x32xf32>
    %74 = tpu.matmul %1, %73, %cst_55 {dimension_numbers = #tpu.dot_dimension_numbers<[1], [0], [0], [1], [0, 0, 1, 1], [], []>} : vector<16x32xf32>, vector<32x32xf32>, vector<16x32xf32> -> vector<16x32xf32>
    %c0_56 = arith.constant 0 : index
    %c2_57 = arith.constant 2 : index
    %c0_58 = arith.constant 0 : index
    %c0_59 = arith.constant 0 : index
    %75 = vector.load %arg11[%c0_56, %c2_57, %c0_58, %c0_59] : memref<2x3x32x32xf32, #tpu.memory_space<vmem>>, vector<1x1x32x32xf32>
    %76 = vector.shape_cast %75 : vector<1x1x32x32xf32> to vector<32x32xf32>
    %cst_60 = arith.constant dense<0.000000e+00> : vector<16x32xf32>
    %77 = tpu.matmul %68, %76, %cst_60 {dimension_numbers = #tpu.dot_dimension_numbers<[1], [0], [0], [1], [0, 0, 1, 1], [], []>} : vector<16x32xf32>, vector<32x32xf32>, vector<16x32xf32> -> vector<16x32xf32>
    %c0_61 = arith.constant 0 : index
    %c0_62 = arith.constant 0 : index
    %c0_63 = arith.constant 0 : index
    %78 = vector.load %arg12[%c0_61, %c0_62, %c0_63] : memref<2x32x32xf32, #tpu.memory_space<vmem>>, vector<1x32x32xf32>
    %79 = vector.shape_cast %78 : vector<1x32x32xf32> to vector<32x32xf32>
    %c0_64 = arith.constant 0 : index
    %c0_65 = arith.constant 0 : index
    %c0_66 = arith.constant 0 : index
    %80 = vector.load %arg13[%c0_64, %c0_65, %c0_66] : memref<2x1x32xf32, #tpu.memory_space<vmem>>, vector<1x1x32xf32>
    %81 = vector.shape_cast %80 : vector<1x1x32xf32> to vector<1x32xf32>
    %82 = vector.shape_cast %71 : vector<16x32xf32> to vector<2x1x8x32xf32>
    %83 = vector.shape_cast %82 : vector<2x1x8x32xf32> to vector<2x1x8x32xf32>
    %84 = vector.broadcast %83 : vector<2x1x8x32xf32> to vector<2x8x8x32xf32>
    %85 = vector.shape_cast %84 : vector<2x8x8x32xf32> to vector<128x32xf32>
    %86 = arith.mulf %85, %4 : vector<128x32xf32>
    %cst_67 = arith.constant dense<0.000000e+00> : vector<128x16xf32>
    %87 = tpu.matmul %86, %74, %cst_67 {dimension_numbers = #tpu.dot_dimension_numbers<[1], [1], [0], [0], [0, 0, 1, 0], [], []>} : vector<128x32xf32>, vector<16x32xf32>, vector<128x16xf32> -> vector<128x16xf32>
    %88 = arith.addf %87, %3 : vector<128x16xf32>
    %cst_68 = arith.constant dense<0xFF800000> : vector<128xf32>
    %89 = vector.multi_reduction <maximumf>, %88, %cst_68 [1] : vector<128x16xf32> to vector<128xf32>
    %90 = vector.shape_cast %89 : vector<128xf32> to vector<128x1xf32>
    %91 = vector.broadcast %90 : vector<128x1xf32> to vector<128x16xf32>
    %92 = arith.subf %88, %91 : vector<128x16xf32>
    %93 = math.exp %92 : vector<128x16xf32>
    %cst_69 = arith.constant dense<0.000000e+00> : vector<128xf32>
    %94 = vector.multi_reduction <add>, %93, %cst_69 [1] : vector<128x16xf32> to vector<128xf32>
    %95 = vector.shape_cast %94 : vector<128xf32> to vector<128x1xf32>
    %96 = tpu.reciprocal %95 {approx = true} : vector<128x1xf32> -> vector<128x1xf32>
    %97 = vector.broadcast %96 : vector<128x1xf32> to vector<128x16xf32>
    %98 = arith.mulf %93, %97 : vector<128x16xf32>
    %cst_70 = arith.constant dense<0.000000e+00> : vector<128x32xf32>
    %99 = tpu.matmul %98, %77, %cst_70 {dimension_numbers = #tpu.dot_dimension_numbers<[1], [0], [0], [1], [0, 0, 1, 1], [], []>} : vector<128x16xf32>, vector<16x32xf32>, vector<128x32xf32> -> vector<128x32xf32>
    %100 = arith.mulf %99, %5 : vector<128x32xf32>
    %101 = vector.shape_cast %100 : vector<128x32xf32> to vector<2x8x8x32xf32>
    %cst_71 = arith.constant dense<0.000000e+00> : vector<2x8x32xf32>
    %102 = vector.multi_reduction <add>, %101, %cst_71 [1] : vector<2x8x8x32xf32> to vector<2x8x32xf32>
    %103 = vector.shape_cast %102 : vector<2x8x32xf32> to vector<16x32xf32>
    %cst_72 = arith.constant dense<0.000000e+00> : vector<16x32xf32>
    %104 = tpu.matmul %103, %79, %cst_72 {dimension_numbers = #tpu.dot_dimension_numbers<[1], [0], [0], [1], [0, 0, 1, 1], [], []>} : vector<16x32xf32>, vector<32x32xf32>, vector<16x32xf32> -> vector<16x32xf32>
    %105 = vector.broadcast %81 : vector<1x32xf32> to vector<16x32xf32>
    %106 = arith.addf %104, %105 : vector<16x32xf32>
    %107 = arith.addf %106, %68 : vector<16x32xf32>
    %c0_73 = arith.constant 0 : index
    %c0_74 = arith.constant 0 : index
    %c0_75 = arith.constant 0 : index
    %108 = vector.load %arg14[%c0_73, %c0_74, %c0_75] : memref<2x1x32xf32, #tpu.memory_space<vmem>>, vector<1x1x32xf32>
    %109 = vector.shape_cast %108 : vector<1x1x32xf32> to vector<1x32xf32>
    %c0_76 = arith.constant 0 : index
    %c0_77 = arith.constant 0 : index
    %c0_78 = arith.constant 0 : index
    %110 = vector.load %arg15[%c0_76, %c0_77, %c0_78] : memref<2x1x32xf32, #tpu.memory_space<vmem>>, vector<1x1x32xf32>
    %111 = vector.shape_cast %110 : vector<1x1x32xf32> to vector<1x32xf32>
    %cst_79 = arith.constant dense<0.000000e+00> : vector<16xf32>
    %112 = vector.multi_reduction <add>, %107, %cst_79 [1] : vector<16x32xf32> to vector<16xf32>
    %113 = vector.shape_cast %112 : vector<16xf32> to vector<16x1xf32>
    %cst_80 = arith.constant 3.200000e+01 : f32
    %114 = vector.broadcast %cst_80 : f32 to vector<16x1xf32>
    %115 = arith.divf %113, %114 : vector<16x1xf32>
    %116 = vector.broadcast %115 : vector<16x1xf32> to vector<16x32xf32>
    %117 = arith.subf %107, %116 : vector<16x32xf32>
    %118 = arith.mulf %117, %117 : vector<16x32xf32>
    %cst_81 = arith.constant dense<0.000000e+00> : vector<16xf32>
    %119 = vector.multi_reduction <add>, %118, %cst_81 [1] : vector<16x32xf32> to vector<16xf32>
    %120 = vector.shape_cast %119 : vector<16xf32> to vector<16x1xf32>
    %cst_82 = arith.constant 3.200000e+01 : f32
    %121 = vector.broadcast %cst_82 : f32 to vector<16x1xf32>
    %122 = arith.divf %120, %121 : vector<16x1xf32>
    %cst_83 = arith.constant 9.99999974E-6 : f32
    %123 = vector.broadcast %cst_83 : f32 to vector<16x1xf32>
    %124 = arith.addf %122, %123 : vector<16x1xf32>
    %125 = math.rsqrt %124 : vector<16x1xf32>
    %126 = vector.broadcast %125 : vector<16x1xf32> to vector<16x32xf32>
    %127 = arith.mulf %117, %126 : vector<16x32xf32>
    %128 = vector.broadcast %109 : vector<1x32xf32> to vector<16x32xf32>
    %129 = arith.mulf %127, %128 : vector<16x32xf32>
    %130 = vector.broadcast %111 : vector<1x32xf32> to vector<16x32xf32>
    %131 = arith.addf %129, %130 : vector<16x32xf32>
    %c0_84 = arith.constant 0 : index
    %c0_85 = arith.constant 0 : index
    %c0_86 = arith.constant 0 : index
    %132 = vector.load %arg16[%c0_84, %c0_85, %c0_86] : memref<2x32x128xf32, #tpu.memory_space<vmem>>, vector<1x32x128xf32>
    %133 = vector.shape_cast %132 : vector<1x32x128xf32> to vector<32x128xf32>
    %cst_87 = arith.constant dense<0.000000e+00> : vector<16x128xf32>
    %134 = tpu.matmul %131, %133, %cst_87 {dimension_numbers = #tpu.dot_dimension_numbers<[1], [0], [0], [1], [0, 0, 1, 1], [], []>} : vector<16x32xf32>, vector<32x128xf32>, vector<16x128xf32> -> vector<16x128xf32>
    %c0_88 = arith.constant 0 : index
    %c0_89 = arith.constant 0 : index
    %c0_90 = arith.constant 0 : index
    %135 = vector.load %arg17[%c0_88, %c0_89, %c0_90] : memref<2x1x128xf32, #tpu.memory_space<vmem>>, vector<1x1x128xf32>
    %136 = vector.shape_cast %135 : vector<1x1x128xf32> to vector<1x128xf32>
    %137 = vector.broadcast %136 : vector<1x128xf32> to vector<16x128xf32>
    %138 = arith.addf %134, %137 : vector<16x128xf32>
    %cst_91 = arith.constant 0.000000e+00 : f32
    %139 = vector.broadcast %cst_91 : f32 to vector<16x128xf32>
    %140 = arith.maximumf %138, %139 : vector<16x128xf32>
    %c0_92 = arith.constant 0 : index
    %c0_93 = arith.constant 0 : index
    %c0_94 = arith.constant 0 : index
    %141 = vector.load %arg18[%c0_92, %c0_93, %c0_94] : memref<2x128x32xf32, #tpu.memory_space<vmem>>, vector<1x128x32xf32>
    %142 = vector.shape_cast %141 : vector<1x128x32xf32> to vector<128x32xf32>
    %cst_95 = arith.constant dense<0.000000e+00> : vector<16x32xf32>
    %143 = tpu.matmul %140, %142, %cst_95 {dimension_numbers = #tpu.dot_dimension_numbers<[1], [0], [0], [1], [0, 0, 1, 1], [], []>} : vector<16x128xf32>, vector<128x32xf32>, vector<16x32xf32> -> vector<16x32xf32>
    %c0_96 = arith.constant 0 : index
    %c0_97 = arith.constant 0 : index
    %c0_98 = arith.constant 0 : index
    %144 = vector.load %arg19[%c0_96, %c0_97, %c0_98] : memref<2x1x32xf32, #tpu.memory_space<vmem>>, vector<1x1x32xf32>
    %145 = vector.shape_cast %144 : vector<1x1x32xf32> to vector<1x32xf32>
    %146 = vector.broadcast %145 : vector<1x32xf32> to vector<16x32xf32>
    %147 = arith.addf %143, %146 : vector<16x32xf32>
    %148 = arith.addf %147, %131 : vector<16x32xf32>
    %c0_99 = arith.constant 0 : index
    %c0_100 = arith.constant 0 : index
    %c0_101 = arith.constant 0 : index
    %149 = vector.load %arg20[%c0_99, %c0_100, %c0_101] : memref<2x1x32xf32, #tpu.memory_space<vmem>>, vector<1x1x32xf32>
    %150 = vector.shape_cast %149 : vector<1x1x32xf32> to vector<1x32xf32>
    %c0_102 = arith.constant 0 : index
    %c0_103 = arith.constant 0 : index
    %c0_104 = arith.constant 0 : index
    %151 = vector.load %arg21[%c0_102, %c0_103, %c0_104] : memref<2x1x32xf32, #tpu.memory_space<vmem>>, vector<1x1x32xf32>
    %152 = vector.shape_cast %151 : vector<1x1x32xf32> to vector<1x32xf32>
    %cst_105 = arith.constant dense<0.000000e+00> : vector<16xf32>
    %153 = vector.multi_reduction <add>, %148, %cst_105 [1] : vector<16x32xf32> to vector<16xf32>
    %154 = vector.shape_cast %153 : vector<16xf32> to vector<16x1xf32>
    %cst_106 = arith.constant 3.200000e+01 : f32
    %155 = vector.broadcast %cst_106 : f32 to vector<16x1xf32>
    %156 = arith.divf %154, %155 : vector<16x1xf32>
    %157 = vector.broadcast %156 : vector<16x1xf32> to vector<16x32xf32>
    %158 = arith.subf %148, %157 : vector<16x32xf32>
    %159 = arith.mulf %158, %158 : vector<16x32xf32>
    %cst_107 = arith.constant dense<0.000000e+00> : vector<16xf32>
    %160 = vector.multi_reduction <add>, %159, %cst_107 [1] : vector<16x32xf32> to vector<16xf32>
    %161 = vector.shape_cast %160 : vector<16xf32> to vector<16x1xf32>
    %cst_108 = arith.constant 3.200000e+01 : f32
    %162 = vector.broadcast %cst_108 : f32 to vector<16x1xf32>
    %163 = arith.divf %161, %162 : vector<16x1xf32>
    %cst_109 = arith.constant 9.99999974E-6 : f32
    %164 = vector.broadcast %cst_109 : f32 to vector<16x1xf32>
    %165 = arith.addf %163, %164 : vector<16x1xf32>
    %166 = math.rsqrt %165 : vector<16x1xf32>
    %167 = vector.broadcast %166 : vector<16x1xf32> to vector<16x32xf32>
    %168 = arith.mulf %158, %167 : vector<16x32xf32>
    %169 = vector.broadcast %150 : vector<1x32xf32> to vector<16x32xf32>
    %170 = arith.mulf %168, %169 : vector<16x32xf32>
    %171 = vector.broadcast %152 : vector<1x32xf32> to vector<16x32xf32>
    %172 = arith.addf %170, %171 : vector<16x32xf32>
    %c1_110 = arith.constant 1 : index
    %c0_111 = arith.constant 0 : index
    %c0_112 = arith.constant 0 : index
    %c0_113 = arith.constant 0 : index
    %173 = vector.load %arg6[%c1_110, %c0_111, %c0_112, %c0_113] : memref<2x3x32x32xf32, #tpu.memory_space<vmem>>, vector<1x1x32x32xf32>
    %174 = vector.shape_cast %173 : vector<1x1x32x32xf32> to vector<32x32xf32>
    %cst_114 = arith.constant dense<0.000000e+00> : vector<16x32xf32>
    %175 = tpu.matmul %1, %174, %cst_114 {dimension_numbers = #tpu.dot_dimension_numbers<[1], [0], [0], [1], [0, 0, 1, 1], [], []>} : vector<16x32xf32>, vector<32x32xf32>, vector<16x32xf32> -> vector<16x32xf32>
    %c1_115 = arith.constant 1 : index
    %c1_116 = arith.constant 1 : index
    %c0_117 = arith.constant 0 : index
    %c0_118 = arith.constant 0 : index
    %176 = vector.load %arg6[%c1_115, %c1_116, %c0_117, %c0_118] : memref<2x3x32x32xf32, #tpu.memory_space<vmem>>, vector<1x1x32x32xf32>
    %177 = vector.shape_cast %176 : vector<1x1x32x32xf32> to vector<32x32xf32>
    %cst_119 = arith.constant dense<0.000000e+00> : vector<16x32xf32>
    %178 = tpu.matmul %1, %177, %cst_119 {dimension_numbers = #tpu.dot_dimension_numbers<[1], [0], [0], [1], [0, 0, 1, 1], [], []>} : vector<16x32xf32>, vector<32x32xf32>, vector<16x32xf32> -> vector<16x32xf32>
    %c1_120 = arith.constant 1 : index
    %c2_121 = arith.constant 2 : index
    %c0_122 = arith.constant 0 : index
    %c0_123 = arith.constant 0 : index
    %179 = vector.load %arg6[%c1_120, %c2_121, %c0_122, %c0_123] : memref<2x3x32x32xf32, #tpu.memory_space<vmem>>, vector<1x1x32x32xf32>
    %180 = vector.shape_cast %179 : vector<1x1x32x32xf32> to vector<32x32xf32>
    %cst_124 = arith.constant dense<0.000000e+00> : vector<16x32xf32>
    %181 = tpu.matmul %1, %180, %cst_124 {dimension_numbers = #tpu.dot_dimension_numbers<[1], [0], [0], [1], [0, 0, 1, 1], [], []>} : vector<16x32xf32>, vector<32x32xf32>, vector<16x32xf32> -> vector<16x32xf32>
    %c1_125 = arith.constant 1 : index
    %c0_126 = arith.constant 0 : index
    %c0_127 = arith.constant 0 : index
    %182 = vector.load %arg7[%c1_125, %c0_126, %c0_127] : memref<2x32x32xf32, #tpu.memory_space<vmem>>, vector<1x32x32xf32>
    %183 = vector.shape_cast %182 : vector<1x32x32xf32> to vector<32x32xf32>
    %c1_128 = arith.constant 1 : index
    %c0_129 = arith.constant 0 : index
    %c0_130 = arith.constant 0 : index
    %184 = vector.load %arg8[%c1_128, %c0_129, %c0_130] : memref<2x1x32xf32, #tpu.memory_space<vmem>>, vector<1x1x32xf32>
    %185 = vector.shape_cast %184 : vector<1x1x32xf32> to vector<1x32xf32>
    %186 = vector.shape_cast %175 : vector<16x32xf32> to vector<2x1x8x32xf32>
    %187 = vector.shape_cast %186 : vector<2x1x8x32xf32> to vector<2x1x8x32xf32>
    %188 = vector.broadcast %187 : vector<2x1x8x32xf32> to vector<2x8x8x32xf32>
    %189 = vector.shape_cast %188 : vector<2x8x8x32xf32> to vector<128x32xf32>
    %190 = arith.mulf %189, %4 : vector<128x32xf32>
    %cst_131 = arith.constant dense<0.000000e+00> : vector<128x16xf32>
    %191 = tpu.matmul %190, %178, %cst_131 {dimension_numbers = #tpu.dot_dimension_numbers<[1], [1], [0], [0], [0, 0, 1, 0], [], []>} : vector<128x32xf32>, vector<16x32xf32>, vector<128x16xf32> -> vector<128x16xf32>
    %192 = arith.addf %191, %2 : vector<128x16xf32>
    %cst_132 = arith.constant dense<0xFF800000> : vector<128xf32>
    %193 = vector.multi_reduction <maximumf>, %192, %cst_132 [1] : vector<128x16xf32> to vector<128xf32>
    %194 = vector.shape_cast %193 : vector<128xf32> to vector<128x1xf32>
    %195 = vector.broadcast %194 : vector<128x1xf32> to vector<128x16xf32>
    %196 = arith.subf %192, %195 : vector<128x16xf32>
    %197 = math.exp %196 : vector<128x16xf32>
    %cst_133 = arith.constant dense<0.000000e+00> : vector<128xf32>
    %198 = vector.multi_reduction <add>, %197, %cst_133 [1] : vector<128x16xf32> to vector<128xf32>
    %199 = vector.shape_cast %198 : vector<128xf32> to vector<128x1xf32>
    %200 = tpu.reciprocal %199 {approx = true} : vector<128x1xf32> -> vector<128x1xf32>
    %201 = vector.broadcast %200 : vector<128x1xf32> to vector<128x16xf32>
    %202 = arith.mulf %197, %201 : vector<128x16xf32>
    %cst_134 = arith.constant dense<0.000000e+00> : vector<128x32xf32>
    %203 = tpu.matmul %202, %181, %cst_134 {dimension_numbers = #tpu.dot_dimension_numbers<[1], [0], [0], [1], [0, 0, 1, 1], [], []>} : vector<128x16xf32>, vector<16x32xf32>, vector<128x32xf32> -> vector<128x32xf32>
    %204 = arith.mulf %203, %5 : vector<128x32xf32>
    %205 = vector.shape_cast %204 : vector<128x32xf32> to vector<2x8x8x32xf32>
    %cst_135 = arith.constant dense<0.000000e+00> : vector<2x8x32xf32>
    %206 = vector.multi_reduction <add>, %205, %cst_135 [1] : vector<2x8x8x32xf32> to vector<2x8x32xf32>
    %207 = vector.shape_cast %206 : vector<2x8x32xf32> to vector<16x32xf32>
    %cst_136 = arith.constant dense<0.000000e+00> : vector<16x32xf32>
    %208 = tpu.matmul %207, %183, %cst_136 {dimension_numbers = #tpu.dot_dimension_numbers<[1], [0], [0], [1], [0, 0, 1, 1], [], []>} : vector<16x32xf32>, vector<32x32xf32>, vector<16x32xf32> -> vector<16x32xf32>
    %209 = vector.broadcast %185 : vector<1x32xf32> to vector<16x32xf32>
    %210 = arith.addf %208, %209 : vector<16x32xf32>
    %211 = arith.addf %210, %1 : vector<16x32xf32>
    %c1_137 = arith.constant 1 : index
    %c0_138 = arith.constant 0 : index
    %c0_139 = arith.constant 0 : index
    %212 = vector.load %arg9[%c1_137, %c0_138, %c0_139] : memref<2x1x32xf32, #tpu.memory_space<vmem>>, vector<1x1x32xf32>
    %213 = vector.shape_cast %212 : vector<1x1x32xf32> to vector<1x32xf32>
    %c1_140 = arith.constant 1 : index
    %c0_141 = arith.constant 0 : index
    %c0_142 = arith.constant 0 : index
    %214 = vector.load %arg10[%c1_140, %c0_141, %c0_142] : memref<2x1x32xf32, #tpu.memory_space<vmem>>, vector<1x1x32xf32>
    %215 = vector.shape_cast %214 : vector<1x1x32xf32> to vector<1x32xf32>
    %cst_143 = arith.constant dense<0.000000e+00> : vector<16xf32>
    %216 = vector.multi_reduction <add>, %211, %cst_143 [1] : vector<16x32xf32> to vector<16xf32>
    %217 = vector.shape_cast %216 : vector<16xf32> to vector<16x1xf32>
    %cst_144 = arith.constant 3.200000e+01 : f32
    %218 = vector.broadcast %cst_144 : f32 to vector<16x1xf32>
    %219 = arith.divf %217, %218 : vector<16x1xf32>
    %220 = vector.broadcast %219 : vector<16x1xf32> to vector<16x32xf32>
    %221 = arith.subf %211, %220 : vector<16x32xf32>
    %222 = arith.mulf %221, %221 : vector<16x32xf32>
    %cst_145 = arith.constant dense<0.000000e+00> : vector<16xf32>
    %223 = vector.multi_reduction <add>, %222, %cst_145 [1] : vector<16x32xf32> to vector<16xf32>
    %224 = vector.shape_cast %223 : vector<16xf32> to vector<16x1xf32>
    %cst_146 = arith.constant 3.200000e+01 : f32
    %225 = vector.broadcast %cst_146 : f32 to vector<16x1xf32>
    %226 = arith.divf %224, %225 : vector<16x1xf32>
    %cst_147 = arith.constant 9.99999974E-6 : f32
    %227 = vector.broadcast %cst_147 : f32 to vector<16x1xf32>
    %228 = arith.addf %226, %227 : vector<16x1xf32>
    %229 = math.rsqrt %228 : vector<16x1xf32>
    %230 = vector.broadcast %229 : vector<16x1xf32> to vector<16x32xf32>
    %231 = arith.mulf %221, %230 : vector<16x32xf32>
    %232 = vector.broadcast %213 : vector<1x32xf32> to vector<16x32xf32>
    %233 = arith.mulf %231, %232 : vector<16x32xf32>
    %234 = vector.broadcast %215 : vector<1x32xf32> to vector<16x32xf32>
    %235 = arith.addf %233, %234 : vector<16x32xf32>
    %c1_148 = arith.constant 1 : index
    %c0_149 = arith.constant 0 : index
    %c0_150 = arith.constant 0 : index
    %c0_151 = arith.constant 0 : index
    %236 = vector.load %arg11[%c1_148, %c0_149, %c0_150, %c0_151] : memref<2x3x32x32xf32, #tpu.memory_space<vmem>>, vector<1x1x32x32xf32>
    %237 = vector.shape_cast %236 : vector<1x1x32x32xf32> to vector<32x32xf32>
    %cst_152 = arith.constant dense<0.000000e+00> : vector<16x32xf32>
    %238 = tpu.matmul %172, %237, %cst_152 {dimension_numbers = #tpu.dot_dimension_numbers<[1], [0], [0], [1], [0, 0, 1, 1], [], []>} : vector<16x32xf32>, vector<32x32xf32>, vector<16x32xf32> -> vector<16x32xf32>
    %c1_153 = arith.constant 1 : index
    %c1_154 = arith.constant 1 : index
    %c0_155 = arith.constant 0 : index
    %c0_156 = arith.constant 0 : index
    %239 = vector.load %arg11[%c1_153, %c1_154, %c0_155, %c0_156] : memref<2x3x32x32xf32, #tpu.memory_space<vmem>>, vector<1x1x32x32xf32>
    %240 = vector.shape_cast %239 : vector<1x1x32x32xf32> to vector<32x32xf32>
    %cst_157 = arith.constant dense<0.000000e+00> : vector<16x32xf32>
    %241 = tpu.matmul %1, %240, %cst_157 {dimension_numbers = #tpu.dot_dimension_numbers<[1], [0], [0], [1], [0, 0, 1, 1], [], []>} : vector<16x32xf32>, vector<32x32xf32>, vector<16x32xf32> -> vector<16x32xf32>
    %c1_158 = arith.constant 1 : index
    %c2_159 = arith.constant 2 : index
    %c0_160 = arith.constant 0 : index
    %c0_161 = arith.constant 0 : index
    %242 = vector.load %arg11[%c1_158, %c2_159, %c0_160, %c0_161] : memref<2x3x32x32xf32, #tpu.memory_space<vmem>>, vector<1x1x32x32xf32>
    %243 = vector.shape_cast %242 : vector<1x1x32x32xf32> to vector<32x32xf32>
    %cst_162 = arith.constant dense<0.000000e+00> : vector<16x32xf32>
    %244 = tpu.matmul %235, %243, %cst_162 {dimension_numbers = #tpu.dot_dimension_numbers<[1], [0], [0], [1], [0, 0, 1, 1], [], []>} : vector<16x32xf32>, vector<32x32xf32>, vector<16x32xf32> -> vector<16x32xf32>
    %c1_163 = arith.constant 1 : index
    %c0_164 = arith.constant 0 : index
    %c0_165 = arith.constant 0 : index
    %245 = vector.load %arg12[%c1_163, %c0_164, %c0_165] : memref<2x32x32xf32, #tpu.memory_space<vmem>>, vector<1x32x32xf32>
    %246 = vector.shape_cast %245 : vector<1x32x32xf32> to vector<32x32xf32>
    %c1_166 = arith.constant 1 : index
    %c0_167 = arith.constant 0 : index
    %c0_168 = arith.constant 0 : index
    %247 = vector.load %arg13[%c1_166, %c0_167, %c0_168] : memref<2x1x32xf32, #tpu.memory_space<vmem>>, vector<1x1x32xf32>
    %248 = vector.shape_cast %247 : vector<1x1x32xf32> to vector<1x32xf32>
    %249 = vector.shape_cast %238 : vector<16x32xf32> to vector<2x1x8x32xf32>
    %250 = vector.shape_cast %249 : vector<2x1x8x32xf32> to vector<2x1x8x32xf32>
    %251 = vector.broadcast %250 : vector<2x1x8x32xf32> to vector<2x8x8x32xf32>
    %252 = vector.shape_cast %251 : vector<2x8x8x32xf32> to vector<128x32xf32>
    %253 = arith.mulf %252, %4 : vector<128x32xf32>
    %cst_169 = arith.constant dense<0.000000e+00> : vector<128x16xf32>
    %254 = tpu.matmul %253, %241, %cst_169 {dimension_numbers = #tpu.dot_dimension_numbers<[1], [1], [0], [0], [0, 0, 1, 0], [], []>} : vector<128x32xf32>, vector<16x32xf32>, vector<128x16xf32> -> vector<128x16xf32>
    %255 = arith.addf %254, %3 : vector<128x16xf32>
    %cst_170 = arith.constant dense<0xFF800000> : vector<128xf32>
    %256 = vector.multi_reduction <maximumf>, %255, %cst_170 [1] : vector<128x16xf32> to vector<128xf32>
    %257 = vector.shape_cast %256 : vector<128xf32> to vector<128x1xf32>
    %258 = vector.broadcast %257 : vector<128x1xf32> to vector<128x16xf32>
    %259 = arith.subf %255, %258 : vector<128x16xf32>
    %260 = math.exp %259 : vector<128x16xf32>
    %cst_171 = arith.constant dense<0.000000e+00> : vector<128xf32>
    %261 = vector.multi_reduction <add>, %260, %cst_171 [1] : vector<128x16xf32> to vector<128xf32>
    %262 = vector.shape_cast %261 : vector<128xf32> to vector<128x1xf32>
    %263 = tpu.reciprocal %262 {approx = true} : vector<128x1xf32> -> vector<128x1xf32>
    %264 = vector.broadcast %263 : vector<128x1xf32> to vector<128x16xf32>
    %265 = arith.mulf %260, %264 : vector<128x16xf32>
    %cst_172 = arith.constant dense<0.000000e+00> : vector<128x32xf32>
    %266 = tpu.matmul %265, %244, %cst_172 {dimension_numbers = #tpu.dot_dimension_numbers<[1], [0], [0], [1], [0, 0, 1, 1], [], []>} : vector<128x16xf32>, vector<16x32xf32>, vector<128x32xf32> -> vector<128x32xf32>
    %267 = arith.mulf %266, %5 : vector<128x32xf32>
    %268 = vector.shape_cast %267 : vector<128x32xf32> to vector<2x8x8x32xf32>
    %cst_173 = arith.constant dense<0.000000e+00> : vector<2x8x32xf32>
    %269 = vector.multi_reduction <add>, %268, %cst_173 [1] : vector<2x8x8x32xf32> to vector<2x8x32xf32>
    %270 = vector.shape_cast %269 : vector<2x8x32xf32> to vector<16x32xf32>
    %cst_174 = arith.constant dense<0.000000e+00> : vector<16x32xf32>
    %271 = tpu.matmul %270, %246, %cst_174 {dimension_numbers = #tpu.dot_dimension_numbers<[1], [0], [0], [1], [0, 0, 1, 1], [], []>} : vector<16x32xf32>, vector<32x32xf32>, vector<16x32xf32> -> vector<16x32xf32>
    %272 = vector.broadcast %248 : vector<1x32xf32> to vector<16x32xf32>
    %273 = arith.addf %271, %272 : vector<16x32xf32>
    %274 = arith.addf %273, %235 : vector<16x32xf32>
    %c1_175 = arith.constant 1 : index
    %c0_176 = arith.constant 0 : index
    %c0_177 = arith.constant 0 : index
    %275 = vector.load %arg14[%c1_175, %c0_176, %c0_177] : memref<2x1x32xf32, #tpu.memory_space<vmem>>, vector<1x1x32xf32>
    %276 = vector.shape_cast %275 : vector<1x1x32xf32> to vector<1x32xf32>
    %c1_178 = arith.constant 1 : index
    %c0_179 = arith.constant 0 : index
    %c0_180 = arith.constant 0 : index
    %277 = vector.load %arg15[%c1_178, %c0_179, %c0_180] : memref<2x1x32xf32, #tpu.memory_space<vmem>>, vector<1x1x32xf32>
    %278 = vector.shape_cast %277 : vector<1x1x32xf32> to vector<1x32xf32>
    %cst_181 = arith.constant dense<0.000000e+00> : vector<16xf32>
    %279 = vector.multi_reduction <add>, %274, %cst_181 [1] : vector<16x32xf32> to vector<16xf32>
    %280 = vector.shape_cast %279 : vector<16xf32> to vector<16x1xf32>
    %cst_182 = arith.constant 3.200000e+01 : f32
    %281 = vector.broadcast %cst_182 : f32 to vector<16x1xf32>
    %282 = arith.divf %280, %281 : vector<16x1xf32>
    %283 = vector.broadcast %282 : vector<16x1xf32> to vector<16x32xf32>
    %284 = arith.subf %274, %283 : vector<16x32xf32>
    %285 = arith.mulf %284, %284 : vector<16x32xf32>
    %cst_183 = arith.constant dense<0.000000e+00> : vector<16xf32>
    %286 = vector.multi_reduction <add>, %285, %cst_183 [1] : vector<16x32xf32> to vector<16xf32>
    %287 = vector.shape_cast %286 : vector<16xf32> to vector<16x1xf32>
    %cst_184 = arith.constant 3.200000e+01 : f32
    %288 = vector.broadcast %cst_184 : f32 to vector<16x1xf32>
    %289 = arith.divf %287, %288 : vector<16x1xf32>
    %cst_185 = arith.constant 9.99999974E-6 : f32
    %290 = vector.broadcast %cst_185 : f32 to vector<16x1xf32>
    %291 = arith.addf %289, %290 : vector<16x1xf32>
    %292 = math.rsqrt %291 : vector<16x1xf32>
    %293 = vector.broadcast %292 : vector<16x1xf32> to vector<16x32xf32>
    %294 = arith.mulf %284, %293 : vector<16x32xf32>
    %295 = vector.broadcast %276 : vector<1x32xf32> to vector<16x32xf32>
    %296 = arith.mulf %294, %295 : vector<16x32xf32>
    %297 = vector.broadcast %278 : vector<1x32xf32> to vector<16x32xf32>
    %298 = arith.addf %296, %297 : vector<16x32xf32>
    %c1_186 = arith.constant 1 : index
    %c0_187 = arith.constant 0 : index
    %c0_188 = arith.constant 0 : index
    %299 = vector.load %arg16[%c1_186, %c0_187, %c0_188] : memref<2x32x128xf32, #tpu.memory_space<vmem>>, vector<1x32x128xf32>
    %300 = vector.shape_cast %299 : vector<1x32x128xf32> to vector<32x128xf32>
    %cst_189 = arith.constant dense<0.000000e+00> : vector<16x128xf32>
    %301 = tpu.matmul %298, %300, %cst_189 {dimension_numbers = #tpu.dot_dimension_numbers<[1], [0], [0], [1], [0, 0, 1, 1], [], []>} : vector<16x32xf32>, vector<32x128xf32>, vector<16x128xf32> -> vector<16x128xf32>
    %c1_190 = arith.constant 1 : index
    %c0_191 = arith.constant 0 : index
    %c0_192 = arith.constant 0 : index
    %302 = vector.load %arg17[%c1_190, %c0_191, %c0_192] : memref<2x1x128xf32, #tpu.memory_space<vmem>>, vector<1x1x128xf32>
    %303 = vector.shape_cast %302 : vector<1x1x128xf32> to vector<1x128xf32>
    %304 = vector.broadcast %303 : vector<1x128xf32> to vector<16x128xf32>
    %305 = arith.addf %301, %304 : vector<16x128xf32>
    %cst_193 = arith.constant 0.000000e+00 : f32
    %306 = vector.broadcast %cst_193 : f32 to vector<16x128xf32>
    %307 = arith.maximumf %305, %306 : vector<16x128xf32>
    %c1_194 = arith.constant 1 : index
    %c0_195 = arith.constant 0 : index
    %c0_196 = arith.constant 0 : index
    %308 = vector.load %arg18[%c1_194, %c0_195, %c0_196] : memref<2x128x32xf32, #tpu.memory_space<vmem>>, vector<1x128x32xf32>
    %309 = vector.shape_cast %308 : vector<1x128x32xf32> to vector<128x32xf32>
    %cst_197 = arith.constant dense<0.000000e+00> : vector<16x32xf32>
    %310 = tpu.matmul %307, %309, %cst_197 {dimension_numbers = #tpu.dot_dimension_numbers<[1], [0], [0], [1], [0, 0, 1, 1], [], []>} : vector<16x128xf32>, vector<128x32xf32>, vector<16x32xf32> -> vector<16x32xf32>
    %c1_198 = arith.constant 1 : index
    %c0_199 = arith.constant 0 : index
    %c0_200 = arith.constant 0 : index
    %311 = vector.load %arg19[%c1_198, %c0_199, %c0_200] : memref<2x1x32xf32, #tpu.memory_space<vmem>>, vector<1x1x32xf32>
    %312 = vector.shape_cast %311 : vector<1x1x32xf32> to vector<1x32xf32>
    %313 = vector.broadcast %312 : vector<1x32xf32> to vector<16x32xf32>
    %314 = arith.addf %310, %313 : vector<16x32xf32>
    %315 = arith.addf %314, %298 : vector<16x32xf32>
    %c1_201 = arith.constant 1 : index
    %c0_202 = arith.constant 0 : index
    %c0_203 = arith.constant 0 : index
    %316 = vector.load %arg20[%c1_201, %c0_202, %c0_203] : memref<2x1x32xf32, #tpu.memory_space<vmem>>, vector<1x1x32xf32>
    %317 = vector.shape_cast %316 : vector<1x1x32xf32> to vector<1x32xf32>
    %c1_204 = arith.constant 1 : index
    %c0_205 = arith.constant 0 : index
    %c0_206 = arith.constant 0 : index
    %318 = vector.load %arg21[%c1_204, %c0_205, %c0_206] : memref<2x1x32xf32, #tpu.memory_space<vmem>>, vector<1x1x32xf32>
    %319 = vector.shape_cast %318 : vector<1x1x32xf32> to vector<1x32xf32>
    %cst_207 = arith.constant dense<0.000000e+00> : vector<16xf32>
    %320 = vector.multi_reduction <add>, %315, %cst_207 [1] : vector<16x32xf32> to vector<16xf32>
    %321 = vector.shape_cast %320 : vector<16xf32> to vector<16x1xf32>
    %cst_208 = arith.constant 3.200000e+01 : f32
    %322 = vector.broadcast %cst_208 : f32 to vector<16x1xf32>
    %323 = arith.divf %321, %322 : vector<16x1xf32>
    %324 = vector.broadcast %323 : vector<16x1xf32> to vector<16x32xf32>
    %325 = arith.subf %315, %324 : vector<16x32xf32>
    %326 = arith.mulf %325, %325 : vector<16x32xf32>
    %cst_209 = arith.constant dense<0.000000e+00> : vector<16xf32>
    %327 = vector.multi_reduction <add>, %326, %cst_209 [1] : vector<16x32xf32> to vector<16xf32>
    %328 = vector.shape_cast %327 : vector<16xf32> to vector<16x1xf32>
    %cst_210 = arith.constant 3.200000e+01 : f32
    %329 = vector.broadcast %cst_210 : f32 to vector<16x1xf32>
    %330 = arith.divf %328, %329 : vector<16x1xf32>
    %cst_211 = arith.constant 9.99999974E-6 : f32
    %331 = vector.broadcast %cst_211 : f32 to vector<16x1xf32>
    %332 = arith.addf %330, %331 : vector<16x1xf32>
    %333 = math.rsqrt %332 : vector<16x1xf32>
    %334 = vector.broadcast %333 : vector<16x1xf32> to vector<16x32xf32>
    %335 = arith.mulf %325, %334 : vector<16x32xf32>
    %336 = vector.broadcast %317 : vector<1x32xf32> to vector<16x32xf32>
    %337 = arith.mulf %335, %336 : vector<16x32xf32>
    %338 = vector.broadcast %319 : vector<1x32xf32> to vector<16x32xf32>
    %339 = arith.addf %337, %338 : vector<16x32xf32>
    %c0_212 = arith.constant 0 : index
    %c0_213 = arith.constant 0 : index
    %340 = vector.load %arg22[%c0_212, %c0_213] : memref<32x128xf32, #tpu.memory_space<vmem>>, vector<32x128xf32>
    %cst_214 = arith.constant dense<0.000000e+00> : vector<16x128xf32>
    %341 = tpu.matmul %339, %340, %cst_214 {dimension_numbers = #tpu.dot_dimension_numbers<[1], [0], [0], [1], [0, 0, 1, 1], [], []>} : vector<16x32xf32>, vector<32x128xf32>, vector<16x128xf32> -> vector<16x128xf32>
    %c0_215 = arith.constant 0 : index
    %c0_216 = arith.constant 0 : index
    %342 = vector.load %arg23[%c0_215, %c0_216] : memref<1x128xf32, #tpu.memory_space<vmem>>, vector<1x128xf32>
    %343 = vector.broadcast %342 : vector<1x128xf32> to vector<16x128xf32>
    %344 = arith.addf %341, %343 : vector<16x128xf32>
    %345 = vector.shape_cast %344 : vector<16x128xf32> to vector<2x8x128xf32>
    %cst_217 = arith.constant dense<0xFF800000> : vector<8x128xf32>
    %346 = vector.multi_reduction <maximumf>, %345, %cst_217 [0] : vector<2x8x128xf32> to vector<8x128xf32>
    %347 = vector.shape_cast %346 : vector<8x128xf32> to vector<1x8x128xf32>
    %348 = vector.broadcast %347 : vector<1x8x128xf32> to vector<2x8x128xf32>
    %349 = arith.subf %345, %348 : vector<2x8x128xf32>
    %350 = math.exp %349 : vector<2x8x128xf32>
    %cst_218 = arith.constant dense<0.000000e+00> : vector<8x128xf32>
    %351 = vector.multi_reduction <add>, %350, %cst_218 [0] : vector<2x8x128xf32> to vector<8x128xf32>
    %352 = vector.shape_cast %351 : vector<8x128xf32> to vector<1x8x128xf32>
    %353 = tpu.reciprocal %352 {approx = true} : vector<1x8x128xf32> -> vector<1x8x128xf32>
    %354 = vector.broadcast %353 : vector<1x8x128xf32> to vector<2x8x128xf32>
    %355 = arith.mulf %350, %354 : vector<2x8x128xf32>
    %c0_219 = arith.constant 0 : index
    %c0_220 = arith.constant 0 : index
    %c0_221 = arith.constant 0 : index
    %356 = vector.load %arg24[%c0_219, %c0_220, %c0_221] : memref<2x8x128xf32, #tpu.memory_space<vmem>>, vector<2x8x128xf32>
    tpu.vector_store %arg24[%c0_219, %c0_220, %c0_221], %355 {strides = array<i32>} : memref<2x8x128xf32, #tpu.memory_space<vmem>>, vector<2x8x128xf32>,
    return
  }
}

</mosaic_0001>

<llo_original>
// kernel: decoder_forward.1
$region0: #{decoder_forward.1}
  #allocation0 [shape = 'u32[]', space=smem, size = 0x4, offset = 0x4, fixed_abs, tag = 'smem constant byte address 0x4 - core index']
  #allocation1 [shape = 'u32[144,128]{1,0:T(1,128)}', space=vmem, size = 0x12000, scoped, tag = 'internal scratch']
  %s0 = inlined_call_operand.vmem [shape: f32[16,32], index: 0, kind: input, shape index: {}]
  %s1 = inlined_call_operand.vmem [shape: f32[16,32], index: 1, kind: input, shape index: {}]
  %s2 = inlined_call_operand.vmem [shape: f32[128,16], index: 2, kind: input, shape index: {}]
  %s3 = inlined_call_operand.vmem [shape: f32[128,16], index: 3, kind: input, shape index: {}]
  %s4 = inlined_call_operand.vmem [shape: f32[128,32], index: 4, kind: input, shape index: {}]
  %s5 = inlined_call_operand.vmem [shape: f32[128,32], index: 5, kind: input, shape index: {}]
  %s6 = inlined_call_operand.vmem [shape: f32[2,3,32,32], index: 6, kind: input, shape index: {}]
  %s7 = inlined_call_operand.vmem [shape: f32[2,32,32], index: 7, kind: input, shape index: {}]
  %s8 = inlined_call_operand.vmem [shape: f32[2,1,32], index: 8, kind: input, shape index: {}]
  %s9 = inlined_call_operand.vmem [shape: f32[2,1,32], index: 9, kind: input, shape index: {}]
  %s10 = inlined_call_operand.vmem [shape: f32[2,1,32], index: 10, kind: input, shape index: {}]
  %s11 = inlined_call_operand.vmem [shape: f32[2,3,32,32], index: 11, kind: input, shape index: {}]
  %s12 = inlined_call_operand.vmem [shape: f32[2,32,32], index: 12, kind: input, shape index: {}]
  %s13 = inlined_call_operand.vmem [shape: f32[2,1,32], index: 13, kind: input, shape index: {}]
  %s14 = inlined_call_operand.vmem [shape: f32[2,1,32], index: 14, kind: input, shape index: {}]
  %s15 = inlined_call_operand.vmem [shape: f32[2,1,32], index: 15, kind: input, shape index: {}]
  %s16 = inlined_call_operand.vmem [shape: f32[2,32,128], index: 16, kind: input, shape index: {}]
  %s17 = inlined_call_operand.vmem [shape: f32[2,1,128], index: 17, kind: input, shape index: {}]
  %s18 = inlined_call_operand.vmem [shape: f32[2,128,32], index: 18, kind: input, shape index: {}]
  %s19 = inlined_call_operand.vmem [shape: f32[2,1,32], index: 19, kind: input, shape index: {}]
  %s20 = inlined_call_operand.vmem [shape: f32[2,1,32], index: 20, kind: input, shape index: {}]
  %s21 = inlined_call_operand.vmem [shape: f32[2,1,32], index: 21, kind: input, shape index: {}]
  %s22 = inlined_call_operand.vmem [shape: f32[32,128], index: 22, kind: input, shape index: {}]
  %s23 = inlined_call_operand.vmem [shape: f32[1,128], index: 23, kind: input, shape index: {}]
  %s24 = inlined_call_operand.hbm [shape: f32[2,8,128], index: 24, kind: output, shape index: {}]
  %s25 = sld [smem:[#allocation0]]
  $region106: #{decoder_forward.1} parent=0
    _
  %s27 = ssub.s32 1, %s25
  %s28 = scalar_select 0, %s27, %s25
  $region1: #{decoder_forward.1} parent=0
    #allocation2 [shape = 'u8[8192]{0}', space=vmem, size = 0x2000, scoped, tag = 'output window, operand 0, single buffered']
    #allocation3 [shape = 's32[1]{0}', space=sflag, size = 0x4, scoped, tag = 'scoped memory for decoder_forward.1']
    %29 = vsyncpa [#allocation3], 0
    // Predicated region
    $region2: #{decoder_forward.1} parent=1 // pred_check
      _
    $region3: #{decoder_forward.1} parent=1 // pred_check_branch
      %31 = sbr.rel (0) target = $region5
    $region4: #{decoder_forward.1} parent=1 // pred_region
      _
    $region5: #{decoder_forward.1} parent=1 // pred_fallthru
      _
    // Predicated region
    $region6: #{decoder_forward.1} parent=1 // pred_check
      _
    $region7: #{decoder_forward.1} parent=1 // pred_check_branch
      %33 = sbr.rel (0) target = $region9
    $region8: #{decoder_forward.1} parent=1 // pred_region
      _
    $region9: #{decoder_forward.1} parent=1 // pred_fallthru
      _
    // Predicated region
    $region10: #{decoder_forward.1} parent=1 // pred_check
      _
    $region11: #{decoder_forward.1} parent=1 // pred_check_branch
      %35 = sbr.rel (0) target = $region13
    $region12: #{decoder_forward.1} parent=1 // pred_region
      _
    $region13: #{decoder_forward.1} parent=1 // pred_fallthru
      _
    // Predicated region
    $region14: #{decoder_forward.1} parent=1 // pred_check
      _
    $region15: #{decoder_forward.1} parent=1 // pred_check_branch
      %37 = sbr.rel (0) target = $region17
    $region16: #{decoder_forward.1} parent=1 // pred_region
      _
    $region17: #{decoder_forward.1} parent=1 // pred_fallthru
      _
    // Predicated region
    $region18: #{decoder_forward.1} parent=1 // pred_check
      _
    $region19: #{decoder_forward.1} parent=1 // pred_check_branch
      %39 = sbr.rel (0) target = $region21
    $region20: #{decoder_forward.1} parent=1 // pred_region
      _
    $region21: #{decoder_forward.1} parent=1 // pred_fallthru
      _
    // Predicated region
    $region22: #{decoder_forward.1} parent=1 // pred_check
      _
    $region23: #{decoder_forward.1} parent=1 // pred_check_branch
      %41 = sbr.rel (0) target = $region25
    $region24: #{decoder_forward.1} parent=1 // pred_region
      _
    $region25: #{decoder_forward.1} parent=1 // pred_fallthru
      _
    // Predicated region
    $region26: #{decoder_forward.1} parent=1 // pred_check
      _
    $region27: #{decoder_forward.1} parent=1 // pred_check_branch
      %43 = sbr.rel (0) target = $region29
    $region28: #{decoder_forward.1} parent=1 // pred_region
      _
    $region29: #{decoder_forward.1} parent=1 // pred_fallthru
      _
    // Predicated region
    $region30: #{decoder_forward.1} parent=1 // pred_check
      _
    $region31: #{decoder_forward.1} parent=1 // pred_check_branch
      %45 = sbr.rel (0) target = $region33
    $region32: #{decoder_forward.1} parent=1 // pred_region
      _
    $region33: #{decoder_forward.1} parent=1 // pred_fallthru
      _
    // Predicated region
    $region34: #{decoder_forward.1} parent=1 // pred_check
      _
    $region35: #{decoder_forward.1} parent=1 // pred_check_branch
      %47 = sbr.rel (0) target = $region37
    $region36: #{decoder_forward.1} parent=1 // pred_region
      _
    $region37: #{decoder_forward.1} parent=1 // pred_fallthru
      _
    // Predicated region
    $region38: #{decoder_forward.1} parent=1 // pred_check
      _
    $region39: #{decoder_forward.1} parent=1 // pred_check_branch
      %49 = sbr.rel (0) target = $region41
    $region40: #{decoder_forward.1} parent=1 // pred_region
      _
    $region41: #{decoder_forward.1} parent=1 // pred_fallthru
      _
    // Predicated region
    $region42: #{decoder_forward.1} parent=1 // pred_check
      _
    $region43: #{decoder_forward.1} parent=1 // pred_check_branch
      %51 = sbr.rel (0) target = $region45
    $region44: #{decoder_forward.1} parent=1 // pred_region
      _
    $region45: #{decoder_forward.1} parent=1 // pred_fallthru
      _
    // Predicated region
    $region46: #{decoder_forward.1} parent=1 // pred_check
      _
    $region47: #{decoder_forward.1} parent=1 // pred_check_branch
      %53 = sbr.rel (0) target = $region49
    $region48: #{decoder_forward.1} parent=1 // pred_region
      _
    $region49: #{decoder_forward.1} parent=1 // pred_fallthru
      _
    // Predicated region
    $region50: #{decoder_forward.1} parent=1 // pred_check
      _
    $region51: #{decoder_forward.1} parent=1 // pred_check_branch
      %55 = sbr.rel (0) target = $region53
    $region52: #{decoder_forward.1} parent=1 // pred_region
      _
    $region53: #{decoder_forward.1} parent=1 // pred_fallthru
      _
    // Predicated region
    $region54: #{decoder_forward.1} parent=1 // pred_check
      _
    $region55: #{decoder_forward.1} parent=1 // pred_check_branch
      %57 = sbr.rel (0) target = $region57
    $region56: #{decoder_forward.1} parent=1 // pred_region
      _
    $region57: #{decoder_forward.1} parent=1 // pred_fallthru
      _
    // Predicated region
    $region58: #{decoder_forward.1} parent=1 // pred_check
      _
    $region59: #{decoder_forward.1} parent=1 // pred_check_branch
      %59 = sbr.rel (0) target = $region61
    $region60: #{decoder_forward.1} parent=1 // pred_region
      _
    $region61: #{decoder_forward.1} parent=1 // pred_fallthru
      _
    // Predicated region
    $region62: #{decoder_forward.1} parent=1 // pred_check
      _
    $region63: #{decoder_forward.1} parent=1 // pred_check_branch
      %61 = sbr.rel (0) target = $region65
    $region64: #{decoder_forward.1} parent=1 // pred_region
      _
    $region65: #{decoder_forward.1} parent=1 // pred_fallthru
      _
    // Predicated region
    $region66: #{decoder_forward.1} parent=1 // pred_check
      _
    $region67: #{decoder_forward.1} parent=1 // pred_check_branch
      %63 = sbr.rel (0) target = $region69
    $region68: #{decoder_forward.1} parent=1 // pred_region
      _
    $region69: #{decoder_forward.1} parent=1 // pred_fallthru
      _
    // Predicated region
    $region70: #{decoder_forward.1} parent=1 // pred_check
      _
    $region71: #{decoder_forward.1} parent=1 // pred_check_branch
      %65 = sbr.rel (0) target = $region73
    $region72: #{decoder_forward.1} parent=1 // pred_region
      _
    $region73: #{decoder_forward.1} parent=1 // pred_fallthru
      _
    // Predicated region
    $region74: #{decoder_forward.1} parent=1 // pred_check
      _
    $region75: #{decoder_forward.1} parent=1 // pred_check_branch
      %67 = sbr.rel (0) target = $region77
    $region76: #{decoder_forward.1} parent=1 // pred_region
      _
    $region77: #{decoder_forward.1} parent=1 // pred_fallthru
      _
    // Predicated region
    $region78: #{decoder_forward.1} parent=1 // pred_check
      _
    $region79: #{decoder_forward.1} parent=1 // pred_check_branch
      %69 = sbr.rel (0) target = $region81
    $region80: #{decoder_forward.1} parent=1 // pred_region
      _
    $region81: #{decoder_forward.1} parent=1 // pred_fallthru
      _
    // Predicated region
    $region82: #{decoder_forward.1} parent=1 // pred_check
      _
    $region83: #{decoder_forward.1} parent=1 // pred_check_branch
      %71 = sbr.rel (0) target = $region85
    $region84: #{decoder_forward.1} parent=1 // pred_region
      _
    $region85: #{decoder_forward.1} parent=1 // pred_fallthru
      _
    // Predicated region
    $region86: #{decoder_forward.1} parent=1 // pred_check
      _
    $region87: #{decoder_forward.1} parent=1 // pred_check_branch
      %73 = sbr.rel (0) target = $region89
    $region88: #{decoder_forward.1} parent=1 // pred_region
      _
    $region89: #{decoder_forward.1} parent=1 // pred_fallthru
      _
    // Predicated region
    $region90: #{decoder_forward.1} parent=1 // pred_check
      _
    $region91: #{decoder_forward.1} parent=1 // pred_check_branch
      %75 = sbr.rel (0) target = $region93
    $region92: #{decoder_forward.1} parent=1 // pred_region
      _
    $region93: #{decoder_forward.1} parent=1 // pred_fallthru
      _
    // Predicated region
    $region94: #{decoder_forward.1} parent=1 // pred_check
      _
    $region95: #{decoder_forward.1} parent=1 // pred_check_branch
      %77 = sbr.rel (0) target = $region97
    $region96: #{decoder_forward.1} parent=1 // pred_region
      _
    $region97: #{decoder_forward.1} parent=1 // pred_fallthru
      _
    %v78 = vld [vmem:[%s0] sm:$0xff]
    %v79 = vld [vmem:[%s0 + $0x8] sm:$0xff]
    %v80 = vld [vmem:[%s1] sm:$0xff]
    %v81 = vld [vmem:[%s1 + $0x8] sm:$0xff]
    %v82 = vld [vmem:[%s2] sm:$0xff]
    %v83 = vld [vmem:[%s2 + $0x8] sm:$0xff]
    %v84 = vld [vmem:[%s2 + $0x10] sm:$0xff]
    %v85 = vld [vmem:[%s2 + $0x18] sm:$0xff]
    %v86 = vld [vmem:[%s2 + $0x20] sm:$0xff]
    %v87 = vld [vmem:[%s2 + $0x28] sm:$0xff]
    %v88 = vld [vmem:[%s2 + $0x30] sm:$0xff]
    %v89 = vld [vmem:[%s2 + $0x38] sm:$0xff]
    %v90 = vld [vmem:[%s2 + $0x40] sm:$0xff]
    %v91 = vld [vmem:[%s2 + $0x48] sm:$0xff]
    %v92 = vld [vmem:[%s2 + $0x50] sm:$0xff]
    %v93 = vld [vmem:[%s2 + $0x58] sm:$0xff]
    %v94 = vld [vmem:[%s2 + $0x60] sm:$0xff]
    %v95 = vld [vmem:[%s2 + $0x68] sm:$0xff]
    %v96 = vld [vmem:[%s2 + $0x70] sm:$0xff]
    %v97 = vld [vmem:[%s2 + $0x78] sm:$0xff]
    %v98 = vld [vmem:[%s3] sm:$0xff]
    %v99 = vld [vmem:[%s3 + $0x8] sm:$0xff]
    %v100 = vld [vmem:[%s3 + $0x10] sm:$0xff]
    %v101 = vld [vmem:[%s3 + $0x18] sm:$0xff]
    %v102 = vld [vmem:[%s3 + $0x20] sm:$0xff]
    %v103 = vld [vmem:[%s3 + $0x28] sm:$0xff]
    %v104 = vld [vmem:[%s3 + $0x30] sm:$0xff]
    %v105 = vld [vmem:[%s3 + $0x38] sm:$0xff]
    %v106 = vld [vmem:[%s3 + $0x40] sm:$0xff]
    %v107 = vld [vmem:[%s3 + $0x48] sm:$0xff]
    %v108 = vld [vmem:[%s3 + $0x50] sm:$0xff]
    %v109 = vld [vmem:[%s3 + $0x58] sm:$0xff]
    %v110 = vld [vmem:[%s3 + $0x60] sm:$0xff]
    %v111 = vld [vmem:[%s3 + $0x68] sm:$0xff]
    %v112 = vld [vmem:[%s3 + $0x70] sm:$0xff]
    %v113 = vld [vmem:[%s3 + $0x78] sm:$0xff]
    %v114 = vld [vmem:[%s4] sm:$0xff]
    %v115 = vld [vmem:[%s4 + $0x8] sm:$0xff]
    %v116 = vld [vmem:[%s4 + $0x10] sm:$0xff]
    %v117 = vld [vmem:[%s4 + $0x18] sm:$0xff]
    %v118 = vld [vmem:[%s4 + $0x20] sm:$0xff]
    %v119 = vld [vmem:[%s4 + $0x28] sm:$0xff]
    %v120 = vld [vmem:[%s4 + $0x30] sm:$0xff]
    %v121 = vld [vmem:[%s4 + $0x38] sm:$0xff]
    %v122 = vld [vmem:[%s4 + $0x40] sm:$0xff]
    %v123 = vld [vmem:[%s4 + $0x48] sm:$0xff]
    %v124 = vld [vmem:[%s4 + $0x50] sm:$0xff]
    %v125 = vld [vmem:[%s4 + $0x58] sm:$0xff]
    %v126 = vld [vmem:[%s4 + $0x60] sm:$0xff]
    %v127 = vld [vmem:[%s4 + $0x68] sm:$0xff]
    %v128 = vld [vmem:[%s4 + $0x70] sm:$0xff]
    %v129 = vld [vmem:[%s4 + $0x78] sm:$0xff]
    %v130 = vld [vmem:[%s5] sm:$0xff]
    %v131 = vld [vmem:[%s5 + $0x8] sm:$0xff]
    %v132 = vld [vmem:[%s5 + $0x10] sm:$0xff]
    %v133 = vld [vmem:[%s5 + $0x18] sm:$0xff]
    %v134 = vld [vmem:[%s5 + $0x20] sm:$0xff]
    %v135 = vld [vmem:[%s5 + $0x28] sm:$0xff]
    %v136 = vld [vmem:[%s5 + $0x30] sm:$0xff]
    %v137 = vld [vmem:[%s5 + $0x38] sm:$0xff]
    %v138 = vld [vmem:[%s5 + $0x40] sm:$0xff]
    %v139 = vld [vmem:[%s5 + $0x48] sm:$0xff]
    %v140 = vld [vmem:[%s5 + $0x50] sm:$0xff]
    %v141 = vld [vmem:[%s5 + $0x58] sm:$0xff]
    %v142 = vld [vmem:[%s5 + $0x60] sm:$0xff]
    %v143 = vld [vmem:[%s5 + $0x68] sm:$0xff]
    %v144 = vld [vmem:[%s5 + $0x70] sm:$0xff]
    %v145 = vld [vmem:[%s5 + $0x78] sm:$0xff]
    %v146 = vld [vmem:[%s6] sm:$0xff]
    %v147 = vld [vmem:[%s6 + $0x8] sm:$0xff]
    %v148 = vld [vmem:[%s6 + $0x10] sm:$0xff]
    %v149 = vld [vmem:[%s6 + $0x18] sm:$0xff]
    %vm150 = vcmask 261120
    %v152 = vsel %vm150, %v80, 0
    %v155 = vsel %vm150, %v81, 0
    %157 = vmatprep.subr.mxu0 0.0
    %158 = vmatpush1.msra.mxu0 %v146
    %159 = vmatprep.subr.mxu0 0.0
    %160 = vmatpush1.msra.mxu0 %v147
    %161 = vmatprep.subr.mxu0 0.0
    %162 = vmatpush1.msra.mxu0 %v148
    %163 = vmatprep.subr.mxu0 0.0
    %164 = vmatpush1.msra.mxu0 %v149
    %165 = vmatprep.subr.mxu0 0.0
    %166 = vmatpush1.msra.mxu0 0.0
    %167 = vmatprep.subr.mxu0 0.0
    %168 = vmatpush1.msra.mxu0 0.0
    %169 = vmatprep.subr.mxu0 0.0
    %170 = vmatpush1.msra.mxu0 0.0
    %171 = vmatprep.subr.mxu0 0.0
    %172 = vmatpush1.msra.mxu0 0.0
    %173 = vmatprep.subr.mxu0 0.0
    %174 = vmatpush1.msra.mxu0 0.0
    %175 = vmatprep.subr.mxu0 0.0
    %176 = vmatpush1.msra.mxu0 0.0
    %177 = vmatprep.subr.mxu0 0.0
    %178 = vmatpush1.msra.mxu0 0.0
    %179 = vmatprep.subr.mxu0 0.0
    %180 = vmatpush1.msra.mxu0 0.0
    %181 = vmatprep.subr.mxu0 0.0
    %182 = vmatpush1.msra.mxu0 0.0
    %183 = vmatprep.subr.mxu0 0.0
    %184 = vmatpush1.msra.mxu0 0.0
    %185 = vmatprep.subr.mxu0 0.0
    %186 = vmatpush1.msra.mxu0 0.0
    %187 = vmatprep.subr.mxu0 0.0
    %188 = vmatpush1.msra.mxu0 0.0
    %189 = vmatprep.subr.mxu0 0.0
    %190 = vmatpush1.msra.mxu0 0.0
    %191 = vmatprep.subr.mxu0 0.0
    %192 = vmatpush1.msra.mxu0 0.0
    %193 = vmatprep.subr.mxu0 0.0
    %194 = vmatpush1.msra.mxu0 0.0
    %195 = vmatprep.subr.mxu0 0.0
    %196 = vmatpush1.msra.mxu0 0.0
    %197 = vmatprep.subr.mxu0 0.0
    %198 = vmatpush1.msra.mxu0 0.0
    %199 = vmatprep.subr.mxu0 0.0
    %200 = vmatpush1.msra.mxu0 0.0
    %201 = vmatprep.subr.mxu0 0.0
    %202 = vmatpush1.msra.mxu0 0.0
    %203 = vmatprep.subr.mxu0 0.0
    %204 = vmatpush1.msra.mxu0 0.0
    %205 = vmatprep.subr.mxu0 0.0
    %206 = vmatpush1.msra.mxu0 0.0
    %207 = vmatprep.subr.mxu0 0.0
    %208 = vmatpush1.msra.mxu0 0.0
    %209 = vmatprep.subr.mxu0 0.0
    %210 = vmatpush1.msra.mxu0 0.0
    %211 = vmatprep.subr.mxu0 0.0
    %212 = vmatpush1.msra.mxu0 0.0
    %213 = vmatprep.subr.mxu0 0.0
    %214 = vmatpush1.msra.mxu0 0.0
    %215 = vmatprep.subr.mxu0 0.0
    %216 = vmatpush1.msra.mxu0 0.0
    %217 = vmatprep.subr.mxu0 0.0
    %218 = vmatpush1.msra.mxu0 0.0
    %219 = vmatprep.subr.mxu0 0.0
    %220 = vmatpush1.msra.mxu0 0.0
    %221 = vmatprep.mubr.f32.mxu0 0.0
    %222 = vmatmul.mubr.f32.gmra.mrb[0].mxu0 %v152
    %v223 = vpop.f32.mrb[0].mxu0
    %v224 = vadd.f32 0.0, %v223
    %v225 = vpop.f32.mrb[0].mxu0
    %226 = vmatprep.mubr.f32.mxu0 0.0
    %227 = vmatmul.mubr.f32.gmra.mrb[0].mxu0 %v155
    %v228 = vpop.f32.mrb[0].mxu0
    %v229 = vadd.f32 0.0, %v228
    %v230 = vpop.f32.mrb[0].mxu0
    %231 = vdwg.mxu0
    %s232 = scalar_lea.vmem %s6, 32
    %v233 = vld [vmem:[%s232] sm:$0xff]
    %v234 = vld [vmem:[%s232 + $0x8] sm:$0xff]
    %v235 = vld [vmem:[%s232 + $0x10] sm:$0xff]
    %v236 = vld [vmem:[%s232 + $0x18] sm:$0xff]
    %237 = vmatprep.subr.mxu0 0.0
    %238 = vmatpush1.msra.mxu0 %v233
    %239 = vmatprep.subr.mxu0 0.0
    %240 = vmatpush1.msra.mxu0 %v234
    %241 = vmatprep.subr.mxu0 0.0
    %242 = vmatpush1.msra.mxu0 %v235
    %243 = vmatprep.subr.mxu0 0.0
    %244 = vmatpush1.msra.mxu0 %v236
    %245 = vmatprep.subr.mxu0 0.0
    %246 = vmatpush1.msra.mxu0 0.0
    %247 = vmatprep.subr.mxu0 0.0
    %248 = vmatpush1.msra.mxu0 0.0
    %249 = vmatprep.subr.mxu0 0.0
    %250 = vmatpush1.msra.mxu0 0.0
    %251 = vmatprep.subr.mxu0 0.0
    %252 = vmatpush1.msra.mxu0 0.0
    %253 = vmatprep.subr.mxu0 0.0
    %254 = vmatpush1.msra.mxu0 0.0
    %255 = vmatprep.subr.mxu0 0.0
    %256 = vmatpush1.msra.mxu0 0.0
    %257 = vmatprep.subr.mxu0 0.0
    %258 = vmatpush1.msra.mxu0 0.0
    %259 = vmatprep.subr.mxu0 0.0
    %260 = vmatpush1.msra.mxu0 0.0
    %261 = vmatprep.subr.mxu0 0.0
    %262 = vmatpush1.msra.mxu0 0.0
    %263 = vmatprep.subr.mxu0 0.0
    %264 = vmatpush1.msra.mxu0 0.0
    %265 = vmatprep.subr.mxu0 0.0
    %266 = vmatpush1.msra.mxu0 0.0
    %267 = vmatprep.subr.mxu0 0.0
    %268 = vmatpush1.msra.mxu0 0.0
    %269 = vmatprep.subr.mxu0 0.0
    %270 = vmatpush1.msra.mxu0 0.0
    %271 = vmatprep.subr.mxu0 0.0
    %272 = vmatpush1.msra.mxu0 0.0
    %273 = vmatprep.subr.mxu0 0.0
    %274 = vmatpush1.msra.mxu0 0.0
    %275 = vmatprep.subr.mxu0 0.0
    %276 = vmatpush1.msra.mxu0 0.0
    %277 = vmatprep.subr.mxu0 0.0
    %278 = vmatpush1.msra.mxu0 0.0
    %279 = vmatprep.subr.mxu0 0.0
    %280 = vmatpush1.msra.mxu0 0.0
    %281 = vmatprep.subr.mxu0 0.0
    %282 = vmatpush1.msra.mxu0 0.0
    %283 = vmatprep.subr.mxu0 0.0
    %284 = vmatpush1.msra.mxu0 0.0
    %285 = vmatprep.subr.mxu0 0.0
    %286 = vmatpush1.msra.mxu0 0.0
    %287 = vmatprep.subr.mxu0 0.0
    %288 = vmatpush1.msra.mxu0 0.0
    %289 = vmatprep.subr.mxu0 0.0
    %290 = vmatpush1.msra.mxu0 0.0
    %291 = vmatprep.subr.mxu0 0.0
    %292 = vmatpush1.msra.mxu0 0.0
    %293 = vmatprep.subr.mxu0 0.0
    %294 = vmatpush1.msra.mxu0 0.0
    %295 = vmatprep.subr.mxu0 0.0
    %296 = vmatpush1.msra.mxu0 0.0
    %297 = vmatprep.subr.mxu0 0.0
    %298 = vmatpush1.msra.mxu0 0.0
    %299 = vmatprep.subr.mxu0 0.0
    %300 = vmatpush1.msra.mxu0 0.0
    %301 = vmatprep.mubr.f32.mxu0 0.0
    %302 = vmatmul.mubr.f32.gmra.mrb[0].mxu0 %v152
    %v303 = vpop.f32.mrb[0].mxu0
    %v304 = vadd.f32 0.0, %v303
    %v305 = vpop.f32.mrb[0].mxu0
    %306 = vmatprep.mubr.f32.mxu0 0.0
    %307 = vmatmul.mubr.f32.gmra.mrb[0].mxu0 %v155
    %v308 = vpop.f32.mrb[0].mxu0
    %v309 = vadd.f32 0.0, %v308
    %v310 = vpop.f32.mrb[0].mxu0
    %311 = vdwg.mxu0
    %s312 = scalar_lea.vmem %s6, 64
    %v313 = vld [vmem:[%s312] sm:$0xff]
    %v314 = vld [vmem:[%s312 + $0x8] sm:$0xff]
    %v315 = vld [vmem:[%s312 + $0x10] sm:$0xff]
    %v316 = vld [vmem:[%s312 + $0x18] sm:$0xff]
    %317 = vmatprep.subr.mxu0 0.0
    %318 = vmatpush1.msra.mxu0 %v313
    %319 = vmatprep.subr.mxu0 0.0
    %320 = vmatpush1.msra.mxu0 %v314
    %321 = vmatprep.subr.mxu0 0.0
    %322 = vmatpush1.msra.mxu0 %v315
    %323 = vmatprep.subr.mxu0 0.0
    %324 = vmatpush1.msra.mxu0 %v316
    %325 = vmatprep.subr.mxu0 0.0
    %326 = vmatpush1.msra.mxu0 0.0
    %327 = vmatprep.subr.mxu0 0.0
    %328 = vmatpush1.msra.mxu0 0.0
    %329 = vmatprep.subr.mxu0 0.0
    %330 = vmatpush1.msra.mxu0 0.0
    %331 = vmatprep.subr.mxu0 0.0
    %332 = vmatpush1.msra.mxu0 0.0
    %333 = vmatprep.subr.mxu0 0.0
    %334 = vmatpush1.msra.mxu0 0.0
    %335 = vmatprep.subr.mxu0 0.0
    %336 = vmatpush1.msra.mxu0 0.0
    %337 = vmatprep.subr.mxu0 0.0
    %338 = vmatpush1.msra.mxu0 0.0
    %339 = vmatprep.subr.mxu0 0.0
    %340 = vmatpush1.msra.mxu0 0.0
    %341 = vmatprep.subr.mxu0 0.0
    %342 = vmatpush1.msra.mxu0 0.0
    %343 = vmatprep.subr.mxu0 0.0
    %344 = vmatpush1.msra.mxu0 0.0
    %345 = vmatprep.subr.mxu0 0.0
    %346 = vmatpush1.msra.mxu0 0.0
    %347 = vmatprep.subr.mxu0 0.0
    %348 = vmatpush1.msra.mxu0 0.0
    %349 = vmatprep.subr.mxu0 0.0
    %350 = vmatpush1.msra.mxu0 0.0
    %351 = vmatprep.subr.mxu0 0.0
    %352 = vmatpush1.msra.mxu0 0.0
    %353 = vmatprep.subr.mxu0 0.0
    %354 = vmatpush1.msra.mxu0 0.0
    %355 = vmatprep.subr.mxu0 0.0
    %356 = vmatpush1.msra.mxu0 0.0
    %357 = vmatprep.subr.mxu0 0.0
    %358 = vmatpush1.msra.mxu0 0.0
    %359 = vmatprep.subr.mxu0 0.0
    %360 = vmatpush1.msra.mxu0 0.0
    %361 = vmatprep.subr.mxu0 0.0
    %362 = vmatpush1.msra.mxu0 0.0
    %363 = vmatprep.subr.mxu0 0.0
    %364 = vmatpush1.msra.mxu0 0.0
    %365 = vmatprep.subr.mxu0 0.0
    %366 = vmatpush1.msra.mxu0 0.0
    %367 = vmatprep.subr.mxu0 0.0
    %368 = vmatpush1.msra.mxu0 0.0
    %369 = vmatprep.subr.mxu0 0.0
    %370 = vmatpush1.msra.mxu0 0.0
    %371 = vmatprep.subr.mxu0 0.0
    %372 = vmatpush1.msra.mxu0 0.0
    %373 = vmatprep.subr.mxu0 0.0
    %374 = vmatpush1.msra.mxu0 0.0
    %375 = vmatprep.subr.mxu0 0.0
    %376 = vmatpush1.msra.mxu0 0.0
    %377 = vmatprep.subr.mxu0 0.0
    %378 = vmatpush1.msra.mxu0 0.0
    %379 = vmatprep.subr.mxu0 0.0
    %380 = vmatpush1.msra.mxu0 0.0
    %381 = vmatprep.mubr.f32.mxu0 0.0
    %382 = vmatmul.mubr.f32.gmra.mrb[0].mxu0 %v152
    %v383 = vpop.f32.mrb[0].mxu0
    %v384 = vadd.f32 0.0, %v383
    %v385 = vpop.f32.mrb[0].mxu0
    %386 = vmatprep.mubr.f32.mxu0 0.0
    %387 = vmatmul.mubr.f32.gmra.mrb[0].mxu0 %v155
    %v388 = vpop.f32.mrb[0].mxu0
    %v389 = vadd.f32 0.0, %v388
    %v390 = vpop.f32.mrb[0].mxu0
    %391 = vdwg.mxu0
    %v392 = vld [vmem:[%s7] sm:$0xff]
    %v393 = vld [vmem:[%s7 + $0x8] sm:$0xff]
    %v394 = vld [vmem:[%s7 + $0x10] sm:$0xff]
    %v395 = vld [vmem:[%s7 + $0x18] sm:$0xff]
    %v396 = vld [vmem:[%s8] sm:$0x1]
    %v397 = vmul.f32 %v224, %v114
    %v398 = vmul.f32 %v224, %v115
    %v399 = vmul.f32 %v224, %v116
    %v400 = vmul.f32 %v224, %v117
    %v401 = vmul.f32 %v224, %v118
    %v402 = vmul.f32 %v224, %v119
    %v403 = vmul.f32 %v224, %v120
    %v404 = vmul.f32 %v224, %v121
    %v405 = vmul.f32 %v229, %v122
    %v406 = vmul.f32 %v229, %v123
    %v407 = vmul.f32 %v229, %v124
    %v408 = vmul.f32 %v229, %v125
    %v409 = vmul.f32 %v229, %v126
    %v410 = vmul.f32 %v229, %v127
    %v411 = vmul.f32 %v229, %v128
    %v412 = vmul.f32 %v229, %v129
    %v414 = vsel %vm150, %v397, 0
    %v417 = vsel %vm150, %v398, 0
    %v420 = vsel %vm150, %v399, 0
    %v423 = vsel %vm150, %v400, 0
    %v426 = vsel %vm150, %v401, 0
    %v429 = vsel %vm150, %v402, 0
    %v432 = vsel %vm150, %v403, 0
    %v435 = vsel %vm150, %v404, 0
    %v438 = vsel %vm150, %v405, 0
    %v441 = vsel %vm150, %v406, 0
    %v444 = vsel %vm150, %v407, 0
    %v447 = vsel %vm150, %v408, 0
    %v450 = vsel %vm150, %v409, 0
    %v453 = vsel %vm150, %v410, 0
    %v456 = vsel %vm150, %v411, 0
    %v459 = vsel %vm150, %v412, 0
    %v462 = vsel %vm150, %v304, 0
    %v465 = vsel %vm150, %v309, 0
    %467 = vmatprep.subr.mxu0 0.0
    %468 = vmatpush1.xpose.msra.mxu0 %v462
    %469 = vmatprep.subr.mxu0 0.0
    %470 = vmatpush1.xpose.msra.mxu0 %v465
    %471 = vmatprep.subr.mxu0 0.0
    %472 = vmatpush1.xpose.msra.mxu0 0.0
    %473 = vmatprep.subr.mxu0 0.0
    %474 = vmatpush1.xpose.msra.mxu0 0.0
    %475 = vmatprep.subr.mxu0 0.0
    %476 = vmatpush1.xpose.msra.mxu0 0.0
    %477 = vmatprep.subr.mxu0 0.0
    %478 = vmatpush1.xpose.msra.mxu0 0.0
    %479 = vmatprep.subr.mxu0 0.0
    %480 = vmatpush1.xpose.msra.mxu0 0.0
    %481 = vmatprep.subr.mxu0 0.0
    %482 = vmatpush1.xpose.msra.mxu0 0.0
    %483 = vmatprep.subr.mxu0 0.0
    %484 = vmatpush1.xpose.msra.mxu0 0.0
    %485 = vmatprep.subr.mxu0 0.0
    %486 = vmatpush1.xpose.msra.mxu0 0.0
    %487 = vmatprep.subr.mxu0 0.0
    %488 = vmatpush1.xpose.msra.mxu0 0.0
    %489 = vmatprep.subr.mxu0 0.0
    %490 = vmatpush1.xpose.msra.mxu0 0.0
    %491 = vmatprep.subr.mxu0 0.0
    %492 = vmatpush1.xpose.msra.mxu0 0.0
    %493 = vmatprep.subr.mxu0 0.0
    %494 = vmatpush1.xpose.msra.mxu0 0.0
    %495 = vmatprep.subr.mxu0 0.0
    %496 = vmatpush1.xpose.msra.mxu0 0.0
    %497 = vmatprep.subr.mxu0 0.0
    %498 = vmatpush1.xpose.msra.mxu0 0.0
    %499 = vmatprep.subr.mxu0 0.0
    %500 = vmatpush1.xpose.msra.mxu0 0.0
    %501 = vmatprep.subr.mxu0 0.0
    %502 = vmatpush1.xpose.msra.mxu0 0.0
    %503 = vmatprep.subr.mxu0 0.0
    %504 = vmatpush1.xpose.msra.mxu0 0.0
    %505 = vmatprep.subr.mxu0 0.0
    %506 = vmatpush1.xpose.msra.mxu0 0.0
    %507 = vmatprep.subr.mxu0 0.0
    %508 = vmatpush1.xpose.msra.mxu0 0.0
    %509 = vmatprep.subr.mxu0 0.0
    %510 = vmatpush1.xpose.msra.mxu0 0.0
    %511 = vmatprep.subr.mxu0 0.0
    %512 = vmatpush1.xpose.msra.mxu0 0.0
    %513 = vmatprep.subr.mxu0 0.0
    %514 = vmatpush1.xpose.msra.mxu0 0.0
    %515 = vmatprep.subr.mxu0 0.0
    %516 = vmatpush1.xpose.msra.mxu0 0.0
    %517 = vmatprep.subr.mxu0 0.0
    %518 = vmatpush1.xpose.msra.mxu0 0.0
    %519 = vmatprep.subr.mxu0 0.0
    %520 = vmatpush1.xpose.msra.mxu0 0.0
    %521 = vmatprep.subr.mxu0 0.0
    %522 = vmatpush1.xpose.msra.mxu0 0.0
    %523 = vmatprep.subr.mxu0 0.0
    %524 = vmatpush1.xpose.msra.mxu0 0.0
    %525 = vmatprep.subr.mxu0 0.0
    %526 = vmatpush1.xpose.msra.mxu0 0.0
    %527 = vmatprep.subr.mxu0 0.0
    %528 = vmatpush1.xpose.msra.mxu0 0.0
    %529 = vmatprep.subr.mxu0 0.0
    %530 = vmatpush1.xpose.msra.mxu0 0.0
    %531 = vmatprep.mubr.f32.mxu0 0.0
    %532 = vmatmul.mubr.f32.gmra.mrb[0].mxu0 %v414
    %v533 = vpop.f32.mrb[0].mxu0
    %v534 = vadd.f32 %v82, %v533
    %v535 = vpop.f32.mrb[0].mxu0
    %536 = vmatprep.mubr.f32.mxu0 0.0
    %537 = vmatmul.mubr.f32.gmra.mrb[0].mxu0 %v417
    %v538 = vpop.f32.mrb[0].mxu0
    %v539 = vadd.f32 %v83, %v538
    %v540 = vpop.f32.mrb[0].mxu0
    %541 = vmatprep.mubr.f32.mxu0 0.0
    %542 = vmatmul.mubr.f32.gmra.mrb[0].mxu0 %v420
    %v543 = vpop.f32.mrb[0].mxu0
    %v544 = vadd.f32 %v84, %v543
    %v545 = vpop.f32.mrb[0].mxu0
    %546 = vmatprep.mubr.f32.mxu0 0.0
    %547 = vmatmul.mubr.f32.gmra.mrb[0].mxu0 %v423
    %v548 = vpop.f32.mrb[0].mxu0
    %v549 = vadd.f32 %v85, %v548
    %v550 = vpop.f32.mrb[0].mxu0
    %551 = vmatprep.mubr.f32.mxu0 0.0
    %552 = vmatmul.mubr.f32.gmra.mrb[0].mxu0 %v426
    %v553 = vpop.f32.mrb[0].mxu0
    %v554 = vadd.f32 %v86, %v553
    %v555 = vpop.f32.mrb[0].mxu0
    %556 = vmatprep.mubr.f32.mxu0 0.0
    %557 = vmatmul.mubr.f32.gmra.mrb[0].mxu0 %v429
    %v558 = vpop.f32.mrb[0].mxu0
    %v559 = vadd.f32 %v87, %v558
    %v560 = vpop.f32.mrb[0].mxu0
    %561 = vmatprep.mubr.f32.mxu0 0.0
    %562 = vmatmul.mubr.f32.gmra.mrb[0].mxu0 %v432
    %v563 = vpop.f32.mrb[0].mxu0
    %v564 = vadd.f32 %v88, %v563
    %v565 = vpop.f32.mrb[0].mxu0
    %566 = vmatprep.mubr.f32.mxu0 0.0
    %567 = vmatmul.mubr.f32.gmra.mrb[0].mxu0 %v435
    %v568 = vpop.f32.mrb[0].mxu0
    %v569 = vadd.f32 %v89, %v568
    %v570 = vpop.f32.mrb[0].mxu0
    %571 = vmatprep.mubr.f32.mxu0 0.0
    %572 = vmatmul.mubr.f32.gmra.mrb[0].mxu0 %v438
    %v573 = vpop.f32.mrb[0].mxu0
    %v574 = vadd.f32 %v90, %v573
    %v575 = vpop.f32.mrb[0].mxu0
    %576 = vmatprep.mubr.f32.mxu0 0.0
    %577 = vmatmul.mubr.f32.gmra.mrb[0].mxu0 %v441
    %v578 = vpop.f32.mrb[0].mxu0
    %v579 = vadd.f32 %v91, %v578
    %v580 = vpop.f32.mrb[0].mxu0
    %581 = vmatprep.mubr.f32.mxu0 0.0
    %582 = vmatmul.mubr.f32.gmra.mrb[0].mxu0 %v444
    %v583 = vpop.f32.mrb[0].mxu0
    %v584 = vadd.f32 %v92, %v583
    %v585 = vpop.f32.mrb[0].mxu0
    %586 = vmatprep.mubr.f32.mxu0 0.0
    %587 = vmatmul.mubr.f32.gmra.mrb[0].mxu0 %v447
    %v588 = vpop.f32.mrb[0].mxu0
    %v589 = vadd.f32 %v93, %v588
    %v590 = vpop.f32.mrb[0].mxu0
    %591 = vmatprep.mubr.f32.mxu0 0.0
    %592 = vmatmul.mubr.f32.gmra.mrb[0].mxu0 %v450
    %v593 = vpop.f32.mrb[0].mxu0
    %v594 = vadd.f32 %v94, %v593
    %v595 = vpop.f32.mrb[0].mxu0
    %596 = vmatprep.mubr.f32.mxu0 0.0
    %597 = vmatmul.mubr.f32.gmra.mrb[0].mxu0 %v453
    %v598 = vpop.f32.mrb[0].mxu0
    %v599 = vadd.f32 %v95, %v598
    %v600 = vpop.f32.mrb[0].mxu0
    %601 = vmatprep.mubr.f32.mxu0 0.0
    %602 = vmatmul.mubr.f32.gmra.mrb[0].mxu0 %v456
    %v603 = vpop.f32.mrb[0].mxu0
    %v604 = vadd.f32 %v96, %v603
    %v605 = vpop.f32.mrb[0].mxu0
    %606 = vmatprep.mubr.f32.mxu0 0.0
    %607 = vmatmul.mubr.f32.gmra.mrb[0].mxu0 %v459
    %v608 = vpop.f32.mrb[0].mxu0
    %v609 = vadd.f32 %v97, %v608
    %v610 = vpop.f32.mrb[0].mxu0
    %611 = vdwg.mxu0
    %vm612 = vcmask 130048
    %v613 = vsel %vm612, %v534, -inf
    %614 = vmax.xlane.f32.xlu0 %v613
    %v615 = vpop.xlane.xlu0 %614
    %v616 = vsel %vm612, %v539, -inf
    %617 = vmax.xlane.f32.xlu0 %v616
    %v618 = vpop.xlane.xlu0 %617
    %v619 = vsel %vm612, %v544, -inf
    %620 = vmax.xlane.f32.xlu0 %v619
    %v621 = vpop.xlane.xlu0 %620
    %v622 = vsel %vm612, %v549, -inf
    %623 = vmax.xlane.f32.xlu0 %v622
    %v624 = vpop.xlane.xlu0 %623
    %v625 = vsel %vm612, %v554, -inf
    %626 = vmax.xlane.f32.xlu0 %v625
    %v627 = vpop.xlane.xlu0 %626
    %v628 = vsel %vm612, %v559, -inf
    %629 = vmax.xlane.f32.xlu0 %v628
    %v630 = vpop.xlane.xlu0 %629
    %v631 = vsel %vm612, %v564, -inf
    %632 = vmax.xlane.f32.xlu0 %v631
    %v633 = vpop.xlane.xlu0 %632
    %v634 = vsel %vm612, %v569, -inf
    %635 = vmax.xlane.f32.xlu0 %v634
    %v636 = vpop.xlane.xlu0 %635
    %v637 = vsel %vm612, %v574, -inf
    %638 = vmax.xlane.f32.xlu0 %v637
    %v639 = vpop.xlane.xlu0 %638
    %v640 = vsel %vm612, %v579, -inf
    %641 = vmax.xlane.f32.xlu0 %v640
    %v642 = vpop.xlane.xlu0 %641
    %v643 = vsel %vm612, %v584, -inf
    %644 = vmax.xlane.f32.xlu0 %v643
    %v645 = vpop.xlane.xlu0 %644
    %v646 = vsel %vm612, %v589, -inf
    %647 = vmax.xlane.f32.xlu0 %v646
    %v648 = vpop.xlane.xlu0 %647
    %v649 = vsel %vm612, %v594, -inf
    %650 = vmax.xlane.f32.xlu0 %v649
    %v651 = vpop.xlane.xlu0 %650
    %v652 = vsel %vm612, %v599, -inf
    %653 = vmax.xlane.f32.xlu0 %v652
    %v654 = vpop.xlane.xlu0 %653
    %v655 = vsel %vm612, %v604, -inf
    %656 = vmax.xlane.f32.xlu0 %v655
    %v657 = vpop.xlane.xlu0 %656
    %v658 = vsel %vm612, %v609, -inf
    %659 = vmax.xlane.f32.xlu0 %v658
    %v660 = vpop.xlane.xlu0 %659
    %v661 = vsub.f32 %v534, %v615
    %v662 = vsub.f32 %v539, %v618
    %v663 = vsub.f32 %v544, %v621
    %v664 = vsub.f32 %v549, %v624
    %v665 = vsub.f32 %v554, %v627
    %v666 = vsub.f32 %v559, %v630
    %v667 = vsub.f32 %v564, %v633
    %v668 = vsub.f32 %v569, %v636
    %v669 = vsub.f32 %v574, %v639
    %v670 = vsub.f32 %v579, %v642
    %v671 = vsub.f32 %v584, %v645
    %v672 = vsub.f32 %v589, %v648
    %v673 = vsub.f32 %v594, %v651
    %v674 = vsub.f32 %v599, %v654
    %v675 = vsub.f32 %v604, %v657
    %v676 = vsub.f32 %v609, %v660
    %v677 = vmul.f32 %v661, 1.442695
    %v678 = vpow.pop %v677
    %v679 = vmul.f32 %v662, 1.442695
    %v680 = vpow.pop %v679
    %v681 = vmul.f32 %v663, 1.442695
    %v682 = vpow.pop %v681
    %v683 = vmul.f32 %v664, 1.442695
    %v684 = vpow.pop %v683
    %v685 = vmul.f32 %v665, 1.442695
    %v686 = vpow.pop %v685
    %v687 = vmul.f32 %v666, 1.442695
    %v688 = vpow.pop %v687
    %v689 = vmul.f32 %v667, 1.442695
    %v690 = vpow.pop %v689
    %v691 = vmul.f32 %v668, 1.442695
    %v692 = vpow.pop %v691
    %v693 = vmul.f32 %v669, 1.442695
    %v694 = vpow.pop %v693
    %v695 = vmul.f32 %v670, 1.442695
    %v696 = vpow.pop %v695
    %v697 = vmul.f32 %v671, 1.442695
    %v698 = vpow.pop %v697
    %v699 = vmul.f32 %v672, 1.442695
    %v700 = vpow.pop %v699
    %v701 = vmul.f32 %v673, 1.442695
    %v702 = vpow.pop %v701
    %v703 = vmul.f32 %v674, 1.442695
    %v704 = vpow.pop %v703
    %v705 = vmul.f32 %v675, 1.442695
    %v706 = vpow.pop %v705
    %v707 = vmul.f32 %v676, 1.442695
    %v708 = vpow.pop %v707
    %v709 = vsel %vm612, %v678, 0.0
    %710 = vadd.xlane.f32.xlu0 %v709
    %v711 = vpop.xlane.xlu0 %710
    %v712 = vsel %vm612, %v680, 0.0
    %713 = vadd.xlane.f32.xlu0 %v712
    %v714 = vpop.xlane.xlu0 %713
    %v715 = vsel %vm612, %v682, 0.0
    %716 = vadd.xlane.f32.xlu0 %v715
    %v717 = vpop.xlane.xlu0 %716
    %v718 = vsel %vm612, %v684, 0.0
    %719 = vadd.xlane.f32.xlu0 %v718
    %v720 = vpop.xlane.xlu0 %719
    %v721 = vsel %vm612, %v686, 0.0
    %722 = vadd.xlane.f32.xlu0 %v721
    %v723 = vpop.xlane.xlu0 %722
    %v724 = vsel %vm612, %v688, 0.0
    %725 = vadd.xlane.f32.xlu0 %v724
    %v726 = vpop.xlane.xlu0 %725
    %v727 = vsel %vm612, %v690, 0.0
    %728 = vadd.xlane.f32.xlu0 %v727
    %v729 = vpop.xlane.xlu0 %728
    %v730 = vsel %vm612, %v692, 0.0
    %731 = vadd.xlane.f32.xlu0 %v730
    %v732 = vpop.xlane.xlu0 %731
    %v733 = vsel %vm612, %v694, 0.0
    %734 = vadd.xlane.f32.xlu0 %v733
    %v735 = vpop.xlane.xlu0 %734
    %v736 = vsel %vm612, %v696, 0.0
    %737 = vadd.xlane.f32.xlu0 %v736
    %v738 = vpop.xlane.xlu0 %737
    %v739 = vsel %vm612, %v698, 0.0
    %740 = vadd.xlane.f32.xlu0 %v739
    %v741 = vpop.xlane.xlu0 %740
    %v742 = vsel %vm612, %v700, 0.0
    %743 = vadd.xlane.f32.xlu0 %v742
    %v744 = vpop.xlane.xlu0 %743
    %v745 = vsel %vm612, %v702, 0.0
    %746 = vadd.xlane.f32.xlu0 %v745
    %v747 = vpop.xlane.xlu0 %746
    %v748 = vsel %vm612, %v704, 0.0
    %749 = vadd.xlane.f32.xlu0 %v748
    %v750 = vpop.xlane.xlu0 %749
    %v751 = vsel %vm612, %v706, 0.0
    %752 = vadd.xlane.f32.xlu0 %v751
    %v753 = vpop.xlane.xlu0 %752
    %v754 = vsel %vm612, %v708, 0.0
    %755 = vadd.xlane.f32.xlu0 %v754
    %v756 = vpop.xlane.xlu0 %755
    %v757 = vrcp.pop %v711
    %v758 = vrcp.pop %v714
    %v759 = vrcp.pop %v717
    %v760 = vrcp.pop %v720
    %v761 = vrcp.pop %v723
    %v762 = vrcp.pop %v726
    %v763 = vrcp.pop %v729
    %v764 = vrcp.pop %v732
    %v765 = vrcp.pop %v735
    %v766 = vrcp.pop %v738
    %v767 = vrcp.pop %v741
    %v768 = vrcp.pop %v744
    %v769 = vrcp.pop %v747
    %v770 = vrcp.pop %v750
    %v771 = vrcp.pop %v753
    %v772 = vrcp.pop %v756
    %v773 = vmul.f32 %v678, %v757
    %v774 = vmul.f32 %v680, %v758
    %v775 = vmul.f32 %v682, %v759
    %v776 = vmul.f32 %v684, %v760
    %v777 = vmul.f32 %v686, %v761
    %v778 = vmul.f32 %v688, %v762
    %v779 = vmul.f32 %v690, %v763
    %v780 = vmul.f32 %v692, %v764
    %v781 = vmul.f32 %v694, %v765
    %v782 = vmul.f32 %v696, %v766
    %v783 = vmul.f32 %v698, %v767
    %v784 = vmul.f32 %v700, %v768
    %v785 = vmul.f32 %v702, %v769
    %v786 = vmul.f32 %v704, %v770
    %v787 = vmul.f32 %v706, %v771
    %v788 = vmul.f32 %v708, %v772
    %v790 = vsel %vm612, %v773, 0
    %v793 = vsel %vm612, %v774, 0
    %v796 = vsel %vm612, %v775, 0
    %v799 = vsel %vm612, %v776, 0
    %v802 = vsel %vm612, %v777, 0
    %v805 = vsel %vm612, %v778, 0
    %v808 = vsel %vm612, %v779, 0
    %v811 = vsel %vm612, %v780, 0
    %v814 = vsel %vm612, %v781, 0
    %v817 = vsel %vm612, %v782, 0
    %v820 = vsel %vm612, %v783, 0
    %v823 = vsel %vm612, %v784, 0
    %v826 = vsel %vm612, %v785, 0
    %v829 = vsel %vm612, %v786, 0
    %v832 = vsel %vm612, %v787, 0
    %v835 = vsel %vm612, %v788, 0
    %837 = vmatprep.subr.mxu0 0.0
    %838 = vmatpush1.msra.mxu0 %v384
    %839 = vmatprep.subr.mxu0 0.0
    %840 = vmatpush1.msra.mxu0 %v389
    %841 = vmatprep.subr.mxu0 0.0
    %842 = vmatpush1.msra.mxu0 0.0
    %843 = vmatprep.subr.mxu0 0.0
    %844 = vmatpush1.msra.mxu0 0.0
    %845 = vmatprep.subr.mxu0 0.0
    %846 = vmatpush1.msra.mxu0 0.0
    %847 = vmatprep.subr.mxu0 0.0
    %848 = vmatpush1.msra.mxu0 0.0
    %849 = vmatprep.subr.mxu0 0.0
    %850 = vmatpush1.msra.mxu0 0.0
    %851 = vmatprep.subr.mxu0 0.0
    %852 = vmatpush1.msra.mxu0 0.0
    %853 = vmatprep.subr.mxu0 0.0
    %854 = vmatpush1.msra.mxu0 0.0
    %855 = vmatprep.subr.mxu0 0.0
    %856 = vmatpush1.msra.mxu0 0.0
    %857 = vmatprep.subr.mxu0 0.0
    %858 = vmatpush1.msra.mxu0 0.0
    %859 = vmatprep.subr.mxu0 0.0
    %860 = vmatpush1.msra.mxu0 0.0
    %861 = vmatprep.subr.mxu0 0.0
    %862 = vmatpush1.msra.mxu0 0.0
    %863 = vmatprep.subr.mxu0 0.0
    %864 = vmatpush1.msra.mxu0 0.0
    %865 = vmatprep.subr.mxu0 0.0
    %866 = vmatpush1.msra.mxu0 0.0
    %867 = vmatprep.subr.mxu0 0.0
    %868 = vmatpush1.msra.mxu0 0.0
    %869 = vmatprep.subr.mxu0 0.0
    %870 = vmatpush1.msra.mxu0 0.0
    %871 = vmatprep.subr.mxu0 0.0
    %872 = vmatpush1.msra.mxu0 0.0
    %873 = vmatprep.subr.mxu0 0.0
    %874 = vmatpush1.msra.mxu0 0.0
    %875 = vmatprep.subr.mxu0 0.0
    %876 = vmatpush1.msra.mxu0 0.0
    %877 = vmatprep.subr.mxu0 0.0
    %878 = vmatpush1.msra.mxu0 0.0
    %879 = vmatprep.subr.mxu0 0.0
    %880 = vmatpush1.msra.mxu0 0.0
    %881 = vmatprep.subr.mxu0 0.0
    %882 = vmatpush1.msra.mxu0 0.0
    %883 = vmatprep.subr.mxu0 0.0
    %884 = vmatpush1.msra.mxu0 0.0
    %885 = vmatprep.subr.mxu0 0.0
    %886 = vmatpush1.msra.mxu0 0.0
    %887 = vmatprep.subr.mxu0 0.0
    %888 = vmatpush1.msra.mxu0 0.0
    %889 = vmatprep.subr.mxu0 0.0
    %890 = vmatpush1.msra.mxu0 0.0
    %891 = vmatprep.subr.mxu0 0.0
    %892 = vmatpush1.msra.mxu0 0.0
    %893 = vmatprep.subr.mxu0 0.0
    %894 = vmatpush1.msra.mxu0 0.0
    %895 = vmatprep.subr.mxu0 0.0
    %896 = vmatpush1.msra.mxu0 0.0
    %897 = vmatprep.subr.mxu0 0.0
    %898 = vmatpush1.msra.mxu0 0.0
    %899 = vmatprep.subr.mxu0 0.0
    %900 = vmatpush1.msra.mxu0 0.0
    %901 = vmatprep.mubr.f32.mxu0 0.0
    %902 = vmatmul.mubr.f32.gmra.mrb[0].mxu0 %v790
    %v903 = vpop.f32.mrb[0].mxu0
    %v904 = vadd.f32 0.0, %v903
    %v905 = vpop.f32.mrb[0].mxu0
    %906 = vmatprep.mubr.f32.mxu0 0.0
    %907 = vmatmul.mubr.f32.gmra.mrb[0].mxu0 %v793
    %v908 = vpop.f32.mrb[0].mxu0
    %v909 = vadd.f32 0.0, %v908
    %v910 = vpop.f32.mrb[0].mxu0
    %911 = vmatprep.mubr.f32.mxu0 0.0
    %912 = vmatmul.mubr.f32.gmra.mrb[0].mxu0 %v796
    %v913 = vpop.f32.mrb[0].mxu0
    %v914 = vadd.f32 0.0, %v913
    %v915 = vpop.f32.mrb[0].mxu0
    %916 = vmatprep.mubr.f32.mxu0 0.0
    %917 = vmatmul.mubr.f32.gmra.mrb[0].mxu0 %v799
    %v918 = vpop.f32.mrb[0].mxu0
    %v919 = vadd.f32 0.0, %v918
    %v920 = vpop.f32.mrb[0].mxu0
    %921 = vmatprep.mubr.f32.mxu0 0.0
    %922 = vmatmul.mubr.f32.gmra.mrb[0].mxu0 %v802
    %v923 = vpop.f32.mrb[0].mxu0
    %v924 = vadd.f32 0.0, %v923
    %v925 = vpop.f32.mrb[0].mxu0
    %926 = vmatprep.mubr.f32.mxu0 0.0
    %927 = vmatmul.mubr.f32.gmra.mrb[0].mxu0 %v805
    %v928 = vpop.f32.mrb[0].mxu0
    %v929 = vadd.f32 0.0, %v928
    %v930 = vpop.f32.mrb[0].mxu0
    %931 = vmatprep.mubr.f32.mxu0 0.0
    %932 = vmatmul.mubr.f32.gmra.mrb[0].mxu0 %v808
    %v933 = vpop.f32.mrb[0].mxu0
    %v934 = vadd.f32 0.0, %v933
    %v935 = vpop.f32.mrb[0].mxu0
    %936 = vmatprep.mubr.f32.mxu0 0.0
    %937 = vmatmul.mubr.f32.gmra.mrb[0].mxu0 %v811
    %v938 = vpop.f32.mrb[0].mxu0
    %v939 = vadd.f32 0.0, %v938
    %v940 = vpop.f32.mrb[0].mxu0
    %941 = vmatprep.mubr.f32.mxu0 0.0
    %942 = vmatmul.mubr.f32.gmra.mrb[0].mxu0 %v814
    %v943 = vpop.f32.mrb[0].mxu0
    %v944 = vadd.f32 0.0, %v943
    %v945 = vpop.f32.mrb[0].mxu0
    %946 = vmatprep.mubr.f32.mxu0 0.0
    %947 = vmatmul.mubr.f32.gmra.mrb[0].mxu0 %v817
    %v948 = vpop.f32.mrb[0].mxu0
    %v949 = vadd.f32 0.0, %v948
    %v950 = vpop.f32.mrb[0].mxu0
    %951 = vmatprep.mubr.f32.mxu0 0.0
    %952 = vmatmul.mubr.f32.gmra.mrb[0].mxu0 %v820
    %v953 = vpop.f32.mrb[0].mxu0
    %v954 = vadd.f32 0.0, %v953
    %v955 = vpop.f32.mrb[0].mxu0
    %956 = vmatprep.mubr.f32.mxu0 0.0
    %957 = vmatmul.mubr.f32.gmra.mrb[0].mxu0 %v823
    %v958 = vpop.f32.mrb[0].mxu0
    %v959 = vadd.f32 0.0, %v958
    %v960 = vpop.f32.mrb[0].mxu0
    %961 = vmatprep.mubr.f32.mxu0 0.0
    %962 = vmatmul.mubr.f32.gmra.mrb[0].mxu0 %v826
    %v963 = vpop.f32.mrb[0].mxu0
    %v964 = vadd.f32 0.0, %v963
    %v965 = vpop.f32.mrb[0].mxu0
    %966 = vmatprep.mubr.f32.mxu0 0.0
    %967 = vmatmul.mubr.f32.gmra.mrb[0].mxu0 %v829
    %v968 = vpop.f32.mrb[0].mxu0
    %v969 = vadd.f32 0.0, %v968
    %v970 = vpop.f32.mrb[0].mxu0
    %971 = vmatprep.mubr.f32.mxu0 0.0
    %972 = vmatmul.mubr.f32.gmra.mrb[0].mxu0 %v832
    %v973 = vpop.f32.mrb[0].mxu0
    %v974 = vadd.f32 0.0, %v973
    %v975 = vpop.f32.mrb[0].mxu0
    %976 = vmatprep.mubr.f32.mxu0 0.0
    %977 = vmatmul.mubr.f32.gmra.mrb[0].mxu0 %v835
    %v978 = vpop.f32.mrb[0].mxu0
    %v979 = vadd.f32 0.0, %v978
    %v980 = vpop.f32.mrb[0].mxu0
    %981 = vdwg.mxu0
    %v982 = vmul.f32 %v904, %v130
    %v983 = vmul.f32 %v909, %v131
    %v984 = vmul.f32 %v914, %v132
    %v985 = vmul.f32 %v919, %v133
    %v986 = vmul.f32 %v924, %v134
    %v987 = vmul.f32 %v929, %v135
    %v988 = vmul.f32 %v934, %v136
    %v989 = vmul.f32 %v939, %v137
    %v990 = vmul.f32 %v944, %v138
    %v991 = vmul.f32 %v949, %v139
    %v992 = vmul.f32 %v954, %v140
    %v993 = vmul.f32 %v959, %v141
    %v994 = vmul.f32 %v964, %v142
    %v995 = vmul.f32 %v969, %v143
    %v996 = vmul.f32 %v974, %v144
    %v997 = vmul.f32 %v979, %v145
    %v998 = vsel %vm150, %v982, 0.0
    %v999 = vsel %vm150, %v983, 0.0
    %v1000 = vadd.f32 %v998, %v999
    %v1001 = vsel %vm150, %v984, 0.0
    %v1002 = vadd.f32 %v1000, %v1001
    %v1003 = vsel %vm150, %v985, 0.0
    %v1004 = vadd.f32 %v1002, %v1003
    %v1005 = vsel %vm150, %v986, 0.0
    %v1006 = vadd.f32 %v1004, %v1005
    %v1007 = vsel %vm150, %v987, 0.0
    %v1008 = vadd.f32 %v1006, %v1007
    %v1009 = vsel %vm150, %v988, 0.0
    %v1010 = vadd.f32 %v1008, %v1009
    %v1011 = vsel %vm150, %v989, 0.0
    %v1012 = vadd.f32 %v1010, %v1011
    %v1013 = vsel %vm150, %v990, 0.0
    %v1014 = vsel %vm150, %v991, 0.0
    %v1015 = vadd.f32 %v1013, %v1014
    %v1016 = vsel %vm150, %v992, 0.0
    %v1017 = vadd.f32 %v1015, %v1016
    %v1018 = vsel %vm150, %v993, 0.0
    %v1019 = vadd.f32 %v1017, %v1018
    %v1020 = vsel %vm150, %v994, 0.0
    %v1021 = vadd.f32 %v1019, %v1020
    %v1022 = vsel %vm150, %v995, 0.0
    %v1023 = vadd.f32 %v1021, %v1022
    %v1024 = vsel %vm150, %v996, 0.0
    %v1025 = vadd.f32 %v1023, %v1024
    %v1026 = vsel %vm150, %v997, 0.0
    %v1027 = vadd.f32 %v1025, %v1026
    %v1029 = vlaneseq
    %v1030 = vshrl.u32 %v1029, 7
    %v1031 = vsub.s32 0, %v1030
    %v1032 = vrot.slane %v396, %v1031
    %v1035 = vsel %vm150, %v1012, 0
    %v1038 = vsel %vm150, %v1027, 0
    %1040 = vmatprep.subr.mxu0 0.0
    %1041 = vmatpush1.msra.mxu0 %v392
    %1042 = vmatprep.subr.mxu0 0.0
    %1043 = vmatpush1.msra.mxu0 %v393
    %1044 = vmatprep.subr.mxu0 0.0
    %1045 = vmatpush1.msra.mxu0 %v394
    %1046 = vmatprep.subr.mxu0 0.0
    %1047 = vmatpush1.msra.mxu0 %v395
    %1048 = vmatprep.subr.mxu0 0.0
    %1049 = vmatpush1.msra.mxu0 0.0
    %1050 = vmatprep.subr.mxu0 0.0
    %1051 = vmatpush1.msra.mxu0 0.0
    %1052 = vmatprep.subr.mxu0 0.0
    %1053 = vmatpush1.msra.mxu0 0.0
    %1054 = vmatprep.subr.mxu0 0.0
    %1055 = vmatpush1.msra.mxu0 0.0
    %1056 = vmatprep.subr.mxu0 0.0
    %1057 = vmatpush1.msra.mxu0 0.0
    %1058 = vmatprep.subr.mxu0 0.0
    %1059 = vmatpush1.msra.mxu0 0.0
    %1060 = vmatprep.subr.mxu0 0.0
    %1061 = vmatpush1.msra.mxu0 0.0
    %1062 = vmatprep.subr.mxu0 0.0
    %1063 = vmatpush1.msra.mxu0 0.0
    %1064 = vmatprep.subr.mxu0 0.0
    %1065 = vmatpush1.msra.mxu0 0.0
    %1066 = vmatprep.subr.mxu0 0.0
    %1067 = vmatpush1.msra.mxu0 0.0
    %1068 = vmatprep.subr.mxu0 0.0
    %1069 = vmatpush1.msra.mxu0 0.0
    %1070 = vmatprep.subr.mxu0 0.0
    %1071 = vmatpush1.msra.mxu0 0.0
    %1072 = vmatprep.subr.mxu0 0.0
    %1073 = vmatpush1.msra.mxu0 0.0
    %1074 = vmatprep.subr.mxu0 0.0
    %1075 = vmatpush1.msra.mxu0 0.0
    %1076 = vmatprep.subr.mxu0 0.0
    %1077 = vmatpush1.msra.mxu0 0.0
    %1078 = vmatprep.subr.mxu0 0.0
    %1079 = vmatpush1.msra.mxu0 0.0
    %1080 = vmatprep.subr.mxu0 0.0
    %1081 = vmatpush1.msra.mxu0 0.0
    %1082 = vmatprep.subr.mxu0 0.0
    %1083 = vmatpush1.msra.mxu0 0.0
    %1084 = vmatprep.subr.mxu0 0.0
    %1085 = vmatpush1.msra.mxu0 0.0
    %1086 = vmatprep.subr.mxu0 0.0
    %1087 = vmatpush1.msra.mxu0 0.0
    %1088 = vmatprep.subr.mxu0 0.0
    %1089 = vmatpush1.msra.mxu0 0.0
    %1090 = vmatprep.subr.mxu0 0.0
    %1091 = vmatpush1.msra.mxu0 0.0
    %1092 = vmatprep.subr.mxu0 0.0
    %1093 = vmatpush1.msra.mxu0 0.0
    %1094 = vmatprep.subr.mxu0 0.0
    %1095 = vmatpush1.msra.mxu0 0.0
    %1096 = vmatprep.subr.mxu0 0.0
    %1097 = vmatpush1.msra.mxu0 0.0
    %1098 = vmatprep.subr.mxu0 0.0
    %1099 = vmatpush1.msra.mxu0 0.0
    %1100 = vmatprep.subr.mxu0 0.0
    %1101 = vmatpush1.msra.mxu0 0.0
    %1102 = vmatprep.subr.mxu0 0.0
    %1103 = vmatpush1.msra.mxu0 0.0
    %1104 = vmatprep.mubr.f32.mxu0 0.0
    %1105 = vmatmul.mubr.f32.gmra.mrb[0].mxu0 %v1035
    %v1106 = vpop.f32.mrb[0].mxu0
    %v1107 = vadd.f32 %v1032, %v1106
    %v1108 = vpop.f32.mrb[0].mxu0
    %1109 = vmatprep.mubr.f32.mxu0 0.0
    %1110 = vmatmul.mubr.f32.gmra.mrb[0].mxu0 %v1038
    %v1111 = vpop.f32.mrb[0].mxu0
    %v1112 = vadd.f32 %v1032, %v1111
    %v1113 = vpop.f32.mrb[0].mxu0
    %1114 = vdwg.mxu0
    %v1115 = vadd.f32 %v1107, %v80
    %v1116 = vadd.f32 %v1112, %v81
    %v1117 = vld [vmem:[%s9] sm:$0x1]
    %v1118 = vld [vmem:[%s10] sm:$0x1]
    %v1119 = vsel %vm150, %v1115, 0.0
    %1120 = vadd.xlane.f32.xlu0 %v1119
    %v1121 = vpop.xlane.xlu0 %1120
    %v1122 = vsel %vm150, %v1116, 0.0
    %1123 = vadd.xlane.f32.xlu0 %v1122
    %v1124 = vpop.xlane.xlu0 %1123
    %v1125 = vrcp.pop 32.0
    %v1126 = vmul.f32 %v1121, %v1125
    %v1127 = vmul.f32 %v1124, %v1125
    %v1128 = vsub.f32 %v1115, %v1126
    %v1129 = vsub.f32 %v1116, %v1127
    %v1130 = vmul.f32 %v1128, %v1128
    %v1131 = vmul.f32 %v1129, %v1129
    %v1132 = vsel %vm150, %v1130, 0.0
    %1133 = vadd.xlane.f32.xlu0 %v1132
    %v1134 = vpop.xlane.xlu0 %1133
    %v1135 = vsel %vm150, %v1131, 0.0
    %1136 = vadd.xlane.f32.xlu0 %v1135
    %v1137 = vpop.xlane.xlu0 %1136
    %v1138 = vmul.f32 %v1134, %v1125
    %v1139 = vmul.f32 %v1137, %v1125
    %v1140 = vadd.f32 %v1138, 1e-05
    %v1141 = vadd.f32 %v1139, 1e-05
    %v1142 = vrsqrt.pop %v1140
    %v1143 = vrsqrt.pop %v1141
    %v1144 = vmul.f32 %v1128, %v1142
    %v1145 = vmul.f32 %v1129, %v1143
    %v1147 = vlaneseq
    %v1148 = vshrl.u32 %v1147, 7
    %v1149 = vsub.s32 0, %v1148
    %v1150 = vrot.slane %v1117, %v1149
    %v1152 = vmul.f32 %v1144, %v1150
    %v1153 = vmul.f32 %v1145, %v1150
    %v1155 = vlaneseq
    %v1156 = vshrl.u32 %v1155, 7
    %v1157 = vsub.s32 0, %v1156
    %v1158 = vrot.slane %v1118, %v1157
    %v1160 = vadd.f32 %v1152, %v1158
    %v1161 = vadd.f32 %v1153, %v1158
    %v1162 = vld [vmem:[%s11] sm:$0xff]
    %v1163 = vld [vmem:[%s11 + $0x8] sm:$0xff]
    %v1164 = vld [vmem:[%s11 + $0x10] sm:$0xff]
    %v1165 = vld [vmem:[%s11 + $0x18] sm:$0xff]
    %v1167 = vsel %vm150, %v78, 0
    %v1170 = vsel %vm150, %v79, 0
    %1172 = vmatprep.subr.mxu0 0.0
    %1173 = vmatpush1.msra.mxu0 %v1162
    %1174 = vmatprep.subr.mxu0 0.0
    %1175 = vmatpush1.msra.mxu0 %v1163
    %1176 = vmatprep.subr.mxu0 0.0
    %1177 = vmatpush1.msra.mxu0 %v1164
    %1178 = vmatprep.subr.mxu0 0.0
    %1179 = vmatpush1.msra.mxu0 %v1165
    %1180 = vmatprep.subr.mxu0 0.0
    %1181 = vmatpush1.msra.mxu0 0.0
    %1182 = vmatprep.subr.mxu0 0.0
    %1183 = vmatpush1.msra.mxu0 0.0
    %1184 = vmatprep.subr.mxu0 0.0
    %1185 = vmatpush1.msra.mxu0 0.0
    %1186 = vmatprep.subr.mxu0 0.0
    %1187 = vmatpush1.msra.mxu0 0.0
    %1188 = vmatprep.subr.mxu0 0.0
    %1189 = vmatpush1.msra.mxu0 0.0
    %1190 = vmatprep.subr.mxu0 0.0
    %1191 = vmatpush1.msra.mxu0 0.0
    %1192 = vmatprep.subr.mxu0 0.0
    %1193 = vmatpush1.msra.mxu0 0.0
    %1194 = vmatprep.subr.mxu0 0.0
    %1195 = vmatpush1.msra.mxu0 0.0
    %1196 = vmatprep.subr.mxu0 0.0
    %1197 = vmatpush1.msra.mxu0 0.0
    %1198 = vmatprep.subr.mxu0 0.0
    %1199 = vmatpush1.msra.mxu0 0.0
    %1200 = vmatprep.subr.mxu0 0.0
    %1201 = vmatpush1.msra.mxu0 0.0
    %1202 = vmatprep.subr.mxu0 0.0
    %1203 = vmatpush1.msra.mxu0 0.0
    %1204 = vmatprep.subr.mxu0 0.0
    %1205 = vmatpush1.msra.mxu0 0.0
    %1206 = vmatprep.subr.mxu0 0.0
    %1207 = vmatpush1.msra.mxu0 0.0
    %1208 = vmatprep.subr.mxu0 0.0
    %1209 = vmatpush1.msra.mxu0 0.0
    %1210 = vmatprep.subr.mxu0 0.0
    %1211 = vmatpush1.msra.mxu0 0.0
    %1212 = vmatprep.subr.mxu0 0.0
    %1213 = vmatpush1.msra.mxu0 0.0
    %1214 = vmatprep.subr.mxu0 0.0
    %1215 = vmatpush1.msra.mxu0 0.0
    %1216 = vmatprep.subr.mxu0 0.0
    %1217 = vmatpush1.msra.mxu0 0.0
    %1218 = vmatprep.subr.mxu0 0.0
    %1219 = vmatpush1.msra.mxu0 0.0
    %1220 = vmatprep.subr.mxu0 0.0
    %1221 = vmatpush1.msra.mxu0 0.0
    %1222 = vmatprep.subr.mxu0 0.0
    %1223 = vmatpush1.msra.mxu0 0.0
    %1224 = vmatprep.subr.mxu0 0.0
    %1225 = vmatpush1.msra.mxu0 0.0
    %1226 = vmatprep.subr.mxu0 0.0
    %1227 = vmatpush1.msra.mxu0 0.0
    %1228 = vmatprep.subr.mxu0 0.0
    %1229 = vmatpush1.msra.mxu0 0.0
    %1230 = vmatprep.subr.mxu0 0.0
    %1231 = vmatpush1.msra.mxu0 0.0
    %1232 = vmatprep.subr.mxu0 0.0
    %1233 = vmatpush1.msra.mxu0 0.0
    %1234 = vmatprep.subr.mxu0 0.0
    %1235 = vmatpush1.msra.mxu0 0.0
    %1236 = vmatprep.mubr.f32.mxu0 0.0
    %1237 = vmatmul.mubr.f32.gmra.mrb[0].mxu0 %v1167
    %v1238 = vpop.f32.mrb[0].mxu0
    %v1239 = vadd.f32 0.0, %v1238
    %v1240 = vpop.f32.mrb[0].mxu0
    %1241 = vmatprep.mubr.f32.mxu0 0.0
    %1242 = vmatmul.mubr.f32.gmra.mrb[0].mxu0 %v1170
    %v1243 = vpop.f32.mrb[0].mxu0
    %v1244 = vadd.f32 0.0, %v1243
    %v1245 = vpop.f32.mrb[0].mxu0
    %1246 = vdwg.mxu0
    %s1247 = scalar_lea.vmem %s11, 32
    %v1248 = vld [vmem:[%s1247] sm:$0xff]
    %v1249 = vld [vmem:[%s1247 + $0x8] sm:$0xff]
    %v1250 = vld [vmem:[%s1247 + $0x10] sm:$0xff]
    %v1251 = vld [vmem:[%s1247 + $0x18] sm:$0xff]
    %1252 = vmatprep.subr.mxu0 0.0
    %1253 = vmatpush1.msra.mxu0 %v1248
    %1254 = vmatprep.subr.mxu0 0.0
    %1255 = vmatpush1.msra.mxu0 %v1249
    %1256 = vmatprep.subr.mxu0 0.0
    %1257 = vmatpush1.msra.mxu0 %v1250
    %1258 = vmatprep.subr.mxu0 0.0
    %1259 = vmatpush1.msra.mxu0 %v1251
    %1260 = vmatprep.subr.mxu0 0.0
    %1261 = vmatpush1.msra.mxu0 0.0
    %1262 = vmatprep.subr.mxu0 0.0
    %1263 = vmatpush1.msra.mxu0 0.0
    %1264 = vmatprep.subr.mxu0 0.0
    %1265 = vmatpush1.msra.mxu0 0.0
    %1266 = vmatprep.subr.mxu0 0.0
    %1267 = vmatpush1.msra.mxu0 0.0
    %1268 = vmatprep.subr.mxu0 0.0
    %1269 = vmatpush1.msra.mxu0 0.0
    %1270 = vmatprep.subr.mxu0 0.0
    %1271 = vmatpush1.msra.mxu0 0.0
    %1272 = vmatprep.subr.mxu0 0.0
    %1273 = vmatpush1.msra.mxu0 0.0
    %1274 = vmatprep.subr.mxu0 0.0
    %1275 = vmatpush1.msra.mxu0 0.0
    %1276 = vmatprep.subr.mxu0 0.0
    %1277 = vmatpush1.msra.mxu0 0.0
    %1278 = vmatprep.subr.mxu0 0.0
    %1279 = vmatpush1.msra.mxu0 0.0
    %1280 = vmatprep.subr.mxu0 0.0
    %1281 = vmatpush1.msra.mxu0 0.0
    %1282 = vmatprep.subr.mxu0 0.0
    %1283 = vmatpush1.msra.mxu0 0.0
    %1284 = vmatprep.subr.mxu0 0.0
    %1285 = vmatpush1.msra.mxu0 0.0
    %1286 = vmatprep.subr.mxu0 0.0
    %1287 = vmatpush1.msra.mxu0 0.0
    %1288 = vmatprep.subr.mxu0 0.0
    %1289 = vmatpush1.msra.mxu0 0.0
    %1290 = vmatprep.subr.mxu0 0.0
    %1291 = vmatpush1.msra.mxu0 0.0
    %1292 = vmatprep.subr.mxu0 0.0
    %1293 = vmatpush1.msra.mxu0 0.0
    %1294 = vmatprep.subr.mxu0 0.0
    %1295 = vmatpush1.msra.mxu0 0.0
    %1296 = vmatprep.subr.mxu0 0.0
    %1297 = vmatpush1.msra.mxu0 0.0
    %1298 = vmatprep.subr.mxu0 0.0
    %1299 = vmatpush1.msra.mxu0 0.0
    %1300 = vmatprep.subr.mxu0 0.0
    %1301 = vmatpush1.msra.mxu0 0.0
    %1302 = vmatprep.subr.mxu0 0.0
    %1303 = vmatpush1.msra.mxu0 0.0
    %1304 = vmatprep.subr.mxu0 0.0
    %1305 = vmatpush1.msra.mxu0 0.0
    %1306 = vmatprep.subr.mxu0 0.0
    %1307 = vmatpush1.msra.mxu0 0.0
    %1308 = vmatprep.subr.mxu0 0.0
    %1309 = vmatpush1.msra.mxu0 0.0
    %1310 = vmatprep.subr.mxu0 0.0
    %1311 = vmatpush1.msra.mxu0 0.0
    %1312 = vmatprep.subr.mxu0 0.0
    %1313 = vmatpush1.msra.mxu0 0.0
    %1314 = vmatprep.subr.mxu0 0.0
    %1315 = vmatpush1.msra.mxu0 0.0
    %1316 = vmatprep.mubr.f32.mxu0 0.0
    %1317 = vmatmul.mubr.f32.gmra.mrb[0].mxu0 %v152
    %v1318 = vpop.f32.mrb[0].mxu0
    %v1319 = vadd.f32 0.0, %v1318
    %v1320 = vpop.f32.mrb[0].mxu0
    %1321 = vmatprep.mubr.f32.mxu0 0.0
    %1322 = vmatmul.mubr.f32.gmra.mrb[0].mxu0 %v155
    %v1323 = vpop.f32.mrb[0].mxu0
    %v1324 = vadd.f32 0.0, %v1323
    %v1325 = vpop.f32.mrb[0].mxu0
    %1326 = vdwg.mxu0
    %s1327 = scalar_lea.vmem %s11, 64
    %v1328 = vld [vmem:[%s1327] sm:$0xff]
    %v1329 = vld [vmem:[%s1327 + $0x8] sm:$0xff]
    %v1330 = vld [vmem:[%s1327 + $0x10] sm:$0xff]
    %v1331 = vld [vmem:[%s1327 + $0x18] sm:$0xff]
    %v1333 = vsel %vm150, %v1160, 0
    %v1336 = vsel %vm150, %v1161, 0
    %1338 = vmatprep.subr.mxu0 0.0
    %1339 = vmatpush1.msra.mxu0 %v1328
    %1340 = vmatprep.subr.mxu0 0.0
    %1341 = vmatpush1.msra.mxu0 %v1329
    %1342 = vmatprep.subr.mxu0 0.0
    %1343 = vmatpush1.msra.mxu0 %v1330
    %1344 = vmatprep.subr.mxu0 0.0
    %1345 = vmatpush1.msra.mxu0 %v1331
    %1346 = vmatprep.subr.mxu0 0.0
    %1347 = vmatpush1.msra.mxu0 0.0
    %1348 = vmatprep.subr.mxu0 0.0
    %1349 = vmatpush1.msra.mxu0 0.0
    %1350 = vmatprep.subr.mxu0 0.0
    %1351 = vmatpush1.msra.mxu0 0.0
    %1352 = vmatprep.subr.mxu0 0.0
    %1353 = vmatpush1.msra.mxu0 0.0
    %1354 = vmatprep.subr.mxu0 0.0
    %1355 = vmatpush1.msra.mxu0 0.0
    %1356 = vmatprep.subr.mxu0 0.0
    %1357 = vmatpush1.msra.mxu0 0.0
    %1358 = vmatprep.subr.mxu0 0.0
    %1359 = vmatpush1.msra.mxu0 0.0
    %1360 = vmatprep.subr.mxu0 0.0
    %1361 = vmatpush1.msra.mxu0 0.0
    %1362 = vmatprep.subr.mxu0 0.0
    %1363 = vmatpush1.msra.mxu0 0.0
    %1364 = vmatprep.subr.mxu0 0.0
    %1365 = vmatpush1.msra.mxu0 0.0
    %1366 = vmatprep.subr.mxu0 0.0
    %1367 = vmatpush1.msra.mxu0 0.0
    %1368 = vmatprep.subr.mxu0 0.0
    %1369 = vmatpush1.msra.mxu0 0.0
    %1370 = vmatprep.subr.mxu0 0.0
    %1371 = vmatpush1.msra.mxu0 0.0
    %1372 = vmatprep.subr.mxu0 0.0
    %1373 = vmatpush1.msra.mxu0 0.0
    %1374 = vmatprep.subr.mxu0 0.0
    %1375 = vmatpush1.msra.mxu0 0.0
    %1376 = vmatprep.subr.mxu0 0.0
    %1377 = vmatpush1.msra.mxu0 0.0
    %1378 = vmatprep.subr.mxu0 0.0
    %1379 = vmatpush1.msra.mxu0 0.0
    %1380 = vmatprep.subr.mxu0 0.0
    %1381 = vmatpush1.msra.mxu0 0.0
    %1382 = vmatprep.subr.mxu0 0.0
    %1383 = vmatpush1.msra.mxu0 0.0
    %1384 = vmatprep.subr.mxu0 0.0
    %1385 = vmatpush1.msra.mxu0 0.0
    %1386 = vmatprep.subr.mxu0 0.0
    %1387 = vmatpush1.msra.mxu0 0.0
    %1388 = vmatprep.subr.mxu0 0.0
    %1389 = vmatpush1.msra.mxu0 0.0
    %1390 = vmatprep.subr.mxu0 0.0
    %1391 = vmatpush1.msra.mxu0 0.0
    %1392 = vmatprep.subr.mxu0 0.0
    %1393 = vmatpush1.msra.mxu0 0.0
    %1394 = vmatprep.subr.mxu0 0.0
    %1395 = vmatpush1.msra.mxu0 0.0
    %1396 = vmatprep.subr.mxu0 0.0
    %1397 = vmatpush1.msra.mxu0 0.0
    %1398 = vmatprep.subr.mxu0 0.0
    %1399 = vmatpush1.msra.mxu0 0.0
    %1400 = vmatprep.subr.mxu0 0.0
    %1401 = vmatpush1.msra.mxu0 0.0
    %1402 = vmatprep.mubr.f32.mxu0 0.0
    %1403 = vmatmul.mubr.f32.gmra.mrb[0].mxu0 %v1333
    %v1404 = vpop.f32.mrb[0].mxu0
    %v1405 = vadd.f32 0.0, %v1404
    %v1406 = vpop.f32.mrb[0].mxu0
    %1407 = vmatprep.mubr.f32.mxu0 0.0
    %1408 = vmatmul.mubr.f32.gmra.mrb[0].mxu0 %v1336
    %v1409 = vpop.f32.mrb[0].mxu0
    %v1410 = vadd.f32 0.0, %v1409
    %v1411 = vpop.f32.mrb[0].mxu0
    %1412 = vdwg.mxu0
    %v1413 = vld [vmem:[%s12] sm:$0xff]
    %v1414 = vld [vmem:[%s12 + $0x8] sm:$0xff]
    %v1415 = vld [vmem:[%s12 + $0x10] sm:$0xff]
    %v1416 = vld [vmem:[%s12 + $0x18] sm:$0xff]
    %v1417 = vld [vmem:[%s13] sm:$0x1]
    %v1418 = vmul.f32 %v1239, %v114
    %v1419 = vmul.f32 %v1239, %v115
    %v1420 = vmul.f32 %v1239, %v116
    %v1421 = vmul.f32 %v1239, %v117
    %v1422 = vmul.f32 %v1239, %v118
    %v1423 = vmul.f32 %v1239, %v119
    %v1424 = vmul.f32 %v1239, %v120
    %v1425 = vmul.f32 %v1239, %v121
    %v1426 = vmul.f32 %v1244, %v122
    %v1427 = vmul.f32 %v1244, %v123
    %v1428 = vmul.f32 %v1244, %v124
    %v1429 = vmul.f32 %v1244, %v125
    %v1430 = vmul.f32 %v1244, %v126
    %v1431 = vmul.f32 %v1244, %v127
    %v1432 = vmul.f32 %v1244, %v128
    %v1433 = vmul.f32 %v1244, %v129
    %v1435 = vsel %vm150, %v1418, 0
    %v1438 = vsel %vm150, %v1419, 0
    %v1441 = vsel %vm150, %v1420, 0
    %v1444 = vsel %vm150, %v1421, 0
    %v1447 = vsel %vm150, %v1422, 0
    %v1450 = vsel %vm150, %v1423, 0
    %v1453 = vsel %vm150, %v1424, 0
    %v1456 = vsel %vm150, %v1425, 0
    %v1459 = vsel %vm150, %v1426, 0
    %v1462 = vsel %vm150, %v1427, 0
    %v1465 = vsel %vm150, %v1428, 0
    %v1468 = vsel %vm150, %v1429, 0
    %v1471 = vsel %vm150, %v1430, 0
    %v1474 = vsel %vm150, %v1431, 0
    %v1477 = vsel %vm150, %v1432, 0
    %v1480 = vsel %vm150, %v1433, 0
    %v1483 = vsel %vm150, %v1319, 0
    %v1486 = vsel %vm150, %v1324, 0
    %1488 = vmatprep.subr.mxu0 0.0
    %1489 = vmatpush1.xpose.msra.mxu0 %v1483
    %1490 = vmatprep.subr.mxu0 0.0
    %1491 = vmatpush1.xpose.msra.mxu0 %v1486
    %1492 = vmatprep.subr.mxu0 0.0
    %1493 = vmatpush1.xpose.msra.mxu0 0.0
    %1494 = vmatprep.subr.mxu0 0.0
    %1495 = vmatpush1.xpose.msra.mxu0 0.0
    %1496 = vmatprep.subr.mxu0 0.0
    %1497 = vmatpush1.xpose.msra.mxu0 0.0
    %1498 = vmatprep.subr.mxu0 0.0
    %1499 = vmatpush1.xpose.msra.mxu0 0.0
    %1500 = vmatprep.subr.mxu0 0.0
    %1501 = vmatpush1.xpose.msra.mxu0 0.0
    %1502 = vmatprep.subr.mxu0 0.0
    %1503 = vmatpush1.xpose.msra.mxu0 0.0
    %1504 = vmatprep.subr.mxu0 0.0
    %1505 = vmatpush1.xpose.msra.mxu0 0.0
    %1506 = vmatprep.subr.mxu0 0.0
    %1507 = vmatpush1.xpose.msra.mxu0 0.0
    %1508 = vmatprep.subr.mxu0 0.0
    %1509 = vmatpush1.xpose.msra.mxu0 0.0
    %1510 = vmatprep.subr.mxu0 0.0
    %1511 = vmatpush1.xpose.msra.mxu0 0.0
    %1512 = vmatprep.subr.mxu0 0.0
    %1513 = vmatpush1.xpose.msra.mxu0 0.0
    %1514 = vmatprep.subr.mxu0 0.0
    %1515 = vmatpush1.xpose.msra.mxu0 0.0
    %1516 = vmatprep.subr.mxu0 0.0
    %1517 = vmatpush1.xpose.msra.mxu0 0.0
    %1518 = vmatprep.subr.mxu0 0.0
    %1519 = vmatpush1.xpose.msra.mxu0 0.0
    %1520 = vmatprep.subr.mxu0 0.0
    %1521 = vmatpush1.xpose.msra.mxu0 0.0
    %1522 = vmatprep.subr.mxu0 0.0
    %1523 = vmatpush1.xpose.msra.mxu0 0.0
    %1524 = vmatprep.subr.mxu0 0.0
    %1525 = vmatpush1.xpose.msra.mxu0 0.0
    %1526 = vmatprep.subr.mxu0 0.0
    %1527 = vmatpush1.xpose.msra.mxu0 0.0
    %1528 = vmatprep.subr.mxu0 0.0
    %1529 = vmatpush1.xpose.msra.mxu0 0.0
    %1530 = vmatprep.subr.mxu0 0.0
    %1531 = vmatpush1.xpose.msra.mxu0 0.0
    %1532 = vmatprep.subr.mxu0 0.0
    %1533 = vmatpush1.xpose.msra.mxu0 0.0
    %1534 = vmatprep.subr.mxu0 0.0
    %1535 = vmatpush1.xpose.msra.mxu0 0.0
    %1536 = vmatprep.subr.mxu0 0.0
    %1537 = vmatpush1.xpose.msra.mxu0 0.0
    %1538 = vmatprep.subr.mxu0 0.0
    %1539 = vmatpush1.xpose.msra.mxu0 0.0
    %1540 = vmatprep.subr.mxu0 0.0
    %1541 = vmatpush1.xpose.msra.mxu0 0.0
    %1542 = vmatprep.subr.mxu0 0.0
    %1543 = vmatpush1.xpose.msra.mxu0 0.0
    %1544 = vmatprep.subr.mxu0 0.0
    %1545 = vmatpush1.xpose.msra.mxu0 0.0
    %1546 = vmatprep.subr.mxu0 0.0
    %1547 = vmatpush1.xpose.msra.mxu0 0.0
    %1548 = vmatprep.subr.mxu0 0.0
    %1549 = vmatpush1.xpose.msra.mxu0 0.0
    %1550 = vmatprep.subr.mxu0 0.0
    %1551 = vmatpush1.xpose.msra.mxu0 0.0
    %1552 = vmatprep.mubr.f32.mxu0 0.0
    %1553 = vmatmul.mubr.f32.gmra.mrb[0].mxu0 %v1435
    %v1554 = vpop.f32.mrb[0].mxu0
    %v1555 = vadd.f32 %v98, %v1554
    %v1556 = vpop.f32.mrb[0].mxu0
    %1557 = vmatprep.mubr.f32.mxu0 0.0
    %1558 = vmatmul.mubr.f32.gmra.mrb[0].mxu0 %v1438
    %v1559 = vpop.f32.mrb[0].mxu0
    %v1560 = vadd.f32 %v99, %v1559
    %v1561 = vpop.f32.mrb[0].mxu0
    %1562 = vmatprep.mubr.f32.mxu0 0.0
    %1563 = vmatmul.mubr.f32.gmra.mrb[0].mxu0 %v1441
    %v1564 = vpop.f32.mrb[0].mxu0
    %v1565 = vadd.f32 %v100, %v1564
    %v1566 = vpop.f32.mrb[0].mxu0
    %1567 = vmatprep.mubr.f32.mxu0 0.0
    %1568 = vmatmul.mubr.f32.gmra.mrb[0].mxu0 %v1444
    %v1569 = vpop.f32.mrb[0].mxu0
    %v1570 = vadd.f32 %v101, %v1569
    %v1571 = vpop.f32.mrb[0].mxu0
    %1572 = vmatprep.mubr.f32.mxu0 0.0
    %1573 = vmatmul.mubr.f32.gmra.mrb[0].mxu0 %v1447
    %v1574 = vpop.f32.mrb[0].mxu0
    %v1575 = vadd.f32 %v102, %v1574
    %v1576 = vpop.f32.mrb[0].mxu0
    %1577 = vmatprep.mubr.f32.mxu0 0.0
    %1578 = vmatmul.mubr.f32.gmra.mrb[0].mxu0 %v1450
    %v1579 = vpop.f32.mrb[0].mxu0
    %v1580 = vadd.f32 %v103, %v1579
    %v1581 = vpop.f32.mrb[0].mxu0
    %1582 = vmatprep.mubr.f32.mxu0 0.0
    %1583 = vmatmul.mubr.f32.gmra.mrb[0].mxu0 %v1453
    %v1584 = vpop.f32.mrb[0].mxu0
    %v1585 = vadd.f32 %v104, %v1584
    %v1586 = vpop.f32.mrb[0].mxu0
    %1587 = vmatprep.mubr.f32.mxu0 0.0
    %1588 = vmatmul.mubr.f32.gmra.mrb[0].mxu0 %v1456
    %v1589 = vpop.f32.mrb[0].mxu0
    %v1590 = vadd.f32 %v105, %v1589
    %v1591 = vpop.f32.mrb[0].mxu0
    %1592 = vmatprep.mubr.f32.mxu0 0.0
    %1593 = vmatmul.mubr.f32.gmra.mrb[0].mxu0 %v1459
    %v1594 = vpop.f32.mrb[0].mxu0
    %v1595 = vadd.f32 %v106, %v1594
    %v1596 = vpop.f32.mrb[0].mxu0
    %1597 = vmatprep.mubr.f32.mxu0 0.0
    %1598 = vmatmul.mubr.f32.gmra.mrb[0].mxu0 %v1462
    %v1599 = vpop.f32.mrb[0].mxu0
    %v1600 = vadd.f32 %v107, %v1599
    %v1601 = vpop.f32.mrb[0].mxu0
    %1602 = vmatprep.mubr.f32.mxu0 0.0
    %1603 = vmatmul.mubr.f32.gmra.mrb[0].mxu0 %v1465
    %v1604 = vpop.f32.mrb[0].mxu0
    %v1605 = vadd.f32 %v108, %v1604
    %v1606 = vpop.f32.mrb[0].mxu0
    %1607 = vmatprep.mubr.f32.mxu0 0.0
    %1608 = vmatmul.mubr.f32.gmra.mrb[0].mxu0 %v1468
    %v1609 = vpop.f32.mrb[0].mxu0
    %v1610 = vadd.f32 %v109, %v1609
    %v1611 = vpop.f32.mrb[0].mxu0
    %1612 = vmatprep.mubr.f32.mxu0 0.0
    %1613 = vmatmul.mubr.f32.gmra.mrb[0].mxu0 %v1471
    %v1614 = vpop.f32.mrb[0].mxu0
    %v1615 = vadd.f32 %v110, %v1614
    %v1616 = vpop.f32.mrb[0].mxu0
    %1617 = vmatprep.mubr.f32.mxu0 0.0
    %1618 = vmatmul.mubr.f32.gmra.mrb[0].mxu0 %v1474
    %v1619 = vpop.f32.mrb[0].mxu0
    %v1620 = vadd.f32 %v111, %v1619
    %v1621 = vpop.f32.mrb[0].mxu0
    %1622 = vmatprep.mubr.f32.mxu0 0.0
    %1623 = vmatmul.mubr.f32.gmra.mrb[0].mxu0 %v1477
    %v1624 = vpop.f32.mrb[0].mxu0
    %v1625 = vadd.f32 %v112, %v1624
    %v1626 = vpop.f32.mrb[0].mxu0
    %1627 = vmatprep.mubr.f32.mxu0 0.0
    %1628 = vmatmul.mubr.f32.gmra.mrb[0].mxu0 %v1480
    %v1629 = vpop.f32.mrb[0].mxu0
    %v1630 = vadd.f32 %v113, %v1629
    %v1631 = vpop.f32.mrb[0].mxu0
    %1632 = vdwg.mxu0
    %v1633 = vsel %vm612, %v1555, -inf
    %1634 = vmax.xlane.f32.xlu0 %v1633
    %v1635 = vpop.xlane.xlu0 %1634
    %v1636 = vsel %vm612, %v1560, -inf
    %1637 = vmax.xlane.f32.xlu0 %v1636
    %v1638 = vpop.xlane.xlu0 %1637
    %v1639 = vsel %vm612, %v1565, -inf
    %1640 = vmax.xlane.f32.xlu0 %v1639
    %v1641 = vpop.xlane.xlu0 %1640
    %v1642 = vsel %vm612, %v1570, -inf
    %1643 = vmax.xlane.f32.xlu0 %v1642
    %v1644 = vpop.xlane.xlu0 %1643
    %v1645 = vsel %vm612, %v1575, -inf
    %1646 = vmax.xlane.f32.xlu0 %v1645
    %v1647 = vpop.xlane.xlu0 %1646
    %v1648 = vsel %vm612, %v1580, -inf
    %1649 = vmax.xlane.f32.xlu0 %v1648
    %v1650 = vpop.xlane.xlu0 %1649
    %v1651 = vsel %vm612, %v1585, -inf
    %1652 = vmax.xlane.f32.xlu0 %v1651
    %v1653 = vpop.xlane.xlu0 %1652
    %v1654 = vsel %vm612, %v1590, -inf
    %1655 = vmax.xlane.f32.xlu0 %v1654
    %v1656 = vpop.xlane.xlu0 %1655
    %v1657 = vsel %vm612, %v1595, -inf
    %1658 = vmax.xlane.f32.xlu0 %v1657
    %v1659 = vpop.xlane.xlu0 %1658
    %v1660 = vsel %vm612, %v1600, -inf
    %1661 = vmax.xlane.f32.xlu0 %v1660
    %v1662 = vpop.xlane.xlu0 %1661
    %v1663 = vsel %vm612, %v1605, -inf
    %1664 = vmax.xlane.f32.xlu0 %v1663
    %v1665 = vpop.xlane.xlu0 %1664
    %v1666 = vsel %vm612, %v1610, -inf
    %1667 = vmax.xlane.f32.xlu0 %v1666
    %v1668 = vpop.xlane.xlu0 %1667
    %v1669 = vsel %vm612, %v1615, -inf
    %1670 = vmax.xlane.f32.xlu0 %v1669
    %v1671 = vpop.xlane.xlu0 %1670
    %v1672 = vsel %vm612, %v1620, -inf
    %1673 = vmax.xlane.f32.xlu0 %v1672
    %v1674 = vpop.xlane.xlu0 %1673
    %v1675 = vsel %vm612, %v1625, -inf
    %1676 = vmax.xlane.f32.xlu0 %v1675
    %v1677 = vpop.xlane.xlu0 %1676
    %v1678 = vsel %vm612, %v1630, -inf
    %1679 = vmax.xlane.f32.xlu0 %v1678
    %v1680 = vpop.xlane.xlu0 %1679
    %v1681 = vsub.f32 %v1555, %v1635
    %v1682 = vsub.f32 %v1560, %v1638
    %v1683 = vsub.f32 %v1565, %v1641
    %v1684 = vsub.f32 %v1570, %v1644
    %v1685 = vsub.f32 %v1575, %v1647
    %v1686 = vsub.f32 %v1580, %v1650
    %v1687 = vsub.f32 %v1585, %v1653
    %v1688 = vsub.f32 %v1590, %v1656
    %v1689 = vsub.f32 %v1595, %v1659
    %v1690 = vsub.f32 %v1600, %v1662
    %v1691 = vsub.f32 %v1605, %v1665
    %v1692 = vsub.f32 %v1610, %v1668
    %v1693 = vsub.f32 %v1615, %v1671
    %v1694 = vsub.f32 %v1620, %v1674
    %v1695 = vsub.f32 %v1625, %v1677
    %v1696 = vsub.f32 %v1630, %v1680
    %v1697 = vmul.f32 %v1681, 1.442695
    %v1698 = vpow.pop %v1697
    %v1699 = vmul.f32 %v1682, 1.442695
    %v1700 = vpow.pop %v1699
    %v1701 = vmul.f32 %v1683, 1.442695
    %v1702 = vpow.pop %v1701
    %v1703 = vmul.f32 %v1684, 1.442695
    %v1704 = vpow.pop %v1703
    %v1705 = vmul.f32 %v1685, 1.442695
    %v1706 = vpow.pop %v1705
    %v1707 = vmul.f32 %v1686, 1.442695
    %v1708 = vpow.pop %v1707
    %v1709 = vmul.f32 %v1687, 1.442695
    %v1710 = vpow.pop %v1709
    %v1711 = vmul.f32 %v1688, 1.442695
    %v1712 = vpow.pop %v1711
    %v1713 = vmul.f32 %v1689, 1.442695
    %v1714 = vpow.pop %v1713
    %v1715 = vmul.f32 %v1690, 1.442695
    %v1716 = vpow.pop %v1715
    %v1717 = vmul.f32 %v1691, 1.442695
    %v1718 = vpow.pop %v1717
    %v1719 = vmul.f32 %v1692, 1.442695
    %v1720 = vpow.pop %v1719
    %v1721 = vmul.f32 %v1693, 1.442695
    %v1722 = vpow.pop %v1721
    %v1723 = vmul.f32 %v1694, 1.442695
    %v1724 = vpow.pop %v1723
    %v1725 = vmul.f32 %v1695, 1.442695
    %v1726 = vpow.pop %v1725
    %v1727 = vmul.f32 %v1696, 1.442695
    %v1728 = vpow.pop %v1727
    %v1729 = vsel %vm612, %v1698, 0.0
    %1730 = vadd.xlane.f32.xlu0 %v1729
    %v1731 = vpop.xlane.xlu0 %1730
    %v1732 = vsel %vm612, %v1700, 0.0
    %1733 = vadd.xlane.f32.xlu0 %v1732
    %v1734 = vpop.xlane.xlu0 %1733
    %v1735 = vsel %vm612, %v1702, 0.0
    %1736 = vadd.xlane.f32.xlu0 %v1735
    %v1737 = vpop.xlane.xlu0 %1736
    %v1738 = vsel %vm612, %v1704, 0.0
    %1739 = vadd.xlane.f32.xlu0 %v1738
    %v1740 = vpop.xlane.xlu0 %1739
    %v1741 = vsel %vm612, %v1706, 0.0
    %1742 = vadd.xlane.f32.xlu0 %v1741
    %v1743 = vpop.xlane.xlu0 %1742
    %v1744 = vsel %vm612, %v1708, 0.0
    %1745 = vadd.xlane.f32.xlu0 %v1744
    %v1746 = vpop.xlane.xlu0 %1745
    %v1747 = vsel %vm612, %v1710, 0.0
    %1748 = vadd.xlane.f32.xlu0 %v1747
    %v1749 = vpop.xlane.xlu0 %1748
    %v1750 = vsel %vm612, %v1712, 0.0
    %1751 = vadd.xlane.f32.xlu0 %v1750
    %v1752 = vpop.xlane.xlu0 %1751
    %v1753 = vsel %vm612, %v1714, 0.0
    %1754 = vadd.xlane.f32.xlu0 %v1753
    %v1755 = vpop.xlane.xlu0 %1754
    %v1756 = vsel %vm612, %v1716, 0.0
    %1757 = vadd.xlane.f32.xlu0 %v1756
    %v1758 = vpop.xlane.xlu0 %1757
    %v1759 = vsel %vm612, %v1718, 0.0
    %1760 = vadd.xlane.f32.xlu0 %v1759
    %v1761 = vpop.xlane.xlu0 %1760
    %v1762 = vsel %vm612, %v1720, 0.0
    %1763 = vadd.xlane.f32.xlu0 %v1762
    %v1764 = vpop.xlane.xlu0 %1763
    %v1765 = vsel %vm612, %v1722, 0.0
    %1766 = vadd.xlane.f32.xlu0 %v1765
    %v1767 = vpop.xlane.xlu0 %1766
    %v1768 = vsel %vm612, %v1724, 0.0
    %1769 = vadd.xlane.f32.xlu0 %v1768
    %v1770 = vpop.xlane.xlu0 %1769
    %v1771 = vsel %vm612, %v1726, 0.0
    %1772 = vadd.xlane.f32.xlu0 %v1771
    %v1773 = vpop.xlane.xlu0 %1772
    %v1774 = vsel %vm612, %v1728, 0.0
    %1775 = vadd.xlane.f32.xlu0 %v1774
    %v1776 = vpop.xlane.xlu0 %1775
    %v1777 = vrcp.pop %v1731
    %v1778 = vrcp.pop %v1734
    %v1779 = vrcp.pop %v1737
    %v1780 = vrcp.pop %v1740
    %v1781 = vrcp.pop %v1743
    %v1782 = vrcp.pop %v1746
    %v1783 = vrcp.pop %v1749
    %v1784 = vrcp.pop %v1752
    %v1785 = vrcp.pop %v1755
    %v1786 = vrcp.pop %v1758
    %v1787 = vrcp.pop %v1761
    %v1788 = vrcp.pop %v1764
    %v1789 = vrcp.pop %v1767
    %v1790 = vrcp.pop %v1770
    %v1791 = vrcp.pop %v1773
    %v1792 = vrcp.pop %v1776
    %v1793 = vmul.f32 %v1698, %v1777
    %v1794 = vmul.f32 %v1700, %v1778
    %v1795 = vmul.f32 %v1702, %v1779
    %v1796 = vmul.f32 %v1704, %v1780
    %v1797 = vmul.f32 %v1706, %v1781
    %v1798 = vmul.f32 %v1708, %v1782
    %v1799 = vmul.f32 %v1710, %v1783
    %v1800 = vmul.f32 %v1712, %v1784
    %v1801 = vmul.f32 %v1714, %v1785
    %v1802 = vmul.f32 %v1716, %v1786
    %v1803 = vmul.f32 %v1718, %v1787
    %v1804 = vmul.f32 %v1720, %v1788
    %v1805 = vmul.f32 %v1722, %v1789
    %v1806 = vmul.f32 %v1724, %v1790
    %v1807 = vmul.f32 %v1726, %v1791
    %v1808 = vmul.f32 %v1728, %v1792
    %v1810 = vsel %vm612, %v1793, 0
    %v1813 = vsel %vm612, %v1794, 0
    %v1816 = vsel %vm612, %v1795, 0
    %v1819 = vsel %vm612, %v1796, 0
    %v1822 = vsel %vm612, %v1797, 0
    %v1825 = vsel %vm612, %v1798, 0
    %v1828 = vsel %vm612, %v1799, 0
    %v1831 = vsel %vm612, %v1800, 0
    %v1834 = vsel %vm612, %v1801, 0
    %v1837 = vsel %vm612, %v1802, 0
    %v1840 = vsel %vm612, %v1803, 0
    %v1843 = vsel %vm612, %v1804, 0
    %v1846 = vsel %vm612, %v1805, 0
    %v1849 = vsel %vm612, %v1806, 0
    %v1852 = vsel %vm612, %v1807, 0
    %v1855 = vsel %vm612, %v1808, 0
    %1857 = vmatprep.subr.mxu0 0.0
    %1858 = vmatpush1.msra.mxu0 %v1405
    %1859 = vmatprep.subr.mxu0 0.0
    %1860 = vmatpush1.msra.mxu0 %v1410
    %1861 = vmatprep.subr.mxu0 0.0
    %1862 = vmatpush1.msra.mxu0 0.0
    %1863 = vmatprep.subr.mxu0 0.0
    %1864 = vmatpush1.msra.mxu0 0.0
    %1865 = vmatprep.subr.mxu0 0.0
    %1866 = vmatpush1.msra.mxu0 0.0
    %1867 = vmatprep.subr.mxu0 0.0
    %1868 = vmatpush1.msra.mxu0 0.0
    %1869 = vmatprep.subr.mxu0 0.0
    %1870 = vmatpush1.msra.mxu0 0.0
    %1871 = vmatprep.subr.mxu0 0.0
    %1872 = vmatpush1.msra.mxu0 0.0
    %1873 = vmatprep.subr.mxu0 0.0
    %1874 = vmatpush1.msra.mxu0 0.0
    %1875 = vmatprep.subr.mxu0 0.0
    %1876 = vmatpush1.msra.mxu0 0.0
    %1877 = vmatprep.subr.mxu0 0.0
    %1878 = vmatpush1.msra.mxu0 0.0
    %1879 = vmatprep.subr.mxu0 0.0
    %1880 = vmatpush1.msra.mxu0 0.0
    %1881 = vmatprep.subr.mxu0 0.0
    %1882 = vmatpush1.msra.mxu0 0.0
    %1883 = vmatprep.subr.mxu0 0.0
    %1884 = vmatpush1.msra.mxu0 0.0
    %1885 = vmatprep.subr.mxu0 0.0
    %1886 = vmatpush1.msra.mxu0 0.0
    %1887 = vmatprep.subr.mxu0 0.0
    %1888 = vmatpush1.msra.mxu0 0.0
    %1889 = vmatprep.subr.mxu0 0.0
    %1890 = vmatpush1.msra.mxu0 0.0
    %1891 = vmatprep.subr.mxu0 0.0
    %1892 = vmatpush1.msra.mxu0 0.0
    %1893 = vmatprep.subr.mxu0 0.0
    %1894 = vmatpush1.msra.mxu0 0.0
    %1895 = vmatprep.subr.mxu0 0.0
    %1896 = vmatpush1.msra.mxu0 0.0
    %1897 = vmatprep.subr.mxu0 0.0
    %1898 = vmatpush1.msra.mxu0 0.0
    %1899 = vmatprep.subr.mxu0 0.0
    %1900 = vmatpush1.msra.mxu0 0.0
    %1901 = vmatprep.subr.mxu0 0.0
    %1902 = vmatpush1.msra.mxu0 0.0
    %1903 = vmatprep.subr.mxu0 0.0
    %1904 = vmatpush1.msra.mxu0 0.0
    %1905 = vmatprep.subr.mxu0 0.0
    %1906 = vmatpush1.msra.mxu0 0.0
    %1907 = vmatprep.subr.mxu0 0.0
    %1908 = vmatpush1.msra.mxu0 0.0
    %1909 = vmatprep.subr.mxu0 0.0
    %1910 = vmatpush1.msra.mxu0 0.0
    %1911 = vmatprep.subr.mxu0 0.0
    %1912 = vmatpush1.msra.mxu0 0.0
    %1913 = vmatprep.subr.mxu0 0.0
    %1914 = vmatpush1.msra.mxu0 0.0
    %1915 = vmatprep.subr.mxu0 0.0
    %1916 = vmatpush1.msra.mxu0 0.0
    %1917 = vmatprep.subr.mxu0 0.0
    %1918 = vmatpush1.msra.mxu0 0.0
    %1919 = vmatprep.subr.mxu0 0.0
    %1920 = vmatpush1.msra.mxu0 0.0
    %1921 = vmatprep.mubr.f32.mxu0 0.0
    %1922 = vmatmul.mubr.f32.gmra.mrb[0].mxu0 %v1810
    %v1923 = vpop.f32.mrb[0].mxu0
    %v1924 = vadd.f32 0.0, %v1923
    %v1925 = vpop.f32.mrb[0].mxu0
    %1926 = vmatprep.mubr.f32.mxu0 0.0
    %1927 = vmatmul.mubr.f32.gmra.mrb[0].mxu0 %v1813
    %v1928 = vpop.f32.mrb[0].mxu0
    %v1929 = vadd.f32 0.0, %v1928
    %v1930 = vpop.f32.mrb[0].mxu0
    %1931 = vmatprep.mubr.f32.mxu0 0.0
    %1932 = vmatmul.mubr.f32.gmra.mrb[0].mxu0 %v1816
    %v1933 = vpop.f32.mrb[0].mxu0
    %v1934 = vadd.f32 0.0, %v1933
    %v1935 = vpop.f32.mrb[0].mxu0
    %1936 = vmatprep.mubr.f32.mxu0 0.0
    %1937 = vmatmul.mubr.f32.gmra.mrb[0].mxu0 %v1819
    %v1938 = vpop.f32.mrb[0].mxu0
    %v1939 = vadd.f32 0.0, %v1938
    %v1940 = vpop.f32.mrb[0].mxu0
    %1941 = vmatprep.mubr.f32.mxu0 0.0
    %1942 = vmatmul.mubr.f32.gmra.mrb[0].mxu0 %v1822
    %v1943 = vpop.f32.mrb[0].mxu0
    %v1944 = vadd.f32 0.0, %v1943
    %v1945 = vpop.f32.mrb[0].mxu0
    %1946 = vmatprep.mubr.f32.mxu0 0.0
    %1947 = vmatmul.mubr.f32.gmra.mrb[0].mxu0 %v1825
    %v1948 = vpop.f32.mrb[0].mxu0
    %v1949 = vadd.f32 0.0, %v1948
    %v1950 = vpop.f32.mrb[0].mxu0
    %1951 = vmatprep.mubr.f32.mxu0 0.0
    %1952 = vmatmul.mubr.f32.gmra.mrb[0].mxu0 %v1828
    %v1953 = vpop.f32.mrb[0].mxu0
    %v1954 = vadd.f32 0.0, %v1953
    %v1955 = vpop.f32.mrb[0].mxu0
    %1956 = vmatprep.mubr.f32.mxu0 0.0
    %1957 = vmatmul.mubr.f32.gmra.mrb[0].mxu0 %v1831
    %v1958 = vpop.f32.mrb[0].mxu0
    %v1959 = vadd.f32 0.0, %v1958
    %v1960 = vpop.f32.mrb[0].mxu0
    %1961 = vmatprep.mubr.f32.mxu0 0.0
    %1962 = vmatmul.mubr.f32.gmra.mrb[0].mxu0 %v1834
    %v1963 = vpop.f32.mrb[0].mxu0
    %v1964 = vadd.f32 0.0, %v1963
    %v1965 = vpop.f32.mrb[0].mxu0
    %1966 = vmatprep.mubr.f32.mxu0 0.0
    %1967 = vmatmul.mubr.f32.gmra.mrb[0].mxu0 %v1837
    %v1968 = vpop.f32.mrb[0].mxu0
    %v1969 = vadd.f32 0.0, %v1968
    %v1970 = vpop.f32.mrb[0].mxu0
    %1971 = vmatprep.mubr.f32.mxu0 0.0
    %1972 = vmatmul.mubr.f32.gmra.mrb[0].mxu0 %v1840
    %v1973 = vpop.f32.mrb[0].mxu0
    %v1974 = vadd.f32 0.0, %v1973
    %v1975 = vpop.f32.mrb[0].mxu0
    %1976 = vmatprep.mubr.f32.mxu0 0.0
    %1977 = vmatmul.mubr.f32.gmra.mrb[0].mxu0 %v1843
    %v1978 = vpop.f32.mrb[0].mxu0
    %v1979 = vadd.f32 0.0, %v1978
    %v1980 = vpop.f32.mrb[0].mxu0
    %1981 = vmatprep.mubr.f32.mxu0 0.0
    %1982 = vmatmul.mubr.f32.gmra.mrb[0].mxu0 %v1846
    %v1983 = vpop.f32.mrb[0].mxu0
    %v1984 = vadd.f32 0.0, %v1983
    %v1985 = vpop.f32.mrb[0].mxu0
    %1986 = vmatprep.mubr.f32.mxu0 0.0
    %1987 = vmatmul.mubr.f32.gmra.mrb[0].mxu0 %v1849
    %v1988 = vpop.f32.mrb[0].mxu0
    %v1989 = vadd.f32 0.0, %v1988
    %v1990 = vpop.f32.mrb[0].mxu0
    %1991 = vmatprep.mubr.f32.mxu0 0.0
    %1992 = vmatmul.mubr.f32.gmra.mrb[0].mxu0 %v1852
    %v1993 = vpop.f32.mrb[0].mxu0
    %v1994 = vadd.f32 0.0, %v1993
    %v1995 = vpop.f32.mrb[0].mxu0
    %1996 = vmatprep.mubr.f32.mxu0 0.0
    %1997 = vmatmul.mubr.f32.gmra.mrb[0].mxu0 %v1855
    %v1998 = vpop.f32.mrb[0].mxu0
    %v1999 = vadd.f32 0.0, %v1998
    %v2000 = vpop.f32.mrb[0].mxu0
    %2001 = vdwg.mxu0
    %v2002 = vmul.f32 %v1924, %v130
    %v2003 = vmul.f32 %v1929, %v131
    %v2004 = vmul.f32 %v1934, %v132
    %v2005 = vmul.f32 %v1939, %v133
    %v2006 = vmul.f32 %v1944, %v134
    %v2007 = vmul.f32 %v1949, %v135
    %v2008 = vmul.f32 %v1954, %v136
    %v2009 = vmul.f32 %v1959, %v137
    %v2010 = vmul.f32 %v1964, %v138
    %v2011 = vmul.f32 %v1969, %v139
    %v2012 = vmul.f32 %v1974, %v140
    %v2013 = vmul.f32 %v1979, %v141
    %v2014 = vmul.f32 %v1984, %v142
    %v2015 = vmul.f32 %v1989, %v143
    %v2016 = vmul.f32 %v1994, %v144
    %v2017 = vmul.f32 %v1999, %v145
    %v2018 = vsel %vm150, %v2002, 0.0
    %v2019 = vsel %vm150, %v2003, 0.0
    %v2020 = vadd.f32 %v2018, %v2019
    %v2021 = vsel %vm150, %v2004, 0.0
    %v2022 = vadd.f32 %v2020, %v2021
    %v2023 = vsel %vm150, %v2005, 0.0
    %v2024 = vadd.f32 %v2022, %v2023
    %v2025 = vsel %vm150, %v2006, 0.0
    %v2026 = vadd.f32 %v2024, %v2025
    %v2027 = vsel %vm150, %v2007, 0.0
    %v2028 = vadd.f32 %v2026, %v2027
    %v2029 = vsel %vm150, %v2008, 0.0
    %v2030 = vadd.f32 %v2028, %v2029
    %v2031 = vsel %vm150, %v2009, 0.0
    %v2032 = vadd.f32 %v2030, %v2031
    %v2033 = vsel %vm150, %v2010, 0.0
    %v2034 = vsel %vm150, %v2011, 0.0
    %v2035 = vadd.f32 %v2033, %v2034
    %v2036 = vsel %vm150, %v2012, 0.0
    %v2037 = vadd.f32 %v2035, %v2036
    %v2038 = vsel %vm150, %v2013, 0.0
    %v2039 = vadd.f32 %v2037, %v2038
    %v2040 = vsel %vm150, %v2014, 0.0
    %v2041 = vadd.f32 %v2039, %v2040
    %v2042 = vsel %vm150, %v2015, 0.0
    %v2043 = vadd.f32 %v2041, %v2042
    %v2044 = vsel %vm150, %v2016, 0.0
    %v2045 = vadd.f32 %v2043, %v2044
    %v2046 = vsel %vm150, %v2017, 0.0
    %v2047 = vadd.f32 %v2045, %v2046
    %v2049 = vlaneseq
    %v2050 = vshrl.u32 %v2049, 7
    %v2051 = vsub.s32 0, %v2050
    %v2052 = vrot.slane %v1417, %v2051
    %v2055 = vsel %vm150, %v2032, 0
    %v2058 = vsel %vm150, %v2047, 0
    %2060 = vmatprep.subr.mxu0 0.0
    %2061 = vmatpush1.msra.mxu0 %v1413
    %2062 = vmatprep.subr.mxu0 0.0
    %2063 = vmatpush1.msra.mxu0 %v1414
    %2064 = vmatprep.subr.mxu0 0.0
    %2065 = vmatpush1.msra.mxu0 %v1415
    %2066 = vmatprep.subr.mxu0 0.0
    %2067 = vmatpush1.msra.mxu0 %v1416
    %2068 = vmatprep.subr.mxu0 0.0
    %2069 = vmatpush1.msra.mxu0 0.0
    %2070 = vmatprep.subr.mxu0 0.0
    %2071 = vmatpush1.msra.mxu0 0.0
    %2072 = vmatprep.subr.mxu0 0.0
    %2073 = vmatpush1.msra.mxu0 0.0
    %2074 = vmatprep.subr.mxu0 0.0
    %2075 = vmatpush1.msra.mxu0 0.0
    %2076 = vmatprep.subr.mxu0 0.0
    %2077 = vmatpush1.msra.mxu0 0.0
    %2078 = vmatprep.subr.mxu0 0.0
    %2079 = vmatpush1.msra.mxu0 0.0
    %2080 = vmatprep.subr.mxu0 0.0
    %2081 = vmatpush1.msra.mxu0 0.0
    %2082 = vmatprep.subr.mxu0 0.0
    %2083 = vmatpush1.msra.mxu0 0.0
    %2084 = vmatprep.subr.mxu0 0.0
    %2085 = vmatpush1.msra.mxu0 0.0
    %2086 = vmatprep.subr.mxu0 0.0
    %2087 = vmatpush1.msra.mxu0 0.0
    %2088 = vmatprep.subr.mxu0 0.0
    %2089 = vmatpush1.msra.mxu0 0.0
    %2090 = vmatprep.subr.mxu0 0.0
    %2091 = vmatpush1.msra.mxu0 0.0
    %2092 = vmatprep.subr.mxu0 0.0
    %2093 = vmatpush1.msra.mxu0 0.0
    %2094 = vmatprep.subr.mxu0 0.0
    %2095 = vmatpush1.msra.mxu0 0.0
    %2096 = vmatprep.subr.mxu0 0.0
    %2097 = vmatpush1.msra.mxu0 0.0
    %2098 = vmatprep.subr.mxu0 0.0
    %2099 = vmatpush1.msra.mxu0 0.0
    %2100 = vmatprep.subr.mxu0 0.0
    %2101 = vmatpush1.msra.mxu0 0.0
    %2102 = vmatprep.subr.mxu0 0.0
    %2103 = vmatpush1.msra.mxu0 0.0
    %2104 = vmatprep.subr.mxu0 0.0
    %2105 = vmatpush1.msra.mxu0 0.0
    %2106 = vmatprep.subr.mxu0 0.0
    %2107 = vmatpush1.msra.mxu0 0.0
    %2108 = vmatprep.subr.mxu0 0.0
    %2109 = vmatpush1.msra.mxu0 0.0
    %2110 = vmatprep.subr.mxu0 0.0
    %2111 = vmatpush1.msra.mxu0 0.0
    %2112 = vmatprep.subr.mxu0 0.0
    %2113 = vmatpush1.msra.mxu0 0.0
    %2114 = vmatprep.subr.mxu0 0.0
    %2115 = vmatpush1.msra.mxu0 0.0
    %2116 = vmatprep.subr.mxu0 0.0
    %2117 = vmatpush1.msra.mxu0 0.0
    %2118 = vmatprep.subr.mxu0 0.0
    %2119 = vmatpush1.msra.mxu0 0.0
    %2120 = vmatprep.subr.mxu0 0.0
    %2121 = vmatpush1.msra.mxu0 0.0
    %2122 = vmatprep.subr.mxu0 0.0
    %2123 = vmatpush1.msra.mxu0 0.0
    %2124 = vmatprep.mubr.f32.mxu0 0.0
    %2125 = vmatmul.mubr.f32.gmra.mrb[0].mxu0 %v2055
    %v2126 = vpop.f32.mrb[0].mxu0
    %v2127 = vadd.f32 %v2052, %v2126
    %v2128 = vpop.f32.mrb[0].mxu0
    %2129 = vmatprep.mubr.f32.mxu0 0.0
    %2130 = vmatmul.mubr.f32.gmra.mrb[0].mxu0 %v2058
    %v2131 = vpop.f32.mrb[0].mxu0
    %v2132 = vadd.f32 %v2052, %v2131
    %v2133 = vpop.f32.mrb[0].mxu0
    %2134 = vdwg.mxu0
    %v2135 = vadd.f32 %v2127, %v1160
    %v2136 = vadd.f32 %v2132, %v1161
    %v2137 = vld [vmem:[%s14] sm:$0x1]
    %v2138 = vld [vmem:[%s15] sm:$0x1]
    %v2139 = vsel %vm150, %v2135, 0.0
    %2140 = vadd.xlane.f32.xlu0 %v2139
    %v2141 = vpop.xlane.xlu0 %2140
    %v2142 = vsel %vm150, %v2136, 0.0
    %2143 = vadd.xlane.f32.xlu0 %v2142
    %v2144 = vpop.xlane.xlu0 %2143
    %v2145 = vmul.f32 %v2141, %v1125
    %v2146 = vmul.f32 %v2144, %v1125
    %v2147 = vsub.f32 %v2135, %v2145
    %v2148 = vsub.f32 %v2136, %v2146
    %v2149 = vmul.f32 %v2147, %v2147
    %v2150 = vmul.f32 %v2148, %v2148
    %v2151 = vsel %vm150, %v2149, 0.0
    %2152 = vadd.xlane.f32.xlu0 %v2151
    %v2153 = vpop.xlane.xlu0 %2152
    %v2154 = vsel %vm150, %v2150, 0.0
    %2155 = vadd.xlane.f32.xlu0 %v2154
    %v2156 = vpop.xlane.xlu0 %2155
    %v2157 = vmul.f32 %v2153, %v1125
    %v2158 = vmul.f32 %v2156, %v1125
    %v2159 = vadd.f32 %v2157, 1e-05
    %v2160 = vadd.f32 %v2158, 1e-05
    %v2161 = vrsqrt.pop %v2159
    %v2162 = vrsqrt.pop %v2160
    %v2163 = vmul.f32 %v2147, %v2161
    %v2164 = vmul.f32 %v2148, %v2162
    %v2166 = vlaneseq
    %v2167 = vshrl.u32 %v2166, 7
    %v2168 = vsub.s32 0, %v2167
    %v2169 = vrot.slane %v2137, %v2168
    %v2171 = vmul.f32 %v2163, %v2169
    %v2172 = vmul.f32 %v2164, %v2169
    %v2174 = vlaneseq
    %v2175 = vshrl.u32 %v2174, 7
    %v2176 = vsub.s32 0, %v2175
    %v2177 = vrot.slane %v2138, %v2176
    %v2179 = vadd.f32 %v2171, %v2177
    %v2180 = vadd.f32 %v2172, %v2177
    %v2181 = vld [vmem:[%s16] sm:$0xff]
    %v2182 = vld [vmem:[%s16 + $0x8] sm:$0xff]
    %v2183 = vld [vmem:[%s16 + $0x10] sm:$0xff]
    %v2184 = vld [vmem:[%s16 + $0x18] sm:$0xff]
    %v2185 = vld [vmem:[%s17] sm:$0x1]
    %v2187 = vlaneseq
    %v2188 = vshrl.u32 %v2187, 7
    %v2189 = vsub.s32 0, %v2188
    %v2190 = vrot.slane %v2185, %v2189
    %v2193 = vsel %vm150, %v2179, 0
    %v2196 = vsel %vm150, %v2180, 0
    %2198 = vmatprep.subr.mxu0 0.0
    %2199 = vmatpush1.msra.mxu0 %v2181
    %2200 = vmatprep.subr.mxu0 0.0
    %2201 = vmatpush1.msra.mxu0 %v2182
    %2202 = vmatprep.subr.mxu0 0.0
    %2203 = vmatpush1.msra.mxu0 %v2183
    %2204 = vmatprep.subr.mxu0 0.0
    %2205 = vmatpush1.msra.mxu0 %v2184
    %2206 = vmatprep.subr.mxu0 0.0
    %2207 = vmatpush1.msra.mxu0 0.0
    %2208 = vmatprep.subr.mxu0 0.0
    %2209 = vmatpush1.msra.mxu0 0.0
    %2210 = vmatprep.subr.mxu0 0.0
    %2211 = vmatpush1.msra.mxu0 0.0
    %2212 = vmatprep.subr.mxu0 0.0
    %2213 = vmatpush1.msra.mxu0 0.0
    %2214 = vmatprep.subr.mxu0 0.0
    %2215 = vmatpush1.msra.mxu0 0.0
    %2216 = vmatprep.subr.mxu0 0.0
    %2217 = vmatpush1.msra.mxu0 0.0
    %2218 = vmatprep.subr.mxu0 0.0
    %2219 = vmatpush1.msra.mxu0 0.0
    %2220 = vmatprep.subr.mxu0 0.0
    %2221 = vmatpush1.msra.mxu0 0.0
    %2222 = vmatprep.subr.mxu0 0.0
    %2223 = vmatpush1.msra.mxu0 0.0
    %2224 = vmatprep.subr.mxu0 0.0
    %2225 = vmatpush1.msra.mxu0 0.0
    %2226 = vmatprep.subr.mxu0 0.0
    %2227 = vmatpush1.msra.mxu0 0.0
    %2228 = vmatprep.subr.mxu0 0.0
    %2229 = vmatpush1.msra.mxu0 0.0
    %2230 = vmatprep.subr.mxu0 0.0
    %2231 = vmatpush1.msra.mxu0 0.0
    %2232 = vmatprep.subr.mxu0 0.0
    %2233 = vmatpush1.msra.mxu0 0.0
    %2234 = vmatprep.subr.mxu0 0.0
    %2235 = vmatpush1.msra.mxu0 0.0
    %2236 = vmatprep.subr.mxu0 0.0
    %2237 = vmatpush1.msra.mxu0 0.0
    %2238 = vmatprep.subr.mxu0 0.0
    %2239 = vmatpush1.msra.mxu0 0.0
    %2240 = vmatprep.subr.mxu0 0.0
    %2241 = vmatpush1.msra.mxu0 0.0
    %2242 = vmatprep.subr.mxu0 0.0
    %2243 = vmatpush1.msra.mxu0 0.0
    %2244 = vmatprep.subr.mxu0 0.0
    %2245 = vmatpush1.msra.mxu0 0.0
    %2246 = vmatprep.subr.mxu0 0.0
    %2247 = vmatpush1.msra.mxu0 0.0
    %2248 = vmatprep.subr.mxu0 0.0
    %2249 = vmatpush1.msra.mxu0 0.0
    %2250 = vmatprep.subr.mxu0 0.0
    %2251 = vmatpush1.msra.mxu0 0.0
    %2252 = vmatprep.subr.mxu0 0.0
    %2253 = vmatpush1.msra.mxu0 0.0
    %2254 = vmatprep.subr.mxu0 0.0
    %2255 = vmatpush1.msra.mxu0 0.0
    %2256 = vmatprep.subr.mxu0 0.0
    %2257 = vmatpush1.msra.mxu0 0.0
    %2258 = vmatprep.subr.mxu0 0.0
    %2259 = vmatpush1.msra.mxu0 0.0
    %2260 = vmatprep.subr.mxu0 0.0
    %2261 = vmatpush1.msra.mxu0 0.0
    %2262 = vmatprep.mubr.f32.mxu0 0.0
    %2263 = vmatmul.mubr.f32.gmra.mrb[0].mxu0 %v2193
    %v2264 = vpop.f32.mrb[0].mxu0
    %v2265 = vadd.f32 %v2190, %v2264
    %v2266 = vpop.f32.mrb[0].mxu0
    %2267 = vmatprep.mubr.f32.mxu0 0.0
    %2268 = vmatmul.mubr.f32.gmra.mrb[0].mxu0 %v2196
    %v2269 = vpop.f32.mrb[0].mxu0
    %v2270 = vadd.f32 %v2190, %v2269
    %v2271 = vpop.f32.mrb[0].mxu0
    %2272 = vdwg.mxu0
    %v2273 = vmax.f32 %v2265, 0.0
    %v2274 = vmax.f32 %v2270, 0.0
    %v2275 = vld [vmem:[%s18] sm:$0xff]
    %v2276 = vld [vmem:[%s18 + $0x8] sm:$0xff]
    %v2277 = vld [vmem:[%s18 + $0x10] sm:$0xff]
    %v2278 = vld [vmem:[%s18 + $0x18] sm:$0xff]
    %v2279 = vld [vmem:[%s18 + $0x20] sm:$0xff]
    %v2280 = vld [vmem:[%s18 + $0x28] sm:$0xff]
    %v2281 = vld [vmem:[%s18 + $0x30] sm:$0xff]
    %v2282 = vld [vmem:[%s18 + $0x38] sm:$0xff]
    %v2283 = vld [vmem:[%s18 + $0x40] sm:$0xff]
    %v2284 = vld [vmem:[%s18 + $0x48] sm:$0xff]
    %v2285 = vld [vmem:[%s18 + $0x50] sm:$0xff]
    %v2286 = vld [vmem:[%s18 + $0x58] sm:$0xff]
    %v2287 = vld [vmem:[%s18 + $0x60] sm:$0xff]
    %v2288 = vld [vmem:[%s18 + $0x68] sm:$0xff]
    %v2289 = vld [vmem:[%s18 + $0x70] sm:$0xff]
    %v2290 = vld [vmem:[%s18 + $0x78] sm:$0xff]
    %v2291 = vld [vmem:[%s19] sm:$0x1]
    %v2293 = vlaneseq
    %v2294 = vshrl.u32 %v2293, 7
    %v2295 = vsub.s32 0, %v2294
    %v2296 = vrot.slane %v2291, %v2295
    %2298 = vmatprep.subr.mxu0 0.0
    %2299 = vmatpush1.msra.mxu0 %v2275
    %2300 = vmatprep.subr.mxu0 0.0
    %2301 = vmatpush1.msra.mxu0 %v2276
    %2302 = vmatprep.subr.mxu0 0.0
    %2303 = vmatpush1.msra.mxu0 %v2277
    %2304 = vmatprep.subr.mxu0 0.0
    %2305 = vmatpush1.msra.mxu0 %v2278
    %2306 = vmatprep.subr.mxu0 0.0
    %2307 = vmatpush1.msra.mxu0 %v2279
    %2308 = vmatprep.subr.mxu0 0.0
    %2309 = vmatpush1.msra.mxu0 %v2280
    %2310 = vmatprep.subr.mxu0 0.0
    %2311 = vmatpush1.msra.mxu0 %v2281
    %2312 = vmatprep.subr.mxu0 0.0
    %2313 = vmatpush1.msra.mxu0 %v2282
    %2314 = vmatprep.subr.mxu0 0.0
    %2315 = vmatpush1.msra.mxu0 %v2283
    %2316 = vmatprep.subr.mxu0 0.0
    %2317 = vmatpush1.msra.mxu0 %v2284
    %2318 = vmatprep.subr.mxu0 0.0
    %2319 = vmatpush1.msra.mxu0 %v2285
    %2320 = vmatprep.subr.mxu0 0.0
    %2321 = vmatpush1.msra.mxu0 %v2286
    %2322 = vmatprep.subr.mxu0 0.0
    %2323 = vmatpush1.msra.mxu0 %v2287
    %2324 = vmatprep.subr.mxu0 0.0
    %2325 = vmatpush1.msra.mxu0 %v2288
    %2326 = vmatprep.subr.mxu0 0.0
    %2327 = vmatpush1.msra.mxu0 %v2289
    %2328 = vmatprep.subr.mxu0 0.0
    %2329 = vmatpush1.msra.mxu0 %v2290
    %2330 = vmatprep.subr.mxu0 0.0
    %2331 = vmatpush1.msra.mxu0 0.0
    %2332 = vmatprep.subr.mxu0 0.0
    %2333 = vmatpush1.msra.mxu0 0.0
    %2334 = vmatprep.subr.mxu0 0.0
    %2335 = vmatpush1.msra.mxu0 0.0
    %2336 = vmatprep.subr.mxu0 0.0
    %2337 = vmatpush1.msra.mxu0 0.0
    %2338 = vmatprep.subr.mxu0 0.0
    %2339 = vmatpush1.msra.mxu0 0.0
    %2340 = vmatprep.subr.mxu0 0.0
    %2341 = vmatpush1.msra.mxu0 0.0
    %2342 = vmatprep.subr.mxu0 0.0
    %2343 = vmatpush1.msra.mxu0 0.0
    %2344 = vmatprep.subr.mxu0 0.0
    %2345 = vmatpush1.msra.mxu0 0.0
    %2346 = vmatprep.subr.mxu0 0.0
    %2347 = vmatpush1.msra.mxu0 0.0
    %2348 = vmatprep.subr.mxu0 0.0
    %2349 = vmatpush1.msra.mxu0 0.0
    %2350 = vmatprep.subr.mxu0 0.0
    %2351 = vmatpush1.msra.mxu0 0.0
    %2352 = vmatprep.subr.mxu0 0.0
    %2353 = vmatpush1.msra.mxu0 0.0
    %2354 = vmatprep.subr.mxu0 0.0
    %2355 = vmatpush1.msra.mxu0 0.0
    %2356 = vmatprep.subr.mxu0 0.0
    %2357 = vmatpush1.msra.mxu0 0.0
    %2358 = vmatprep.subr.mxu0 0.0
    %2359 = vmatpush1.msra.mxu0 0.0
    %2360 = vmatprep.subr.mxu0 0.0
    %2361 = vmatpush1.msra.mxu0 0.0
    %2362 = vmatprep.mubr.f32.mxu0 0.0
    %2363 = vmatmul.mubr.f32.gmra.mrb[0].mxu0 %v2273
    %v2364 = vpop.f32.mrb[0].mxu0
    %v2365 = vadd.f32 %v2296, %v2364
    %v2366 = vpop.f32.mrb[0].mxu0
    %2367 = vmatprep.mubr.f32.mxu0 0.0
    %2368 = vmatmul.mubr.f32.gmra.mrb[0].mxu0 %v2274
    %v2369 = vpop.f32.mrb[0].mxu0
    %v2370 = vadd.f32 %v2296, %v2369
    %v2371 = vpop.f32.mrb[0].mxu0
    %2372 = vdwg.mxu0
    %v2373 = vadd.f32 %v2365, %v2179
    %v2374 = vadd.f32 %v2370, %v2180
    %v2375 = vld [vmem:[%s20] sm:$0x1]
    %v2376 = vld [vmem:[%s21] sm:$0x1]
    %v2377 = vsel %vm150, %v2373, 0.0
    %2378 = vadd.xlane.f32.xlu0 %v2377
    %v2379 = vpop.xlane.xlu0 %2378
    %v2380 = vsel %vm150, %v2374, 0.0
    %2381 = vadd.xlane.f32.xlu0 %v2380
    %v2382 = vpop.xlane.xlu0 %2381
    %v2383 = vmul.f32 %v2379, %v1125
    %v2384 = vmul.f32 %v2382, %v1125
    %v2385 = vsub.f32 %v2373, %v2383
    %v2386 = vsub.f32 %v2374, %v2384
    %v2387 = vmul.f32 %v2385, %v2385
    %v2388 = vmul.f32 %v2386, %v2386
    %v2389 = vsel %vm150, %v2387, 0.0
    %2390 = vadd.xlane.f32.xlu0 %v2389
    %v2391 = vpop.xlane.xlu0 %2390
    %v2392 = vsel %vm150, %v2388, 0.0
    %2393 = vadd.xlane.f32.xlu0 %v2392
    %v2394 = vpop.xlane.xlu0 %2393
    %v2395 = vmul.f32 %v2391, %v1125
    %v2396 = vmul.f32 %v2394, %v1125
    %v2397 = vadd.f32 %v2395, 1e-05
    %v2398 = vadd.f32 %v2396, 1e-05
    %v2399 = vrsqrt.pop %v2397
    %v2400 = vrsqrt.pop %v2398
    %v2401 = vmul.f32 %v2385, %v2399
    %v2402 = vmul.f32 %v2386, %v2400
    %v2404 = vlaneseq
    %v2405 = vshrl.u32 %v2404, 7
    %v2406 = vsub.s32 0, %v2405
    %v2407 = vrot.slane %v2375, %v2406
    %v2409 = vmul.f32 %v2401, %v2407
    %v2410 = vmul.f32 %v2402, %v2407
    %v2412 = vlaneseq
    %v2413 = vshrl.u32 %v2412, 7
    %v2414 = vsub.s32 0, %v2413
    %v2415 = vrot.slane %v2376, %v2414
    %v2417 = vadd.f32 %v2409, %v2415
    %v2418 = vadd.f32 %v2410, %v2415
    %s2419 = scalar_lea.vmem %s6, 96
    %v2420 = vld [vmem:[%s2419] sm:$0xff]
    %v2421 = vld [vmem:[%s2419 + $0x8] sm:$0xff]
    %v2422 = vld [vmem:[%s2419 + $0x10] sm:$0xff]
    %v2423 = vld [vmem:[%s2419 + $0x18] sm:$0xff]
    %2424 = vmatprep.subr.mxu0 0.0
    %2425 = vmatpush1.msra.mxu0 %v2420
    %2426 = vmatprep.subr.mxu0 0.0
    %2427 = vmatpush1.msra.mxu0 %v2421
    %2428 = vmatprep.subr.mxu0 0.0
    %2429 = vmatpush1.msra.mxu0 %v2422
    %2430 = vmatprep.subr.mxu0 0.0
    %2431 = vmatpush1.msra.mxu0 %v2423
    %2432 = vmatprep.subr.mxu0 0.0
    %2433 = vmatpush1.msra.mxu0 0.0
    %2434 = vmatprep.subr.mxu0 0.0
    %2435 = vmatpush1.msra.mxu0 0.0
    %2436 = vmatprep.subr.mxu0 0.0
    %2437 = vmatpush1.msra.mxu0 0.0
    %2438 = vmatprep.subr.mxu0 0.0
    %2439 = vmatpush1.msra.mxu0 0.0
    %2440 = vmatprep.subr.mxu0 0.0
    %2441 = vmatpush1.msra.mxu0 0.0
    %2442 = vmatprep.subr.mxu0 0.0
    %2443 = vmatpush1.msra.mxu0 0.0
    %2444 = vmatprep.subr.mxu0 0.0
    %2445 = vmatpush1.msra.mxu0 0.0
    %2446 = vmatprep.subr.mxu0 0.0
    %2447 = vmatpush1.msra.mxu0 0.0
    %2448 = vmatprep.subr.mxu0 0.0
    %2449 = vmatpush1.msra.mxu0 0.0
    %2450 = vmatprep.subr.mxu0 0.0
    %2451 = vmatpush1.msra.mxu0 0.0
    %2452 = vmatprep.subr.mxu0 0.0
    %2453 = vmatpush1.msra.mxu0 0.0
    %2454 = vmatprep.subr.mxu0 0.0
    %2455 = vmatpush1.msra.mxu0 0.0
    %2456 = vmatprep.subr.mxu0 0.0
    %2457 = vmatpush1.msra.mxu0 0.0
    %2458 = vmatprep.subr.mxu0 0.0
    %2459 = vmatpush1.msra.mxu0 0.0
    %2460 = vmatprep.subr.mxu0 0.0
    %2461 = vmatpush1.msra.mxu0 0.0
    %2462 = vmatprep.subr.mxu0 0.0
    %2463 = vmatpush1.msra.mxu0 0.0
    %2464 = vmatprep.subr.mxu0 0.0
    %2465 = vmatpush1.msra.mxu0 0.0
    %2466 = vmatprep.subr.mxu0 0.0
    %2467 = vmatpush1.msra.mxu0 0.0
    %2468 = vmatprep.subr.mxu0 0.0
    %2469 = vmatpush1.msra.mxu0 0.0
    %2470 = vmatprep.subr.mxu0 0.0
    %2471 = vmatpush1.msra.mxu0 0.0
    %2472 = vmatprep.subr.mxu0 0.0
    %2473 = vmatpush1.msra.mxu0 0.0
    %2474 = vmatprep.subr.mxu0 0.0
    %2475 = vmatpush1.msra.mxu0 0.0
    %2476 = vmatprep.subr.mxu0 0.0
    %2477 = vmatpush1.msra.mxu0 0.0
    %2478 = vmatprep.subr.mxu0 0.0
    %2479 = vmatpush1.msra.mxu0 0.0
    %2480 = vmatprep.subr.mxu0 0.0
    %2481 = vmatpush1.msra.mxu0 0.0
    %2482 = vmatprep.subr.mxu0 0.0
    %2483 = vmatpush1.msra.mxu0 0.0
    %2484 = vmatprep.subr.mxu0 0.0
    %2485 = vmatpush1.msra.mxu0 0.0
    %2486 = vmatprep.subr.mxu0 0.0
    %2487 = vmatpush1.msra.mxu0 0.0
    %2488 = vmatprep.mubr.f32.mxu0 0.0
    %2489 = vmatmul.mubr.f32.gmra.mrb[0].mxu0 %v152
    %v2490 = vpop.f32.mrb[0].mxu0
    %v2491 = vadd.f32 0.0, %v2490
    %v2492 = vpop.f32.mrb[0].mxu0
    %2493 = vmatprep.mubr.f32.mxu0 0.0
    %2494 = vmatmul.mubr.f32.gmra.mrb[0].mxu0 %v155
    %v2495 = vpop.f32.mrb[0].mxu0
    %v2496 = vadd.f32 0.0, %v2495
    %v2497 = vpop.f32.mrb[0].mxu0
    %2498 = vdwg.mxu0
    %s2499 = scalar_lea.vmem %s6, 128
    %v2500 = vld [vmem:[%s2499] sm:$0xff]
    %v2501 = vld [vmem:[%s2499 + $0x8] sm:$0xff]
    %v2502 = vld [vmem:[%s2499 + $0x10] sm:$0xff]
    %v2503 = vld [vmem:[%s2499 + $0x18] sm:$0xff]
    %2504 = vmatprep.subr.mxu0 0.0
    %2505 = vmatpush1.msra.mxu0 %v2500
    %2506 = vmatprep.subr.mxu0 0.0
    %2507 = vmatpush1.msra.mxu0 %v2501
    %2508 = vmatprep.subr.mxu0 0.0
    %2509 = vmatpush1.msra.mxu0 %v2502
    %2510 = vmatprep.subr.mxu0 0.0
    %2511 = vmatpush1.msra.mxu0 %v2503
    %2512 = vmatprep.subr.mxu0 0.0
    %2513 = vmatpush1.msra.mxu0 0.0
    %2514 = vmatprep.subr.mxu0 0.0
    %2515 = vmatpush1.msra.mxu0 0.0
    %2516 = vmatprep.subr.mxu0 0.0
    %2517 = vmatpush1.msra.mxu0 0.0
    %2518 = vmatprep.subr.mxu0 0.0
    %2519 = vmatpush1.msra.mxu0 0.0
    %2520 = vmatprep.subr.mxu0 0.0
    %2521 = vmatpush1.msra.mxu0 0.0
    %2522 = vmatprep.subr.mxu0 0.0
    %2523 = vmatpush1.msra.mxu0 0.0
    %2524 = vmatprep.subr.mxu0 0.0
    %2525 = vmatpush1.msra.mxu0 0.0
    %2526 = vmatprep.subr.mxu0 0.0
    %2527 = vmatpush1.msra.mxu0 0.0
    %2528 = vmatprep.subr.mxu0 0.0
    %2529 = vmatpush1.msra.mxu0 0.0
    %2530 = vmatprep.subr.mxu0 0.0
    %2531 = vmatpush1.msra.mxu0 0.0
    %2532 = vmatprep.subr.mxu0 0.0
    %2533 = vmatpush1.msra.mxu0 0.0
    %2534 = vmatprep.subr.mxu0 0.0
    %2535 = vmatpush1.msra.mxu0 0.0
    %2536 = vmatprep.subr.mxu0 0.0
    %2537 = vmatpush1.msra.mxu0 0.0
    %2538 = vmatprep.subr.mxu0 0.0
    %2539 = vmatpush1.msra.mxu0 0.0
    %2540 = vmatprep.subr.mxu0 0.0
    %2541 = vmatpush1.msra.mxu0 0.0
    %2542 = vmatprep.subr.mxu0 0.0
    %2543 = vmatpush1.msra.mxu0 0.0
    %2544 = vmatprep.subr.mxu0 0.0
    %2545 = vmatpush1.msra.mxu0 0.0
    %2546 = vmatprep.subr.mxu0 0.0
    %2547 = vmatpush1.msra.mxu0 0.0
    %2548 = vmatprep.subr.mxu0 0.0
    %2549 = vmatpush1.msra.mxu0 0.0
    %2550 = vmatprep.subr.mxu0 0.0
    %2551 = vmatpush1.msra.mxu0 0.0
    %2552 = vmatprep.subr.mxu0 0.0
    %2553 = vmatpush1.msra.mxu0 0.0
    %2554 = vmatprep.subr.mxu0 0.0
    %2555 = vmatpush1.msra.mxu0 0.0
    %2556 = vmatprep.subr.mxu0 0.0
    %2557 = vmatpush1.msra.mxu0 0.0
    %2558 = vmatprep.subr.mxu0 0.0
    %2559 = vmatpush1.msra.mxu0 0.0
    %2560 = vmatprep.subr.mxu0 0.0
    %2561 = vmatpush1.msra.mxu0 0.0
    %2562 = vmatprep.subr.mxu0 0.0
    %2563 = vmatpush1.msra.mxu0 0.0
    %2564 = vmatprep.subr.mxu0 0.0
    %2565 = vmatpush1.msra.mxu0 0.0
    %2566 = vmatprep.subr.mxu0 0.0
    %2567 = vmatpush1.msra.mxu0 0.0
    %2568 = vmatprep.mubr.f32.mxu0 0.0
    %2569 = vmatmul.mubr.f32.gmra.mrb[0].mxu0 %v152
    %v2570 = vpop.f32.mrb[0].mxu0
    %v2571 = vadd.f32 0.0, %v2570
    %v2572 = vpop.f32.mrb[0].mxu0
    %2573 = vmatprep.mubr.f32.mxu0 0.0
    %2574 = vmatmul.mubr.f32.gmra.mrb[0].mxu0 %v155
    %v2575 = vpop.f32.mrb[0].mxu0
    %v2576 = vadd.f32 0.0, %v2575
    %v2577 = vpop.f32.mrb[0].mxu0
    %2578 = vdwg.mxu0
    %s2579 = scalar_lea.vmem %s6, 160
    %v2580 = vld [vmem:[%s2579] sm:$0xff]
    %v2581 = vld [vmem:[%s2579 + $0x8] sm:$0xff]
    %v2582 = vld [vmem:[%s2579 + $0x10] sm:$0xff]
    %v2583 = vld [vmem:[%s2579 + $0x18] sm:$0xff]
    %2584 = vmatprep.subr.mxu0 0.0
    %2585 = vmatpush1.msra.mxu0 %v2580
    %2586 = vmatprep.subr.mxu0 0.0
    %2587 = vmatpush1.msra.mxu0 %v2581
    %2588 = vmatprep.subr.mxu0 0.0
    %2589 = vmatpush1.msra.mxu0 %v2582
    %2590 = vmatprep.subr.mxu0 0.0
    %2591 = vmatpush1.msra.mxu0 %v2583
    %2592 = vmatprep.subr.mxu0 0.0
    %2593 = vmatpush1.msra.mxu0 0.0
    %2594 = vmatprep.subr.mxu0 0.0
    %2595 = vmatpush1.msra.mxu0 0.0
    %2596 = vmatprep.subr.mxu0 0.0
    %2597 = vmatpush1.msra.mxu0 0.0
    %2598 = vmatprep.subr.mxu0 0.0
    %2599 = vmatpush1.msra.mxu0 0.0
    %2600 = vmatprep.subr.mxu0 0.0
    %2601 = vmatpush1.msra.mxu0 0.0
    %2602 = vmatprep.subr.mxu0 0.0
    %2603 = vmatpush1.msra.mxu0 0.0
    %2604 = vmatprep.subr.mxu0 0.0
    %2605 = vmatpush1.msra.mxu0 0.0
    %2606 = vmatprep.subr.mxu0 0.0
    %2607 = vmatpush1.msra.mxu0 0.0
    %2608 = vmatprep.subr.mxu0 0.0
    %2609 = vmatpush1.msra.mxu0 0.0
    %2610 = vmatprep.subr.mxu0 0.0
    %2611 = vmatpush1.msra.mxu0 0.0
    %2612 = vmatprep.subr.mxu0 0.0
    %2613 = vmatpush1.msra.mxu0 0.0
    %2614 = vmatprep.subr.mxu0 0.0
    %2615 = vmatpush1.msra.mxu0 0.0
    %2616 = vmatprep.subr.mxu0 0.0
    %2617 = vmatpush1.msra.mxu0 0.0
    %2618 = vmatprep.subr.mxu0 0.0
    %2619 = vmatpush1.msra.mxu0 0.0
    %2620 = vmatprep.subr.mxu0 0.0
    %2621 = vmatpush1.msra.mxu0 0.0
    %2622 = vmatprep.subr.mxu0 0.0
    %2623 = vmatpush1.msra.mxu0 0.0
    %2624 = vmatprep.subr.mxu0 0.0
    %2625 = vmatpush1.msra.mxu0 0.0
    %2626 = vmatprep.subr.mxu0 0.0
    %2627 = vmatpush1.msra.mxu0 0.0
    %2628 = vmatprep.subr.mxu0 0.0
    %2629 = vmatpush1.msra.mxu0 0.0
    %2630 = vmatprep.subr.mxu0 0.0
    %2631 = vmatpush1.msra.mxu0 0.0
    %2632 = vmatprep.subr.mxu0 0.0
    %2633 = vmatpush1.msra.mxu0 0.0
    %2634 = vmatprep.subr.mxu0 0.0
    %2635 = vmatpush1.msra.mxu0 0.0
    %2636 = vmatprep.subr.mxu0 0.0
    %2637 = vmatpush1.msra.mxu0 0.0
    %2638 = vmatprep.subr.mxu0 0.0
    %2639 = vmatpush1.msra.mxu0 0.0
    %2640 = vmatprep.subr.mxu0 0.0
    %2641 = vmatpush1.msra.mxu0 0.0
    %2642 = vmatprep.subr.mxu0 0.0
    %2643 = vmatpush1.msra.mxu0 0.0
    %2644 = vmatprep.subr.mxu0 0.0
    %2645 = vmatpush1.msra.mxu0 0.0
    %2646 = vmatprep.subr.mxu0 0.0
    %2647 = vmatpush1.msra.mxu0 0.0
    %2648 = vmatprep.mubr.f32.mxu0 0.0
    %2649 = vmatmul.mubr.f32.gmra.mrb[0].mxu0 %v152
    %v2650 = vpop.f32.mrb[0].mxu0
    %v2651 = vadd.f32 0.0, %v2650
    %v2652 = vpop.f32.mrb[0].mxu0
    %2653 = vmatprep.mubr.f32.mxu0 0.0
    %2654 = vmatmul.mubr.f32.gmra.mrb[0].mxu0 %v155
    %v2655 = vpop.f32.mrb[0].mxu0
    %v2656 = vadd.f32 0.0, %v2655
    %v2657 = vpop.f32.mrb[0].mxu0
    %2658 = vdwg.mxu0
    %s2659 = scalar_lea.vmem %s7, 32
    %v2660 = vld [vmem:[%s2659] sm:$0xff]
    %v2661 = vld [vmem:[%s2659 + $0x8] sm:$0xff]
    %v2662 = vld [vmem:[%s2659 + $0x10] sm:$0xff]
    %v2663 = vld [vmem:[%s2659 + $0x18] sm:$0xff]
    %s2664 = scalar_lea.vmem %s8, 1
    %v2665 = vld [vmem:[%s2664] sm:$0x1]
    %v2666 = vmul.f32 %v2491, %v114
    %v2667 = vmul.f32 %v2491, %v115
    %v2668 = vmul.f32 %v2491, %v116
    %v2669 = vmul.f32 %v2491, %v117
    %v2670 = vmul.f32 %v2491, %v118
    %v2671 = vmul.f32 %v2491, %v119
    %v2672 = vmul.f32 %v2491, %v120
    %v2673 = vmul.f32 %v2491, %v121
    %v2674 = vmul.f32 %v2496, %v122
    %v2675 = vmul.f32 %v2496, %v123
    %v2676 = vmul.f32 %v2496, %v124
    %v2677 = vmul.f32 %v2496, %v125
    %v2678 = vmul.f32 %v2496, %v126
    %v2679 = vmul.f32 %v2496, %v127
    %v2680 = vmul.f32 %v2496, %v128
    %v2681 = vmul.f32 %v2496, %v129
    %v2683 = vsel %vm150, %v2666, 0
    %v2686 = vsel %vm150, %v2667, 0
    %v2689 = vsel %vm150, %v2668, 0
    %v2692 = vsel %vm150, %v2669, 0
    %v2695 = vsel %vm150, %v2670, 0
    %v2698 = vsel %vm150, %v2671, 0
    %v2701 = vsel %vm150, %v2672, 0
    %v2704 = vsel %vm150, %v2673, 0
    %v2707 = vsel %vm150, %v2674, 0
    %v2710 = vsel %vm150, %v2675, 0
    %v2713 = vsel %vm150, %v2676, 0
    %v2716 = vsel %vm150, %v2677, 0
    %v2719 = vsel %vm150, %v2678, 0
    %v2722 = vsel %vm150, %v2679, 0
    %v2725 = vsel %vm150, %v2680, 0
    %v2728 = vsel %vm150, %v2681, 0
    %v2731 = vsel %vm150, %v2571, 0
    %v2734 = vsel %vm150, %v2576, 0
    %2736 = vmatprep.subr.mxu0 0.0
    %2737 = vmatpush1.xpose.msra.mxu0 %v2731
    %2738 = vmatprep.subr.mxu0 0.0
    %2739 = vmatpush1.xpose.msra.mxu0 %v2734
    %2740 = vmatprep.subr.mxu0 0.0
    %2741 = vmatpush1.xpose.msra.mxu0 0.0
    %2742 = vmatprep.subr.mxu0 0.0
    %2743 = vmatpush1.xpose.msra.mxu0 0.0
    %2744 = vmatprep.subr.mxu0 0.0
    %2745 = vmatpush1.xpose.msra.mxu0 0.0
    %2746 = vmatprep.subr.mxu0 0.0
    %2747 = vmatpush1.xpose.msra.mxu0 0.0
    %2748 = vmatprep.subr.mxu0 0.0
    %2749 = vmatpush1.xpose.msra.mxu0 0.0
    %2750 = vmatprep.subr.mxu0 0.0
    %2751 = vmatpush1.xpose.msra.mxu0 0.0
    %2752 = vmatprep.subr.mxu0 0.0
    %2753 = vmatpush1.xpose.msra.mxu0 0.0
    %2754 = vmatprep.subr.mxu0 0.0
    %2755 = vmatpush1.xpose.msra.mxu0 0.0
    %2756 = vmatprep.subr.mxu0 0.0
    %2757 = vmatpush1.xpose.msra.mxu0 0.0
    %2758 = vmatprep.subr.mxu0 0.0
    %2759 = vmatpush1.xpose.msra.mxu0 0.0
    %2760 = vmatprep.subr.mxu0 0.0
    %2761 = vmatpush1.xpose.msra.mxu0 0.0
    %2762 = vmatprep.subr.mxu0 0.0
    %2763 = vmatpush1.xpose.msra.mxu0 0.0
    %2764 = vmatprep.subr.mxu0 0.0
    %2765 = vmatpush1.xpose.msra.mxu0 0.0
    %2766 = vmatprep.subr.mxu0 0.0
    %2767 = vmatpush1.xpose.msra.mxu0 0.0
    %2768 = vmatprep.subr.mxu0 0.0
    %2769 = vmatpush1.xpose.msra.mxu0 0.0
    %2770 = vmatprep.subr.mxu0 0.0
    %2771 = vmatpush1.xpose.msra.mxu0 0.0
    %2772 = vmatprep.subr.mxu0 0.0
    %2773 = vmatpush1.xpose.msra.mxu0 0.0
    %2774 = vmatprep.subr.mxu0 0.0
    %2775 = vmatpush1.xpose.msra.mxu0 0.0
    %2776 = vmatprep.subr.mxu0 0.0
    %2777 = vmatpush1.xpose.msra.mxu0 0.0
    %2778 = vmatprep.subr.mxu0 0.0
    %2779 = vmatpush1.xpose.msra.mxu0 0.0
    %2780 = vmatprep.subr.mxu0 0.0
    %2781 = vmatpush1.xpose.msra.mxu0 0.0
    %2782 = vmatprep.subr.mxu0 0.0
    %2783 = vmatpush1.xpose.msra.mxu0 0.0
    %2784 = vmatprep.subr.mxu0 0.0
    %2785 = vmatpush1.xpose.msra.mxu0 0.0
    %2786 = vmatprep.subr.mxu0 0.0
    %2787 = vmatpush1.xpose.msra.mxu0 0.0
    %2788 = vmatprep.subr.mxu0 0.0
    %2789 = vmatpush1.xpose.msra.mxu0 0.0
    %2790 = vmatprep.subr.mxu0 0.0
    %2791 = vmatpush1.xpose.msra.mxu0 0.0
    %2792 = vmatprep.subr.mxu0 0.0
    %2793 = vmatpush1.xpose.msra.mxu0 0.0
    %2794 = vmatprep.subr.mxu0 0.0
    %2795 = vmatpush1.xpose.msra.mxu0 0.0
    %2796 = vmatprep.subr.mxu0 0.0
    %2797 = vmatpush1.xpose.msra.mxu0 0.0
    %2798 = vmatprep.subr.mxu0 0.0
    %2799 = vmatpush1.xpose.msra.mxu0 0.0
    %2800 = vmatprep.mubr.f32.mxu0 0.0
    %2801 = vmatmul.mubr.f32.gmra.mrb[0].mxu0 %v2683
    %v2802 = vpop.f32.mrb[0].mxu0
    %v2803 = vadd.f32 %v82, %v2802
    %v2804 = vpop.f32.mrb[0].mxu0
    %2805 = vmatprep.mubr.f32.mxu0 0.0
    %2806 = vmatmul.mubr.f32.gmra.mrb[0].mxu0 %v2686
    %v2807 = vpop.f32.mrb[0].mxu0
    %v2808 = vadd.f32 %v83, %v2807
    %v2809 = vpop.f32.mrb[0].mxu0
    %2810 = vmatprep.mubr.f32.mxu0 0.0
    %2811 = vmatmul.mubr.f32.gmra.mrb[0].mxu0 %v2689
    %v2812 = vpop.f32.mrb[0].mxu0
    %v2813 = vadd.f32 %v84, %v2812
    %v2814 = vpop.f32.mrb[0].mxu0
    %2815 = vmatprep.mubr.f32.mxu0 0.0
    %2816 = vmatmul.mubr.f32.gmra.mrb[0].mxu0 %v2692
    %v2817 = vpop.f32.mrb[0].mxu0
    %v2818 = vadd.f32 %v85, %v2817
    %v2819 = vpop.f32.mrb[0].mxu0
    %2820 = vmatprep.mubr.f32.mxu0 0.0
    %2821 = vmatmul.mubr.f32.gmra.mrb[0].mxu0 %v2695
    %v2822 = vpop.f32.mrb[0].mxu0
    %v2823 = vadd.f32 %v86, %v2822
    %v2824 = vpop.f32.mrb[0].mxu0
    %2825 = vmatprep.mubr.f32.mxu0 0.0
    %2826 = vmatmul.mubr.f32.gmra.mrb[0].mxu0 %v2698
    %v2827 = vpop.f32.mrb[0].mxu0
    %v2828 = vadd.f32 %v87, %v2827
    %v2829 = vpop.f32.mrb[0].mxu0
    %2830 = vmatprep.mubr.f32.mxu0 0.0
    %2831 = vmatmul.mubr.f32.gmra.mrb[0].mxu0 %v2701
    %v2832 = vpop.f32.mrb[0].mxu0
    %v2833 = vadd.f32 %v88, %v2832
    %v2834 = vpop.f32.mrb[0].mxu0
    %2835 = vmatprep.mubr.f32.mxu0 0.0
    %2836 = vmatmul.mubr.f32.gmra.mrb[0].mxu0 %v2704
    %v2837 = vpop.f32.mrb[0].mxu0
    %v2838 = vadd.f32 %v89, %v2837
    %v2839 = vpop.f32.mrb[0].mxu0
    %2840 = vmatprep.mubr.f32.mxu0 0.0
    %2841 = vmatmul.mubr.f32.gmra.mrb[0].mxu0 %v2707
    %v2842 = vpop.f32.mrb[0].mxu0
    %v2843 = vadd.f32 %v90, %v2842
    %v2844 = vpop.f32.mrb[0].mxu0
    %2845 = vmatprep.mubr.f32.mxu0 0.0
    %2846 = vmatmul.mubr.f32.gmra.mrb[0].mxu0 %v2710
    %v2847 = vpop.f32.mrb[0].mxu0
    %v2848 = vadd.f32 %v91, %v2847
    %v2849 = vpop.f32.mrb[0].mxu0
    %2850 = vmatprep.mubr.f32.mxu0 0.0
    %2851 = vmatmul.mubr.f32.gmra.mrb[0].mxu0 %v2713
    %v2852 = vpop.f32.mrb[0].mxu0
    %v2853 = vadd.f32 %v92, %v2852
    %v2854 = vpop.f32.mrb[0].mxu0
    %2855 = vmatprep.mubr.f32.mxu0 0.0
    %2856 = vmatmul.mubr.f32.gmra.mrb[0].mxu0 %v2716
    %v2857 = vpop.f32.mrb[0].mxu0
    %v2858 = vadd.f32 %v93, %v2857
    %v2859 = vpop.f32.mrb[0].mxu0
    %2860 = vmatprep.mubr.f32.mxu0 0.0
    %2861 = vmatmul.mubr.f32.gmra.mrb[0].mxu0 %v2719
    %v2862 = vpop.f32.mrb[0].mxu0
    %v2863 = vadd.f32 %v94, %v2862
    %v2864 = vpop.f32.mrb[0].mxu0
    %2865 = vmatprep.mubr.f32.mxu0 0.0
    %2866 = vmatmul.mubr.f32.gmra.mrb[0].mxu0 %v2722
    %v2867 = vpop.f32.mrb[0].mxu0
    %v2868 = vadd.f32 %v95, %v2867
    %v2869 = vpop.f32.mrb[0].mxu0
    %2870 = vmatprep.mubr.f32.mxu0 0.0
    %2871 = vmatmul.mubr.f32.gmra.mrb[0].mxu0 %v2725
    %v2872 = vpop.f32.mrb[0].mxu0
    %v2873 = vadd.f32 %v96, %v2872
    %v2874 = vpop.f32.mrb[0].mxu0
    %2875 = vmatprep.mubr.f32.mxu0 0.0
    %2876 = vmatmul.mubr.f32.gmra.mrb[0].mxu0 %v2728
    %v2877 = vpop.f32.mrb[0].mxu0
    %v2878 = vadd.f32 %v97, %v2877
    %v2879 = vpop.f32.mrb[0].mxu0
    %2880 = vdwg.mxu0
    %v2881 = vsel %vm612, %v2803, -inf
    %2882 = vmax.xlane.f32.xlu0 %v2881
    %v2883 = vpop.xlane.xlu0 %2882
    %v2884 = vsel %vm612, %v2808, -inf
    %2885 = vmax.xlane.f32.xlu0 %v2884
    %v2886 = vpop.xlane.xlu0 %2885
    %v2887 = vsel %vm612, %v2813, -inf
    %2888 = vmax.xlane.f32.xlu0 %v2887
    %v2889 = vpop.xlane.xlu0 %2888
    %v2890 = vsel %vm612, %v2818, -inf
    %2891 = vmax.xlane.f32.xlu0 %v2890
    %v2892 = vpop.xlane.xlu0 %2891
    %v2893 = vsel %vm612, %v2823, -inf
    %2894 = vmax.xlane.f32.xlu0 %v2893
    %v2895 = vpop.xlane.xlu0 %2894
    %v2896 = vsel %vm612, %v2828, -inf
    %2897 = vmax.xlane.f32.xlu0 %v2896
    %v2898 = vpop.xlane.xlu0 %2897
    %v2899 = vsel %vm612, %v2833, -inf
    %2900 = vmax.xlane.f32.xlu0 %v2899
    %v2901 = vpop.xlane.xlu0 %2900
    %v2902 = vsel %vm612, %v2838, -inf
    %2903 = vmax.xlane.f32.xlu0 %v2902
    %v2904 = vpop.xlane.xlu0 %2903
    %v2905 = vsel %vm612, %v2843, -inf
    %2906 = vmax.xlane.f32.xlu0 %v2905
    %v2907 = vpop.xlane.xlu0 %2906
    %v2908 = vsel %vm612, %v2848, -inf
    %2909 = vmax.xlane.f32.xlu0 %v2908
    %v2910 = vpop.xlane.xlu0 %2909
    %v2911 = vsel %vm612, %v2853, -inf
    %2912 = vmax.xlane.f32.xlu0 %v2911
    %v2913 = vpop.xlane.xlu0 %2912
    %v2914 = vsel %vm612, %v2858, -inf
    %2915 = vmax.xlane.f32.xlu0 %v2914
    %v2916 = vpop.xlane.xlu0 %2915
    %v2917 = vsel %vm612, %v2863, -inf
    %2918 = vmax.xlane.f32.xlu0 %v2917
    %v2919 = vpop.xlane.xlu0 %2918
    %v2920 = vsel %vm612, %v2868, -inf
    %2921 = vmax.xlane.f32.xlu0 %v2920
    %v2922 = vpop.xlane.xlu0 %2921
    %v2923 = vsel %vm612, %v2873, -inf
    %2924 = vmax.xlane.f32.xlu0 %v2923
    %v2925 = vpop.xlane.xlu0 %2924
    %v2926 = vsel %vm612, %v2878, -inf
    %2927 = vmax.xlane.f32.xlu0 %v2926
    %v2928 = vpop.xlane.xlu0 %2927
    %v2929 = vsub.f32 %v2803, %v2883
    %v2930 = vsub.f32 %v2808, %v2886
    %v2931 = vsub.f32 %v2813, %v2889
    %v2932 = vsub.f32 %v2818, %v2892
    %v2933 = vsub.f32 %v2823, %v2895
    %v2934 = vsub.f32 %v2828, %v2898
    %v2935 = vsub.f32 %v2833, %v2901
    %v2936 = vsub.f32 %v2838, %v2904
    %v2937 = vsub.f32 %v2843, %v2907
    %v2938 = vsub.f32 %v2848, %v2910
    %v2939 = vsub.f32 %v2853, %v2913
    %v2940 = vsub.f32 %v2858, %v2916
    %v2941 = vsub.f32 %v2863, %v2919
    %v2942 = vsub.f32 %v2868, %v2922
    %v2943 = vsub.f32 %v2873, %v2925
    %v2944 = vsub.f32 %v2878, %v2928
    %v2945 = vmul.f32 %v2929, 1.442695
    %v2946 = vpow.pop %v2945
    %v2947 = vmul.f32 %v2930, 1.442695
    %v2948 = vpow.pop %v2947
    %v2949 = vmul.f32 %v2931, 1.442695
    %v2950 = vpow.pop %v2949
    %v2951 = vmul.f32 %v2932, 1.442695
    %v2952 = vpow.pop %v2951
    %v2953 = vmul.f32 %v2933, 1.442695
    %v2954 = vpow.pop %v2953
    %v2955 = vmul.f32 %v2934, 1.442695
    %v2956 = vpow.pop %v2955
    %v2957 = vmul.f32 %v2935, 1.442695
    %v2958 = vpow.pop %v2957
    %v2959 = vmul.f32 %v2936, 1.442695
    %v2960 = vpow.pop %v2959
    %v2961 = vmul.f32 %v2937, 1.442695
    %v2962 = vpow.pop %v2961
    %v2963 = vmul.f32 %v2938, 1.442695
    %v2964 = vpow.pop %v2963
    %v2965 = vmul.f32 %v2939, 1.442695
    %v2966 = vpow.pop %v2965
    %v2967 = vmul.f32 %v2940, 1.442695
    %v2968 = vpow.pop %v2967
    %v2969 = vmul.f32 %v2941, 1.442695
    %v2970 = vpow.pop %v2969
    %v2971 = vmul.f32 %v2942, 1.442695
    %v2972 = vpow.pop %v2971
    %v2973 = vmul.f32 %v2943, 1.442695
    %v2974 = vpow.pop %v2973
    %v2975 = vmul.f32 %v2944, 1.442695
    %v2976 = vpow.pop %v2975
    %v2977 = vsel %vm612, %v2946, 0.0
    %2978 = vadd.xlane.f32.xlu0 %v2977
    %v2979 = vpop.xlane.xlu0 %2978
    %v2980 = vsel %vm612, %v2948, 0.0
    %2981 = vadd.xlane.f32.xlu0 %v2980
    %v2982 = vpop.xlane.xlu0 %2981
    %v2983 = vsel %vm612, %v2950, 0.0
    %2984 = vadd.xlane.f32.xlu0 %v2983
    %v2985 = vpop.xlane.xlu0 %2984
    %v2986 = vsel %vm612, %v2952, 0.0
    %2987 = vadd.xlane.f32.xlu0 %v2986
    %v2988 = vpop.xlane.xlu0 %2987
    %v2989 = vsel %vm612, %v2954, 0.0
    %2990 = vadd.xlane.f32.xlu0 %v2989
    %v2991 = vpop.xlane.xlu0 %2990
    %v2992 = vsel %vm612, %v2956, 0.0
    %2993 = vadd.xlane.f32.xlu0 %v2992
    %v2994 = vpop.xlane.xlu0 %2993
    %v2995 = vsel %vm612, %v2958, 0.0
    %2996 = vadd.xlane.f32.xlu0 %v2995
    %v2997 = vpop.xlane.xlu0 %2996
    %v2998 = vsel %vm612, %v2960, 0.0
    %2999 = vadd.xlane.f32.xlu0 %v2998
    %v3000 = vpop.xlane.xlu0 %2999
    %v3001 = vsel %vm612, %v2962, 0.0
    %3002 = vadd.xlane.f32.xlu0 %v3001
    %v3003 = vpop.xlane.xlu0 %3002
    %v3004 = vsel %vm612, %v2964, 0.0
    %3005 = vadd.xlane.f32.xlu0 %v3004
    %v3006 = vpop.xlane.xlu0 %3005
    %v3007 = vsel %vm612, %v2966, 0.0
    %3008 = vadd.xlane.f32.xlu0 %v3007
    %v3009 = vpop.xlane.xlu0 %3008
    %v3010 = vsel %vm612, %v2968, 0.0
    %3011 = vadd.xlane.f32.xlu0 %v3010
    %v3012 = vpop.xlane.xlu0 %3011
    %v3013 = vsel %vm612, %v2970, 0.0
    %3014 = vadd.xlane.f32.xlu0 %v3013
    %v3015 = vpop.xlane.xlu0 %3014
    %v3016 = vsel %vm612, %v2972, 0.0
    %3017 = vadd.xlane.f32.xlu0 %v3016
    %v3018 = vpop.xlane.xlu0 %3017
    %v3019 = vsel %vm612, %v2974, 0.0
    %3020 = vadd.xlane.f32.xlu0 %v3019
    %v3021 = vpop.xlane.xlu0 %3020
    %v3022 = vsel %vm612, %v2976, 0.0
    %3023 = vadd.xlane.f32.xlu0 %v3022
    %v3024 = vpop.xlane.xlu0 %3023
    %v3025 = vrcp.pop %v2979
    %v3026 = vrcp.pop %v2982
    %v3027 = vrcp.pop %v2985
    %v3028 = vrcp.pop %v2988
    %v3029 = vrcp.pop %v2991
    %v3030 = vrcp.pop %v2994
    %v3031 = vrcp.pop %v2997
    %v3032 = vrcp.pop %v3000
    %v3033 = vrcp.pop %v3003
    %v3034 = vrcp.pop %v3006
    %v3035 = vrcp.pop %v3009
    %v3036 = vrcp.pop %v3012
    %v3037 = vrcp.pop %v3015
    %v3038 = vrcp.pop %v3018
    %v3039 = vrcp.pop %v3021
    %v3040 = vrcp.pop %v3024
    %v3041 = vmul.f32 %v2946, %v3025
    %v3042 = vmul.f32 %v2948, %v3026
    %v3043 = vmul.f32 %v2950, %v3027
    %v3044 = vmul.f32 %v2952, %v3028
    %v3045 = vmul.f32 %v2954, %v3029
    %v3046 = vmul.f32 %v2956, %v3030
    %v3047 = vmul.f32 %v2958, %v3031
    %v3048 = vmul.f32 %v2960, %v3032
    %v3049 = vmul.f32 %v2962, %v3033
    %v3050 = vmul.f32 %v2964, %v3034
    %v3051 = vmul.f32 %v2966, %v3035
    %v3052 = vmul.f32 %v2968, %v3036
    %v3053 = vmul.f32 %v2970, %v3037
    %v3054 = vmul.f32 %v2972, %v3038
    %v3055 = vmul.f32 %v2974, %v3039
    %v3056 = vmul.f32 %v2976, %v3040
    %v3058 = vsel %vm612, %v3041, 0
    %v3061 = vsel %vm612, %v3042, 0
    %v3064 = vsel %vm612, %v3043, 0
    %v3067 = vsel %vm612, %v3044, 0
    %v3070 = vsel %vm612, %v3045, 0
    %v3073 = vsel %vm612, %v3046, 0
    %v3076 = vsel %vm612, %v3047, 0
    %v3079 = vsel %vm612, %v3048, 0
    %v3082 = vsel %vm612, %v3049, 0
    %v3085 = vsel %vm612, %v3050, 0
    %v3088 = vsel %vm612, %v3051, 0
    %v3091 = vsel %vm612, %v3052, 0
    %v3094 = vsel %vm612, %v3053, 0
    %v3097 = vsel %vm612, %v3054, 0
    %v3100 = vsel %vm612, %v3055, 0
    %v3103 = vsel %vm612, %v3056, 0
    %3105 = vmatprep.subr.mxu0 0.0
    %3106 = vmatpush1.msra.mxu0 %v2651
    %3107 = vmatprep.subr.mxu0 0.0
    %3108 = vmatpush1.msra.mxu0 %v2656
    %3109 = vmatprep.subr.mxu0 0.0
    %3110 = vmatpush1.msra.mxu0 0.0
    %3111 = vmatprep.subr.mxu0 0.0
    %3112 = vmatpush1.msra.mxu0 0.0
    %3113 = vmatprep.subr.mxu0 0.0
    %3114 = vmatpush1.msra.mxu0 0.0
    %3115 = vmatprep.subr.mxu0 0.0
    %3116 = vmatpush1.msra.mxu0 0.0
    %3117 = vmatprep.subr.mxu0 0.0
    %3118 = vmatpush1.msra.mxu0 0.0
    %3119 = vmatprep.subr.mxu0 0.0
    %3120 = vmatpush1.msra.mxu0 0.0
    %3121 = vmatprep.subr.mxu0 0.0
    %3122 = vmatpush1.msra.mxu0 0.0
    %3123 = vmatprep.subr.mxu0 0.0
    %3124 = vmatpush1.msra.mxu0 0.0
    %3125 = vmatprep.subr.mxu0 0.0
    %3126 = vmatpush1.msra.mxu0 0.0
    %3127 = vmatprep.subr.mxu0 0.0
    %3128 = vmatpush1.msra.mxu0 0.0
    %3129 = vmatprep.subr.mxu0 0.0
    %3130 = vmatpush1.msra.mxu0 0.0
    %3131 = vmatprep.subr.mxu0 0.0
    %3132 = vmatpush1.msra.mxu0 0.0
    %3133 = vmatprep.subr.mxu0 0.0
    %3134 = vmatpush1.msra.mxu0 0.0
    %3135 = vmatprep.subr.mxu0 0.0
    %3136 = vmatpush1.msra.mxu0 0.0
    %3137 = vmatprep.subr.mxu0 0.0
    %3138 = vmatpush1.msra.mxu0 0.0
    %3139 = vmatprep.subr.mxu0 0.0
    %3140 = vmatpush1.msra.mxu0 0.0
    %3141 = vmatprep.subr.mxu0 0.0
    %3142 = vmatpush1.msra.mxu0 0.0
    %3143 = vmatprep.subr.mxu0 0.0
    %3144 = vmatpush1.msra.mxu0 0.0
    %3145 = vmatprep.subr.mxu0 0.0
    %3146 = vmatpush1.msra.mxu0 0.0
    %3147 = vmatprep.subr.mxu0 0.0
    %3148 = vmatpush1.msra.mxu0 0.0
    %3149 = vmatprep.subr.mxu0 0.0
    %3150 = vmatpush1.msra.mxu0 0.0
    %3151 = vmatprep.subr.mxu0 0.0
    %3152 = vmatpush1.msra.mxu0 0.0
    %3153 = vmatprep.subr.mxu0 0.0
    %3154 = vmatpush1.msra.mxu0 0.0
    %3155 = vmatprep.subr.mxu0 0.0
    %3156 = vmatpush1.msra.mxu0 0.0
    %3157 = vmatprep.subr.mxu0 0.0
    %3158 = vmatpush1.msra.mxu0 0.0
    %3159 = vmatprep.subr.mxu0 0.0
    %3160 = vmatpush1.msra.mxu0 0.0
    %3161 = vmatprep.subr.mxu0 0.0
    %3162 = vmatpush1.msra.mxu0 0.0
    %3163 = vmatprep.subr.mxu0 0.0
    %3164 = vmatpush1.msra.mxu0 0.0
    %3165 = vmatprep.subr.mxu0 0.0
    %3166 = vmatpush1.msra.mxu0 0.0
    %3167 = vmatprep.subr.mxu0 0.0
    %3168 = vmatpush1.msra.mxu0 0.0
    %3169 = vmatprep.mubr.f32.mxu0 0.0
    %3170 = vmatmul.mubr.f32.gmra.mrb[0].mxu0 %v3058
    %v3171 = vpop.f32.mrb[0].mxu0
    %v3172 = vadd.f32 0.0, %v3171
    %v3173 = vpop.f32.mrb[0].mxu0
    %3174 = vmatprep.mubr.f32.mxu0 0.0
    %3175 = vmatmul.mubr.f32.gmra.mrb[0].mxu0 %v3061
    %v3176 = vpop.f32.mrb[0].mxu0
    %v3177 = vadd.f32 0.0, %v3176
    %v3178 = vpop.f32.mrb[0].mxu0
    %3179 = vmatprep.mubr.f32.mxu0 0.0
    %3180 = vmatmul.mubr.f32.gmra.mrb[0].mxu0 %v3064
    %v3181 = vpop.f32.mrb[0].mxu0
    %v3182 = vadd.f32 0.0, %v3181
    %v3183 = vpop.f32.mrb[0].mxu0
    %3184 = vmatprep.mubr.f32.mxu0 0.0
    %3185 = vmatmul.mubr.f32.gmra.mrb[0].mxu0 %v3067
    %v3186 = vpop.f32.mrb[0].mxu0
    %v3187 = vadd.f32 0.0, %v3186
    %v3188 = vpop.f32.mrb[0].mxu0
    %3189 = vmatprep.mubr.f32.mxu0 0.0
    %3190 = vmatmul.mubr.f32.gmra.mrb[0].mxu0 %v3070
    %v3191 = vpop.f32.mrb[0].mxu0
    %v3192 = vadd.f32 0.0, %v3191
    %v3193 = vpop.f32.mrb[0].mxu0
    %3194 = vmatprep.mubr.f32.mxu0 0.0
    %3195 = vmatmul.mubr.f32.gmra.mrb[0].mxu0 %v3073
    %v3196 = vpop.f32.mrb[0].mxu0
    %v3197 = vadd.f32 0.0, %v3196
    %v3198 = vpop.f32.mrb[0].mxu0
    %3199 = vmatprep.mubr.f32.mxu0 0.0
    %3200 = vmatmul.mubr.f32.gmra.mrb[0].mxu0 %v3076
    %v3201 = vpop.f32.mrb[0].mxu0
    %v3202 = vadd.f32 0.0, %v3201
    %v3203 = vpop.f32.mrb[0].mxu0
    %3204 = vmatprep.mubr.f32.mxu0 0.0
    %3205 = vmatmul.mubr.f32.gmra.mrb[0].mxu0 %v3079
    %v3206 = vpop.f32.mrb[0].mxu0
    %v3207 = vadd.f32 0.0, %v3206
    %v3208 = vpop.f32.mrb[0].mxu0
    %3209 = vmatprep.mubr.f32.mxu0 0.0
    %3210 = vmatmul.mubr.f32.gmra.mrb[0].mxu0 %v3082
    %v3211 = vpop.f32.mrb[0].mxu0
    %v3212 = vadd.f32 0.0, %v3211
    %v3213 = vpop.f32.mrb[0].mxu0
    %3214 = vmatprep.mubr.f32.mxu0 0.0
    %3215 = vmatmul.mubr.f32.gmra.mrb[0].mxu0 %v3085
    %v3216 = vpop.f32.mrb[0].mxu0
    %v3217 = vadd.f32 0.0, %v3216
    %v3218 = vpop.f32.mrb[0].mxu0
    %3219 = vmatprep.mubr.f32.mxu0 0.0
    %3220 = vmatmul.mubr.f32.gmra.mrb[0].mxu0 %v3088
    %v3221 = vpop.f32.mrb[0].mxu0
    %v3222 = vadd.f32 0.0, %v3221
    %v3223 = vpop.f32.mrb[0].mxu0
    %3224 = vmatprep.mubr.f32.mxu0 0.0
    %3225 = vmatmul.mubr.f32.gmra.mrb[0].mxu0 %v3091
    %v3226 = vpop.f32.mrb[0].mxu0
    %v3227 = vadd.f32 0.0, %v3226
    %v3228 = vpop.f32.mrb[0].mxu0
    %3229 = vmatprep.mubr.f32.mxu0 0.0
    %3230 = vmatmul.mubr.f32.gmra.mrb[0].mxu0 %v3094
    %v3231 = vpop.f32.mrb[0].mxu0
    %v3232 = vadd.f32 0.0, %v3231
    %v3233 = vpop.f32.mrb[0].mxu0
    %3234 = vmatprep.mubr.f32.mxu0 0.0
    %3235 = vmatmul.mubr.f32.gmra.mrb[0].mxu0 %v3097
    %v3236 = vpop.f32.mrb[0].mxu0
    %v3237 = vadd.f32 0.0, %v3236
    %v3238 = vpop.f32.mrb[0].mxu0
    %3239 = vmatprep.mubr.f32.mxu0 0.0
    %3240 = vmatmul.mubr.f32.gmra.mrb[0].mxu0 %v3100
    %v3241 = vpop.f32.mrb[0].mxu0
    %v3242 = vadd.f32 0.0, %v3241
    %v3243 = vpop.f32.mrb[0].mxu0
    %3244 = vmatprep.mubr.f32.mxu0 0.0
    %3245 = vmatmul.mubr.f32.gmra.mrb[0].mxu0 %v3103
    %v3246 = vpop.f32.mrb[0].mxu0
    %v3247 = vadd.f32 0.0, %v3246
    %v3248 = vpop.f32.mrb[0].mxu0
    %3249 = vdwg.mxu0
    %v3250 = vmul.f32 %v3172, %v130
    %v3251 = vmul.f32 %v3177, %v131
    %v3252 = vmul.f32 %v3182, %v132
    %v3253 = vmul.f32 %v3187, %v133
    %v3254 = vmul.f32 %v3192, %v134
    %v3255 = vmul.f32 %v3197, %v135
    %v3256 = vmul.f32 %v3202, %v136
    %v3257 = vmul.f32 %v3207, %v137
    %v3258 = vmul.f32 %v3212, %v138
    %v3259 = vmul.f32 %v3217, %v139
    %v3260 = vmul.f32 %v3222, %v140
    %v3261 = vmul.f32 %v3227, %v141
    %v3262 = vmul.f32 %v3232, %v142
    %v3263 = vmul.f32 %v3237, %v143
    %v3264 = vmul.f32 %v3242, %v144
    %v3265 = vmul.f32 %v3247, %v145
    %v3266 = vsel %vm150, %v3250, 0.0
    %v3267 = vsel %vm150, %v3251, 0.0
    %v3268 = vadd.f32 %v3266, %v3267
    %v3269 = vsel %vm150, %v3252, 0.0
    %v3270 = vadd.f32 %v3268, %v3269
    %v3271 = vsel %vm150, %v3253, 0.0
    %v3272 = vadd.f32 %v3270, %v3271
    %v3273 = vsel %vm150, %v3254, 0.0
    %v3274 = vadd.f32 %v3272, %v3273
    %v3275 = vsel %vm150, %v3255, 0.0
    %v3276 = vadd.f32 %v3274, %v3275
    %v3277 = vsel %vm150, %v3256, 0.0
    %v3278 = vadd.f32 %v3276, %v3277
    %v3279 = vsel %vm150, %v3257, 0.0
    %v3280 = vadd.f32 %v3278, %v3279
    %v3281 = vsel %vm150, %v3258, 0.0
    %v3282 = vsel %vm150, %v3259, 0.0
    %v3283 = vadd.f32 %v3281, %v3282
    %v3284 = vsel %vm150, %v3260, 0.0
    %v3285 = vadd.f32 %v3283, %v3284
    %v3286 = vsel %vm150, %v3261, 0.0
    %v3287 = vadd.f32 %v3285, %v3286
    %v3288 = vsel %vm150, %v3262, 0.0
    %v3289 = vadd.f32 %v3287, %v3288
    %v3290 = vsel %vm150, %v3263, 0.0
    %v3291 = vadd.f32 %v3289, %v3290
    %v3292 = vsel %vm150, %v3264, 0.0
    %v3293 = vadd.f32 %v3291, %v3292
    %v3294 = vsel %vm150, %v3265, 0.0
    %v3295 = vadd.f32 %v3293, %v3294
    %v3297 = vlaneseq
    %v3298 = vshrl.u32 %v3297, 7
    %v3299 = vsub.s32 0, %v3298
    %v3300 = vrot.slane %v2665, %v3299
    %v3303 = vsel %vm150, %v3280, 0
    %v3306 = vsel %vm150, %v3295, 0
    %3308 = vmatprep.subr.mxu0 0.0
    %3309 = vmatpush1.msra.mxu0 %v2660
    %3310 = vmatprep.subr.mxu0 0.0
    %3311 = vmatpush1.msra.mxu0 %v2661
    %3312 = vmatprep.subr.mxu0 0.0
    %3313 = vmatpush1.msra.mxu0 %v2662
    %3314 = vmatprep.subr.mxu0 0.0
    %3315 = vmatpush1.msra.mxu0 %v2663
    %3316 = vmatprep.subr.mxu0 0.0
    %3317 = vmatpush1.msra.mxu0 0.0
    %3318 = vmatprep.subr.mxu0 0.0
    %3319 = vmatpush1.msra.mxu0 0.0
    %3320 = vmatprep.subr.mxu0 0.0
    %3321 = vmatpush1.msra.mxu0 0.0
    %3322 = vmatprep.subr.mxu0 0.0
    %3323 = vmatpush1.msra.mxu0 0.0
    %3324 = vmatprep.subr.mxu0 0.0
    %3325 = vmatpush1.msra.mxu0 0.0
    %3326 = vmatprep.subr.mxu0 0.0
    %3327 = vmatpush1.msra.mxu0 0.0
    %3328 = vmatprep.subr.mxu0 0.0
    %3329 = vmatpush1.msra.mxu0 0.0
    %3330 = vmatprep.subr.mxu0 0.0
    %3331 = vmatpush1.msra.mxu0 0.0
    %3332 = vmatprep.subr.mxu0 0.0
    %3333 = vmatpush1.msra.mxu0 0.0
    %3334 = vmatprep.subr.mxu0 0.0
    %3335 = vmatpush1.msra.mxu0 0.0
    %3336 = vmatprep.subr.mxu0 0.0
    %3337 = vmatpush1.msra.mxu0 0.0
    %3338 = vmatprep.subr.mxu0 0.0
    %3339 = vmatpush1.msra.mxu0 0.0
    %3340 = vmatprep.subr.mxu0 0.0
    %3341 = vmatpush1.msra.mxu0 0.0
    %3342 = vmatprep.subr.mxu0 0.0
    %3343 = vmatpush1.msra.mxu0 0.0
    %3344 = vmatprep.subr.mxu0 0.0
    %3345 = vmatpush1.msra.mxu0 0.0
    %3346 = vmatprep.subr.mxu0 0.0
    %3347 = vmatpush1.msra.mxu0 0.0
    %3348 = vmatprep.subr.mxu0 0.0
    %3349 = vmatpush1.msra.mxu0 0.0
    %3350 = vmatprep.subr.mxu0 0.0
    %3351 = vmatpush1.msra.mxu0 0.0
    %3352 = vmatprep.subr.mxu0 0.0
    %3353 = vmatpush1.msra.mxu0 0.0
    %3354 = vmatprep.subr.mxu0 0.0
    %3355 = vmatpush1.msra.mxu0 0.0
    %3356 = vmatprep.subr.mxu0 0.0
    %3357 = vmatpush1.msra.mxu0 0.0
    %3358 = vmatprep.subr.mxu0 0.0
    %3359 = vmatpush1.msra.mxu0 0.0
    %3360 = vmatprep.subr.mxu0 0.0
    %3361 = vmatpush1.msra.mxu0 0.0
    %3362 = vmatprep.subr.mxu0 0.0
    %3363 = vmatpush1.msra.mxu0 0.0
    %3364 = vmatprep.subr.mxu0 0.0
    %3365 = vmatpush1.msra.mxu0 0.0
    %3366 = vmatprep.subr.mxu0 0.0
    %3367 = vmatpush1.msra.mxu0 0.0
    %3368 = vmatprep.subr.mxu0 0.0
    %3369 = vmatpush1.msra.mxu0 0.0
    %3370 = vmatprep.subr.mxu0 0.0
    %3371 = vmatpush1.msra.mxu0 0.0
    %3372 = vmatprep.mubr.f32.mxu0 0.0
    %3373 = vmatmul.mubr.f32.gmra.mrb[0].mxu0 %v3303
    %v3374 = vpop.f32.mrb[0].mxu0
    %v3375 = vadd.f32 %v3300, %v3374
    %v3376 = vpop.f32.mrb[0].mxu0
    %3377 = vmatprep.mubr.f32.mxu0 0.0
    %3378 = vmatmul.mubr.f32.gmra.mrb[0].mxu0 %v3306
    %v3379 = vpop.f32.mrb[0].mxu0
    %v3380 = vadd.f32 %v3300, %v3379
    %v3381 = vpop.f32.mrb[0].mxu0
    %3382 = vdwg.mxu0
    %v3383 = vadd.f32 %v3375, %v80
    %v3384 = vadd.f32 %v3380, %v81
    %s3385 = scalar_lea.vmem %s9, 1
    %v3386 = vld [vmem:[%s3385] sm:$0x1]
    %s3387 = scalar_lea.vmem %s10, 1
    %v3388 = vld [vmem:[%s3387] sm:$0x1]
    %v3389 = vsel %vm150, %v3383, 0.0
    %3390 = vadd.xlane.f32.xlu0 %v3389
    %v3391 = vpop.xlane.xlu0 %3390
    %v3392 = vsel %vm150, %v3384, 0.0
    %3393 = vadd.xlane.f32.xlu0 %v3392
    %v3394 = vpop.xlane.xlu0 %3393
    %v3395 = vmul.f32 %v3391, %v1125
    %v3396 = vmul.f32 %v3394, %v1125
    %v3397 = vsub.f32 %v3383, %v3395
    %v3398 = vsub.f32 %v3384, %v3396
    %v3399 = vmul.f32 %v3397, %v3397
    %v3400 = vmul.f32 %v3398, %v3398
    %v3401 = vsel %vm150, %v3399, 0.0
    %3402 = vadd.xlane.f32.xlu0 %v3401
    %v3403 = vpop.xlane.xlu0 %3402
    %v3404 = vsel %vm150, %v3400, 0.0
    %3405 = vadd.xlane.f32.xlu0 %v3404
    %v3406 = vpop.xlane.xlu0 %3405
    %v3407 = vmul.f32 %v3403, %v1125
    %v3408 = vmul.f32 %v3406, %v1125
    %v3409 = vadd.f32 %v3407, 1e-05
    %v3410 = vadd.f32 %v3408, 1e-05
    %v3411 = vrsqrt.pop %v3409
    %v3412 = vrsqrt.pop %v3410
    %v3413 = vmul.f32 %v3397, %v3411
    %v3414 = vmul.f32 %v3398, %v3412
    %v3416 = vlaneseq
    %v3417 = vshrl.u32 %v3416, 7
    %v3418 = vsub.s32 0, %v3417
    %v3419 = vrot.slane %v3386, %v3418
    %v3421 = vmul.f32 %v3413, %v3419
    %v3422 = vmul.f32 %v3414, %v3419
    %v3424 = vlaneseq
    %v3425 = vshrl.u32 %v3424, 7
    %v3426 = vsub.s32 0, %v3425
    %v3427 = vrot.slane %v3388, %v3426
    %v3429 = vadd.f32 %v3421, %v3427
    %v3430 = vadd.f32 %v3422, %v3427
    %s3431 = scalar_lea.vmem %s11, 96
    %v3432 = vld [vmem:[%s3431] sm:$0xff]
    %v3433 = vld [vmem:[%s3431 + $0x8] sm:$0xff]
    %v3434 = vld [vmem:[%s3431 + $0x10] sm:$0xff]
    %v3435 = vld [vmem:[%s3431 + $0x18] sm:$0xff]
    %v3437 = vsel %vm150, %v2417, 0
    %v3440 = vsel %vm150, %v2418, 0
    %3442 = vmatprep.subr.mxu0 0.0
    %3443 = vmatpush1.msra.mxu0 %v3432
    %3444 = vmatprep.subr.mxu0 0.0
    %3445 = vmatpush1.msra.mxu0 %v3433
    %3446 = vmatprep.subr.mxu0 0.0
    %3447 = vmatpush1.msra.mxu0 %v3434
    %3448 = vmatprep.subr.mxu0 0.0
    %3449 = vmatpush1.msra.mxu0 %v3435
    %3450 = vmatprep.subr.mxu0 0.0
    %3451 = vmatpush1.msra.mxu0 0.0
    %3452 = vmatprep.subr.mxu0 0.0
    %3453 = vmatpush1.msra.mxu0 0.0
    %3454 = vmatprep.subr.mxu0 0.0
    %3455 = vmatpush1.msra.mxu0 0.0
    %3456 = vmatprep.subr.mxu0 0.0
    %3457 = vmatpush1.msra.mxu0 0.0
    %3458 = vmatprep.subr.mxu0 0.0
    %3459 = vmatpush1.msra.mxu0 0.0
    %3460 = vmatprep.subr.mxu0 0.0
    %3461 = vmatpush1.msra.mxu0 0.0
    %3462 = vmatprep.subr.mxu0 0.0
    %3463 = vmatpush1.msra.mxu0 0.0
    %3464 = vmatprep.subr.mxu0 0.0
    %3465 = vmatpush1.msra.mxu0 0.0
    %3466 = vmatprep.subr.mxu0 0.0
    %3467 = vmatpush1.msra.mxu0 0.0
    %3468 = vmatprep.subr.mxu0 0.0
    %3469 = vmatpush1.msra.mxu0 0.0
    %3470 = vmatprep.subr.mxu0 0.0
    %3471 = vmatpush1.msra.mxu0 0.0
    %3472 = vmatprep.subr.mxu0 0.0
    %3473 = vmatpush1.msra.mxu0 0.0
    %3474 = vmatprep.subr.mxu0 0.0
    %3475 = vmatpush1.msra.mxu0 0.0
    %3476 = vmatprep.subr.mxu0 0.0
    %3477 = vmatpush1.msra.mxu0 0.0
    %3478 = vmatprep.subr.mxu0 0.0
    %3479 = vmatpush1.msra.mxu0 0.0
    %3480 = vmatprep.subr.mxu0 0.0
    %3481 = vmatpush1.msra.mxu0 0.0
    %3482 = vmatprep.subr.mxu0 0.0
    %3483 = vmatpush1.msra.mxu0 0.0
    %3484 = vmatprep.subr.mxu0 0.0
    %3485 = vmatpush1.msra.mxu0 0.0
    %3486 = vmatprep.subr.mxu0 0.0
    %3487 = vmatpush1.msra.mxu0 0.0
    %3488 = vmatprep.subr.mxu0 0.0
    %3489 = vmatpush1.msra.mxu0 0.0
    %3490 = vmatprep.subr.mxu0 0.0
    %3491 = vmatpush1.msra.mxu0 0.0
    %3492 = vmatprep.subr.mxu0 0.0
    %3493 = vmatpush1.msra.mxu0 0.0
    %3494 = vmatprep.subr.mxu0 0.0
    %3495 = vmatpush1.msra.mxu0 0.0
    %3496 = vmatprep.subr.mxu0 0.0
    %3497 = vmatpush1.msra.mxu0 0.0
    %3498 = vmatprep.subr.mxu0 0.0
    %3499 = vmatpush1.msra.mxu0 0.0
    %3500 = vmatprep.subr.mxu0 0.0
    %3501 = vmatpush1.msra.mxu0 0.0
    %3502 = vmatprep.subr.mxu0 0.0
    %3503 = vmatpush1.msra.mxu0 0.0
    %3504 = vmatprep.subr.mxu0 0.0
    %3505 = vmatpush1.msra.mxu0 0.0
    %3506 = vmatprep.mubr.f32.mxu0 0.0
    %3507 = vmatmul.mubr.f32.gmra.mrb[0].mxu0 %v3437
    %v3508 = vpop.f32.mrb[0].mxu0
    %v3509 = vadd.f32 0.0, %v3508
    %v3510 = vpop.f32.mrb[0].mxu0
    %3511 = vmatprep.mubr.f32.mxu0 0.0
    %3512 = vmatmul.mubr.f32.gmra.mrb[0].mxu0 %v3440
    %v3513 = vpop.f32.mrb[0].mxu0
    %v3514 = vadd.f32 0.0, %v3513
    %v3515 = vpop.f32.mrb[0].mxu0
    %3516 = vdwg.mxu0
    %s3517 = scalar_lea.vmem %s11, 128
    %v3518 = vld [vmem:[%s3517] sm:$0xff]
    %v3519 = vld [vmem:[%s3517 + $0x8] sm:$0xff]
    %v3520 = vld [vmem:[%s3517 + $0x10] sm:$0xff]
    %v3521 = vld [vmem:[%s3517 + $0x18] sm:$0xff]
    %3522 = vmatprep.subr.mxu0 0.0
    %3523 = vmatpush1.msra.mxu0 %v3518
    %3524 = vmatprep.subr.mxu0 0.0
    %3525 = vmatpush1.msra.mxu0 %v3519
    %3526 = vmatprep.subr.mxu0 0.0
    %3527 = vmatpush1.msra.mxu0 %v3520
    %3528 = vmatprep.subr.mxu0 0.0
    %3529 = vmatpush1.msra.mxu0 %v3521
    %3530 = vmatprep.subr.mxu0 0.0
    %3531 = vmatpush1.msra.mxu0 0.0
    %3532 = vmatprep.subr.mxu0 0.0
    %3533 = vmatpush1.msra.mxu0 0.0
    %3534 = vmatprep.subr.mxu0 0.0
    %3535 = vmatpush1.msra.mxu0 0.0
    %3536 = vmatprep.subr.mxu0 0.0
    %3537 = vmatpush1.msra.mxu0 0.0
    %3538 = vmatprep.subr.mxu0 0.0
    %3539 = vmatpush1.msra.mxu0 0.0
    %3540 = vmatprep.subr.mxu0 0.0
    %3541 = vmatpush1.msra.mxu0 0.0
    %3542 = vmatprep.subr.mxu0 0.0
    %3543 = vmatpush1.msra.mxu0 0.0
    %3544 = vmatprep.subr.mxu0 0.0
    %3545 = vmatpush1.msra.mxu0 0.0
    %3546 = vmatprep.subr.mxu0 0.0
    %3547 = vmatpush1.msra.mxu0 0.0
    %3548 = vmatprep.subr.mxu0 0.0
    %3549 = vmatpush1.msra.mxu0 0.0
    %3550 = vmatprep.subr.mxu0 0.0
    %3551 = vmatpush1.msra.mxu0 0.0
    %3552 = vmatprep.subr.mxu0 0.0
    %3553 = vmatpush1.msra.mxu0 0.0
    %3554 = vmatprep.subr.mxu0 0.0
    %3555 = vmatpush1.msra.mxu0 0.0
    %3556 = vmatprep.subr.mxu0 0.0
    %3557 = vmatpush1.msra.mxu0 0.0
    %3558 = vmatprep.subr.mxu0 0.0
    %3559 = vmatpush1.msra.mxu0 0.0
    %3560 = vmatprep.subr.mxu0 0.0
    %3561 = vmatpush1.msra.mxu0 0.0
    %3562 = vmatprep.subr.mxu0 0.0
    %3563 = vmatpush1.msra.mxu0 0.0
    %3564 = vmatprep.subr.mxu0 0.0
    %3565 = vmatpush1.msra.mxu0 0.0
    %3566 = vmatprep.subr.mxu0 0.0
    %3567 = vmatpush1.msra.mxu0 0.0
    %3568 = vmatprep.subr.mxu0 0.0
    %3569 = vmatpush1.msra.mxu0 0.0
    %3570 = vmatprep.subr.mxu0 0.0
    %3571 = vmatpush1.msra.mxu0 0.0
    %3572 = vmatprep.subr.mxu0 0.0
    %3573 = vmatpush1.msra.mxu0 0.0
    %3574 = vmatprep.subr.mxu0 0.0
    %3575 = vmatpush1.msra.mxu0 0.0
    %3576 = vmatprep.subr.mxu0 0.0
    %3577 = vmatpush1.msra.mxu0 0.0
    %3578 = vmatprep.subr.mxu0 0.0
    %3579 = vmatpush1.msra.mxu0 0.0
    %3580 = vmatprep.subr.mxu0 0.0
    %3581 = vmatpush1.msra.mxu0 0.0
    %3582 = vmatprep.subr.mxu0 0.0
    %3583 = vmatpush1.msra.mxu0 0.0
    %3584 = vmatprep.subr.mxu0 0.0
    %3585 = vmatpush1.msra.mxu0 0.0
    %3586 = vmatprep.mubr.f32.mxu0 0.0
    %3587 = vmatmul.mubr.f32.gmra.mrb[0].mxu0 %v152
    %v3588 = vpop.f32.mrb[0].mxu0
    %v3589 = vadd.f32 0.0, %v3588
    %v3590 = vpop.f32.mrb[0].mxu0
    %3591 = vmatprep.mubr.f32.mxu0 0.0
    %3592 = vmatmul.mubr.f32.gmra.mrb[0].mxu0 %v155
    %v3593 = vpop.f32.mrb[0].mxu0
    %v3594 = vadd.f32 0.0, %v3593
    %v3595 = vpop.f32.mrb[0].mxu0
    %3596 = vdwg.mxu0
    %s3597 = scalar_lea.vmem %s11, 160
    %v3598 = vld [vmem:[%s3597] sm:$0xff]
    %v3599 = vld [vmem:[%s3597 + $0x8] sm:$0xff]
    %v3600 = vld [vmem:[%s3597 + $0x10] sm:$0xff]
    %v3601 = vld [vmem:[%s3597 + $0x18] sm:$0xff]
    %v3603 = vsel %vm150, %v3429, 0
    %v3606 = vsel %vm150, %v3430, 0
    %3608 = vmatprep.subr.mxu0 0.0
    %3609 = vmatpush1.msra.mxu0 %v3598
    %3610 = vmatprep.subr.mxu0 0.0
    %3611 = vmatpush1.msra.mxu0 %v3599
    %3612 = vmatprep.subr.mxu0 0.0
    %3613 = vmatpush1.msra.mxu0 %v3600
    %3614 = vmatprep.subr.mxu0 0.0
    %3615 = vmatpush1.msra.mxu0 %v3601
    %3616 = vmatprep.subr.mxu0 0.0
    %3617 = vmatpush1.msra.mxu0 0.0
    %3618 = vmatprep.subr.mxu0 0.0
    %3619 = vmatpush1.msra.mxu0 0.0
    %3620 = vmatprep.subr.mxu0 0.0
    %3621 = vmatpush1.msra.mxu0 0.0
    %3622 = vmatprep.subr.mxu0 0.0
    %3623 = vmatpush1.msra.mxu0 0.0
    %3624 = vmatprep.subr.mxu0 0.0
    %3625 = vmatpush1.msra.mxu0 0.0
    %3626 = vmatprep.subr.mxu0 0.0
    %3627 = vmatpush1.msra.mxu0 0.0
    %3628 = vmatprep.subr.mxu0 0.0
    %3629 = vmatpush1.msra.mxu0 0.0
    %3630 = vmatprep.subr.mxu0 0.0
    %3631 = vmatpush1.msra.mxu0 0.0
    %3632 = vmatprep.subr.mxu0 0.0
    %3633 = vmatpush1.msra.mxu0 0.0
    %3634 = vmatprep.subr.mxu0 0.0
    %3635 = vmatpush1.msra.mxu0 0.0
    %3636 = vmatprep.subr.mxu0 0.0
    %3637 = vmatpush1.msra.mxu0 0.0
    %3638 = vmatprep.subr.mxu0 0.0
    %3639 = vmatpush1.msra.mxu0 0.0
    %3640 = vmatprep.subr.mxu0 0.0
    %3641 = vmatpush1.msra.mxu0 0.0
    %3642 = vmatprep.subr.mxu0 0.0
    %3643 = vmatpush1.msra.mxu0 0.0
    %3644 = vmatprep.subr.mxu0 0.0
    %3645 = vmatpush1.msra.mxu0 0.0
    %3646 = vmatprep.subr.mxu0 0.0
    %3647 = vmatpush1.msra.mxu0 0.0
    %3648 = vmatprep.subr.mxu0 0.0
    %3649 = vmatpush1.msra.mxu0 0.0
    %3650 = vmatprep.subr.mxu0 0.0
    %3651 = vmatpush1.msra.mxu0 0.0
    %3652 = vmatprep.subr.mxu0 0.0
    %3653 = vmatpush1.msra.mxu0 0.0
    %3654 = vmatprep.subr.mxu0 0.0
    %3655 = vmatpush1.msra.mxu0 0.0
    %3656 = vmatprep.subr.mxu0 0.0
    %3657 = vmatpush1.msra.mxu0 0.0
    %3658 = vmatprep.subr.mxu0 0.0
    %3659 = vmatpush1.msra.mxu0 0.0
    %3660 = vmatprep.subr.mxu0 0.0
    %3661 = vmatpush1.msra.mxu0 0.0
    %3662 = vmatprep.subr.mxu0 0.0
    %3663 = vmatpush1.msra.mxu0 0.0
    %3664 = vmatprep.subr.mxu0 0.0
    %3665 = vmatpush1.msra.mxu0 0.0
    %3666 = vmatprep.subr.mxu0 0.0
    %3667 = vmatpush1.msra.mxu0 0.0
    %3668 = vmatprep.subr.mxu0 0.0
    %3669 = vmatpush1.msra.mxu0 0.0
    %3670 = vmatprep.subr.mxu0 0.0
    %3671 = vmatpush1.msra.mxu0 0.0
    %3672 = vmatprep.mubr.f32.mxu0 0.0
    %3673 = vmatmul.mubr.f32.gmra.mrb[0].mxu0 %v3603
    %v3674 = vpop.f32.mrb[0].mxu0
    %v3675 = vadd.f32 0.0, %v3674
    %v3676 = vpop.f32.mrb[0].mxu0
    %3677 = vmatprep.mubr.f32.mxu0 0.0
    %3678 = vmatmul.mubr.f32.gmra.mrb[0].mxu0 %v3606
    %v3679 = vpop.f32.mrb[0].mxu0
    %v3680 = vadd.f32 0.0, %v3679
    %v3681 = vpop.f32.mrb[0].mxu0
    %3682 = vdwg.mxu0
    %s3683 = scalar_lea.vmem %s12, 32
    %v3684 = vld [vmem:[%s3683] sm:$0xff]
    %v3685 = vld [vmem:[%s3683 + $0x8] sm:$0xff]
    %v3686 = vld [vmem:[%s3683 + $0x10] sm:$0xff]
    %v3687 = vld [vmem:[%s3683 + $0x18] sm:$0xff]
    %s3688 = scalar_lea.vmem %s13, 1
    %v3689 = vld [vmem:[%s3688] sm:$0x1]
    %v3690 = vmul.f32 %v3509, %v114
    %v3691 = vmul.f32 %v3509, %v115
    %v3692 = vmul.f32 %v3509, %v116
    %v3693 = vmul.f32 %v3509, %v117
    %v3694 = vmul.f32 %v3509, %v118
    %v3695 = vmul.f32 %v3509, %v119
    %v3696 = vmul.f32 %v3509, %v120
    %v3697 = vmul.f32 %v3509, %v121
    %v3698 = vmul.f32 %v3514, %v122
    %v3699 = vmul.f32 %v3514, %v123
    %v3700 = vmul.f32 %v3514, %v124
    %v3701 = vmul.f32 %v3514, %v125
    %v3702 = vmul.f32 %v3514, %v126
    %v3703 = vmul.f32 %v3514, %v127
    %v3704 = vmul.f32 %v3514, %v128
    %v3705 = vmul.f32 %v3514, %v129
    %v3707 = vsel %vm150, %v3690, 0
    %v3710 = vsel %vm150, %v3691, 0
    %v3713 = vsel %vm150, %v3692, 0
    %v3716 = vsel %vm150, %v3693, 0
    %v3719 = vsel %vm150, %v3694, 0
    %v3722 = vsel %vm150, %v3695, 0
    %v3725 = vsel %vm150, %v3696, 0
    %v3728 = vsel %vm150, %v3697, 0
    %v3731 = vsel %vm150, %v3698, 0
    %v3734 = vsel %vm150, %v3699, 0
    %v3737 = vsel %vm150, %v3700, 0
    %v3740 = vsel %vm150, %v3701, 0
    %v3743 = vsel %vm150, %v3702, 0
    %v3746 = vsel %vm150, %v3703, 0
    %v3749 = vsel %vm150, %v3704, 0
    %v3752 = vsel %vm150, %v3705, 0
    %v3755 = vsel %vm150, %v3589, 0
    %v3758 = vsel %vm150, %v3594, 0
    %3760 = vmatprep.subr.mxu0 0.0
    %3761 = vmatpush1.xpose.msra.mxu0 %v3755
    %3762 = vmatprep.subr.mxu0 0.0
    %3763 = vmatpush1.xpose.msra.mxu0 %v3758
    %3764 = vmatprep.subr.mxu0 0.0
    %3765 = vmatpush1.xpose.msra.mxu0 0.0
    %3766 = vmatprep.subr.mxu0 0.0
    %3767 = vmatpush1.xpose.msra.mxu0 0.0
    %3768 = vmatprep.subr.mxu0 0.0
    %3769 = vmatpush1.xpose.msra.mxu0 0.0
    %3770 = vmatprep.subr.mxu0 0.0
    %3771 = vmatpush1.xpose.msra.mxu0 0.0
    %3772 = vmatprep.subr.mxu0 0.0
    %3773 = vmatpush1.xpose.msra.mxu0 0.0
    %3774 = vmatprep.subr.mxu0 0.0
    %3775 = vmatpush1.xpose.msra.mxu0 0.0
    %3776 = vmatprep.subr.mxu0 0.0
    %3777 = vmatpush1.xpose.msra.mxu0 0.0
    %3778 = vmatprep.subr.mxu0 0.0
    %3779 = vmatpush1.xpose.msra.mxu0 0.0
    %3780 = vmatprep.subr.mxu0 0.0
    %3781 = vmatpush1.xpose.msra.mxu0 0.0
    %3782 = vmatprep.subr.mxu0 0.0
    %3783 = vmatpush1.xpose.msra.mxu0 0.0
    %3784 = vmatprep.subr.mxu0 0.0
    %3785 = vmatpush1.xpose.msra.mxu0 0.0
    %3786 = vmatprep.subr.mxu0 0.0
    %3787 = vmatpush1.xpose.msra.mxu0 0.0
    %3788 = vmatprep.subr.mxu0 0.0
    %3789 = vmatpush1.xpose.msra.mxu0 0.0
    %3790 = vmatprep.subr.mxu0 0.0
    %3791 = vmatpush1.xpose.msra.mxu0 0.0
    %3792 = vmatprep.subr.mxu0 0.0
    %3793 = vmatpush1.xpose.msra.mxu0 0.0
    %3794 = vmatprep.subr.mxu0 0.0
    %3795 = vmatpush1.xpose.msra.mxu0 0.0
    %3796 = vmatprep.subr.mxu0 0.0
    %3797 = vmatpush1.xpose.msra.mxu0 0.0
    %3798 = vmatprep.subr.mxu0 0.0
    %3799 = vmatpush1.xpose.msra.mxu0 0.0
    %3800 = vmatprep.subr.mxu0 0.0
    %3801 = vmatpush1.xpose.msra.mxu0 0.0
    %3802 = vmatprep.subr.mxu0 0.0
    %3803 = vmatpush1.xpose.msra.mxu0 0.0
    %3804 = vmatprep.subr.mxu0 0.0
    %3805 = vmatpush1.xpose.msra.mxu0 0.0
    %3806 = vmatprep.subr.mxu0 0.0
    %3807 = vmatpush1.xpose.msra.mxu0 0.0
    %3808 = vmatprep.subr.mxu0 0.0
    %3809 = vmatpush1.xpose.msra.mxu0 0.0
    %3810 = vmatprep.subr.mxu0 0.0
    %3811 = vmatpush1.xpose.msra.mxu0 0.0
    %3812 = vmatprep.subr.mxu0 0.0
    %3813 = vmatpush1.xpose.msra.mxu0 0.0
    %3814 = vmatprep.subr.mxu0 0.0
    %3815 = vmatpush1.xpose.msra.mxu0 0.0
    %3816 = vmatprep.subr.mxu0 0.0
    %3817 = vmatpush1.xpose.msra.mxu0 0.0
    %3818 = vmatprep.subr.mxu0 0.0
    %3819 = vmatpush1.xpose.msra.mxu0 0.0
    %3820 = vmatprep.subr.mxu0 0.0
    %3821 = vmatpush1.xpose.msra.mxu0 0.0
    %3822 = vmatprep.subr.mxu0 0.0
    %3823 = vmatpush1.xpose.msra.mxu0 0.0
    %3824 = vmatprep.mubr.f32.mxu0 0.0
    %3825 = vmatmul.mubr.f32.gmra.mrb[0].mxu0 %v3707
    %v3826 = vpop.f32.mrb[0].mxu0
    %v3827 = vadd.f32 %v98, %v3826
    %v3828 = vpop.f32.mrb[0].mxu0
    %3829 = vmatprep.mubr.f32.mxu0 0.0
    %3830 = vmatmul.mubr.f32.gmra.mrb[0].mxu0 %v3710
    %v3831 = vpop.f32.mrb[0].mxu0
    %v3832 = vadd.f32 %v99, %v3831
    %v3833 = vpop.f32.mrb[0].mxu0
    %3834 = vmatprep.mubr.f32.mxu0 0.0
    %3835 = vmatmul.mubr.f32.gmra.mrb[0].mxu0 %v3713
    %v3836 = vpop.f32.mrb[0].mxu0
    %v3837 = vadd.f32 %v100, %v3836
    %v3838 = vpop.f32.mrb[0].mxu0
    %3839 = vmatprep.mubr.f32.mxu0 0.0
    %3840 = vmatmul.mubr.f32.gmra.mrb[0].mxu0 %v3716
    %v3841 = vpop.f32.mrb[0].mxu0
    %v3842 = vadd.f32 %v101, %v3841
    %v3843 = vpop.f32.mrb[0].mxu0
    %3844 = vmatprep.mubr.f32.mxu0 0.0
    %3845 = vmatmul.mubr.f32.gmra.mrb[0].mxu0 %v3719
    %v3846 = vpop.f32.mrb[0].mxu0
    %v3847 = vadd.f32 %v102, %v3846
    %v3848 = vpop.f32.mrb[0].mxu0
    %3849 = vmatprep.mubr.f32.mxu0 0.0
    %3850 = vmatmul.mubr.f32.gmra.mrb[0].mxu0 %v3722
    %v3851 = vpop.f32.mrb[0].mxu0
    %v3852 = vadd.f32 %v103, %v3851
    %v3853 = vpop.f32.mrb[0].mxu0
    %3854 = vmatprep.mubr.f32.mxu0 0.0
    %3855 = vmatmul.mubr.f32.gmra.mrb[0].mxu0 %v3725
    %v3856 = vpop.f32.mrb[0].mxu0
    %v3857 = vadd.f32 %v104, %v3856
    %v3858 = vpop.f32.mrb[0].mxu0
    %3859 = vmatprep.mubr.f32.mxu0 0.0
    %3860 = vmatmul.mubr.f32.gmra.mrb[0].mxu0 %v3728
    %v3861 = vpop.f32.mrb[0].mxu0
    %v3862 = vadd.f32 %v105, %v3861
    %v3863 = vpop.f32.mrb[0].mxu0
    %3864 = vmatprep.mubr.f32.mxu0 0.0
    %3865 = vmatmul.mubr.f32.gmra.mrb[0].mxu0 %v3731
    %v3866 = vpop.f32.mrb[0].mxu0
    %v3867 = vadd.f32 %v106, %v3866
    %v3868 = vpop.f32.mrb[0].mxu0
    %3869 = vmatprep.mubr.f32.mxu0 0.0
    %3870 = vmatmul.mubr.f32.gmra.mrb[0].mxu0 %v3734
    %v3871 = vpop.f32.mrb[0].mxu0
    %v3872 = vadd.f32 %v107, %v3871
    %v3873 = vpop.f32.mrb[0].mxu0
    %3874 = vmatprep.mubr.f32.mxu0 0.0
    %3875 = vmatmul.mubr.f32.gmra.mrb[0].mxu0 %v3737
    %v3876 = vpop.f32.mrb[0].mxu0
    %v3877 = vadd.f32 %v108, %v3876
    %v3878 = vpop.f32.mrb[0].mxu0
    %3879 = vmatprep.mubr.f32.mxu0 0.0
    %3880 = vmatmul.mubr.f32.gmra.mrb[0].mxu0 %v3740
    %v3881 = vpop.f32.mrb[0].mxu0
    %v3882 = vadd.f32 %v109, %v3881
    %v3883 = vpop.f32.mrb[0].mxu0
    %3884 = vmatprep.mubr.f32.mxu0 0.0
    %3885 = vmatmul.mubr.f32.gmra.mrb[0].mxu0 %v3743
    %v3886 = vpop.f32.mrb[0].mxu0
    %v3887 = vadd.f32 %v110, %v3886
    %v3888 = vpop.f32.mrb[0].mxu0
    %3889 = vmatprep.mubr.f32.mxu0 0.0
    %3890 = vmatmul.mubr.f32.gmra.mrb[0].mxu0 %v3746
    %v3891 = vpop.f32.mrb[0].mxu0
    %v3892 = vadd.f32 %v111, %v3891
    %v3893 = vpop.f32.mrb[0].mxu0
    %3894 = vmatprep.mubr.f32.mxu0 0.0
    %3895 = vmatmul.mubr.f32.gmra.mrb[0].mxu0 %v3749
    %v3896 = vpop.f32.mrb[0].mxu0
    %v3897 = vadd.f32 %v112, %v3896
    %v3898 = vpop.f32.mrb[0].mxu0
    %3899 = vmatprep.mubr.f32.mxu0 0.0
    %3900 = vmatmul.mubr.f32.gmra.mrb[0].mxu0 %v3752
    %v3901 = vpop.f32.mrb[0].mxu0
    %v3902 = vadd.f32 %v113, %v3901
    %v3903 = vpop.f32.mrb[0].mxu0
    %3904 = vdwg.mxu0
    %v3905 = vsel %vm612, %v3827, -inf
    %3906 = vmax.xlane.f32.xlu0 %v3905
    %v3907 = vpop.xlane.xlu0 %3906
    %v3908 = vsel %vm612, %v3832, -inf
    %3909 = vmax.xlane.f32.xlu0 %v3908
    %v3910 = vpop.xlane.xlu0 %3909
    %v3911 = vsel %vm612, %v3837, -inf
    %3912 = vmax.xlane.f32.xlu0 %v3911
    %v3913 = vpop.xlane.xlu0 %3912
    %v3914 = vsel %vm612, %v3842, -inf
    %3915 = vmax.xlane.f32.xlu0 %v3914
    %v3916 = vpop.xlane.xlu0 %3915
    %v3917 = vsel %vm612, %v3847, -inf
    %3918 = vmax.xlane.f32.xlu0 %v3917
    %v3919 = vpop.xlane.xlu0 %3918
    %v3920 = vsel %vm612, %v3852, -inf
    %3921 = vmax.xlane.f32.xlu0 %v3920
    %v3922 = vpop.xlane.xlu0 %3921
    %v3923 = vsel %vm612, %v3857, -inf
    %3924 = vmax.xlane.f32.xlu0 %v3923
    %v3925 = vpop.xlane.xlu0 %3924
    %v3926 = vsel %vm612, %v3862, -inf
    %3927 = vmax.xlane.f32.xlu0 %v3926
    %v3928 = vpop.xlane.xlu0 %3927
    %v3929 = vsel %vm612, %v3867, -inf
    %3930 = vmax.xlane.f32.xlu0 %v3929
    %v3931 = vpop.xlane.xlu0 %3930
    %v3932 = vsel %vm612, %v3872, -inf
    %3933 = vmax.xlane.f32.xlu0 %v3932
    %v3934 = vpop.xlane.xlu0 %3933
    %v3935 = vsel %vm612, %v3877, -inf
    %3936 = vmax.xlane.f32.xlu0 %v3935
    %v3937 = vpop.xlane.xlu0 %3936
    %v3938 = vsel %vm612, %v3882, -inf
    %3939 = vmax.xlane.f32.xlu0 %v3938
    %v3940 = vpop.xlane.xlu0 %3939
    %v3941 = vsel %vm612, %v3887, -inf
    %3942 = vmax.xlane.f32.xlu0 %v3941
    %v3943 = vpop.xlane.xlu0 %3942
    %v3944 = vsel %vm612, %v3892, -inf
    %3945 = vmax.xlane.f32.xlu0 %v3944
    %v3946 = vpop.xlane.xlu0 %3945
    %v3947 = vsel %vm612, %v3897, -inf
    %3948 = vmax.xlane.f32.xlu0 %v3947
    %v3949 = vpop.xlane.xlu0 %3948
    %v3950 = vsel %vm612, %v3902, -inf
    %3951 = vmax.xlane.f32.xlu0 %v3950
    %v3952 = vpop.xlane.xlu0 %3951
    %v3953 = vsub.f32 %v3827, %v3907
    %v3954 = vsub.f32 %v3832, %v3910
    %v3955 = vsub.f32 %v3837, %v3913
    %v3956 = vsub.f32 %v3842, %v3916
    %v3957 = vsub.f32 %v3847, %v3919
    %v3958 = vsub.f32 %v3852, %v3922
    %v3959 = vsub.f32 %v3857, %v3925
    %v3960 = vsub.f32 %v3862, %v3928
    %v3961 = vsub.f32 %v3867, %v3931
    %v3962 = vsub.f32 %v3872, %v3934
    %v3963 = vsub.f32 %v3877, %v3937
    %v3964 = vsub.f32 %v3882, %v3940
    %v3965 = vsub.f32 %v3887, %v3943
    %v3966 = vsub.f32 %v3892, %v3946
    %v3967 = vsub.f32 %v3897, %v3949
    %v3968 = vsub.f32 %v3902, %v3952
    %v3969 = vmul.f32 %v3953, 1.442695
    %v3970 = vpow.pop %v3969
    %v3971 = vmul.f32 %v3954, 1.442695
    %v3972 = vpow.pop %v3971
    %v3973 = vmul.f32 %v3955, 1.442695
    %v3974 = vpow.pop %v3973
    %v3975 = vmul.f32 %v3956, 1.442695
    %v3976 = vpow.pop %v3975
    %v3977 = vmul.f32 %v3957, 1.442695
    %v3978 = vpow.pop %v3977
    %v3979 = vmul.f32 %v3958, 1.442695
    %v3980 = vpow.pop %v3979
    %v3981 = vmul.f32 %v3959, 1.442695
    %v3982 = vpow.pop %v3981
    %v3983 = vmul.f32 %v3960, 1.442695
    %v3984 = vpow.pop %v3983
    %v3985 = vmul.f32 %v3961, 1.442695
    %v3986 = vpow.pop %v3985
    %v3987 = vmul.f32 %v3962, 1.442695
    %v3988 = vpow.pop %v3987
    %v3989 = vmul.f32 %v3963, 1.442695
    %v3990 = vpow.pop %v3989
    %v3991 = vmul.f32 %v3964, 1.442695
    %v3992 = vpow.pop %v3991
    %v3993 = vmul.f32 %v3965, 1.442695
    %v3994 = vpow.pop %v3993
    %v3995 = vmul.f32 %v3966, 1.442695
    %v3996 = vpow.pop %v3995
    %v3997 = vmul.f32 %v3967, 1.442695
    %v3998 = vpow.pop %v3997
    %v3999 = vmul.f32 %v3968, 1.442695
    %v4000 = vpow.pop %v3999
    %v4001 = vsel %vm612, %v3970, 0.0
    %4002 = vadd.xlane.f32.xlu0 %v4001
    %v4003 = vpop.xlane.xlu0 %4002
    %v4004 = vsel %vm612, %v3972, 0.0
    %4005 = vadd.xlane.f32.xlu0 %v4004
    %v4006 = vpop.xlane.xlu0 %4005
    %v4007 = vsel %vm612, %v3974, 0.0
    %4008 = vadd.xlane.f32.xlu0 %v4007
    %v4009 = vpop.xlane.xlu0 %4008
    %v4010 = vsel %vm612, %v3976, 0.0
    %4011 = vadd.xlane.f32.xlu0 %v4010
    %v4012 = vpop.xlane.xlu0 %4011
    %v4013 = vsel %vm612, %v3978, 0.0
    %4014 = vadd.xlane.f32.xlu0 %v4013
    %v4015 = vpop.xlane.xlu0 %4014
    %v4016 = vsel %vm612, %v3980, 0.0
    %4017 = vadd.xlane.f32.xlu0 %v4016
    %v4018 = vpop.xlane.xlu0 %4017
    %v4019 = vsel %vm612, %v3982, 0.0
    %4020 = vadd.xlane.f32.xlu0 %v4019
    %v4021 = vpop.xlane.xlu0 %4020
    %v4022 = vsel %vm612, %v3984, 0.0
    %4023 = vadd.xlane.f32.xlu0 %v4022
    %v4024 = vpop.xlane.xlu0 %4023
    %v4025 = vsel %vm612, %v3986, 0.0
    %4026 = vadd.xlane.f32.xlu0 %v4025
    %v4027 = vpop.xlane.xlu0 %4026
    %v4028 = vsel %vm612, %v3988, 0.0
    %4029 = vadd.xlane.f32.xlu0 %v4028
    %v4030 = vpop.xlane.xlu0 %4029
    %v4031 = vsel %vm612, %v3990, 0.0
    %4032 = vadd.xlane.f32.xlu0 %v4031
    %v4033 = vpop.xlane.xlu0 %4032
    %v4034 = vsel %vm612, %v3992, 0.0
    %4035 = vadd.xlane.f32.xlu0 %v4034
    %v4036 = vpop.xlane.xlu0 %4035
    %v4037 = vsel %vm612, %v3994, 0.0
    %4038 = vadd.xlane.f32.xlu0 %v4037
    %v4039 = vpop.xlane.xlu0 %4038
    %v4040 = vsel %vm612, %v3996, 0.0
    %4041 = vadd.xlane.f32.xlu0 %v4040
    %v4042 = vpop.xlane.xlu0 %4041
    %v4043 = vsel %vm612, %v3998, 0.0
    %4044 = vadd.xlane.f32.xlu0 %v4043
    %v4045 = vpop.xlane.xlu0 %4044
    %v4046 = vsel %vm612, %v4000, 0.0
    %4047 = vadd.xlane.f32.xlu0 %v4046
    %v4048 = vpop.xlane.xlu0 %4047
    %v4049 = vrcp.pop %v4003
    %v4050 = vrcp.pop %v4006
    %v4051 = vrcp.pop %v4009
    %v4052 = vrcp.pop %v4012
    %v4053 = vrcp.pop %v4015
    %v4054 = vrcp.pop %v4018
    %v4055 = vrcp.pop %v4021
    %v4056 = vrcp.pop %v4024
    %v4057 = vrcp.pop %v4027
    %v4058 = vrcp.pop %v4030
    %v4059 = vrcp.pop %v4033
    %v4060 = vrcp.pop %v4036
    %v4061 = vrcp.pop %v4039
    %v4062 = vrcp.pop %v4042
    %v4063 = vrcp.pop %v4045
    %v4064 = vrcp.pop %v4048
    %v4065 = vmul.f32 %v3970, %v4049
    %v4066 = vmul.f32 %v3972, %v4050
    %v4067 = vmul.f32 %v3974, %v4051
    %v4068 = vmul.f32 %v3976, %v4052
    %v4069 = vmul.f32 %v3978, %v4053
    %v4070 = vmul.f32 %v3980, %v4054
    %v4071 = vmul.f32 %v3982, %v4055
    %v4072 = vmul.f32 %v3984, %v4056
    %v4073 = vmul.f32 %v3986, %v4057
    %v4074 = vmul.f32 %v3988, %v4058
    %v4075 = vmul.f32 %v3990, %v4059
    %v4076 = vmul.f32 %v3992, %v4060
    %v4077 = vmul.f32 %v3994, %v4061
    %v4078 = vmul.f32 %v3996, %v4062
    %v4079 = vmul.f32 %v3998, %v4063
    %v4080 = vmul.f32 %v4000, %v4064
    %v4082 = vsel %vm612, %v4065, 0
    %v4085 = vsel %vm612, %v4066, 0
    %v4088 = vsel %vm612, %v4067, 0
    %v4091 = vsel %vm612, %v4068, 0
    %v4094 = vsel %vm612, %v4069, 0
    %v4097 = vsel %vm612, %v4070, 0
    %v4100 = vsel %vm612, %v4071, 0
    %v4103 = vsel %vm612, %v4072, 0
    %v4106 = vsel %vm612, %v4073, 0
    %v4109 = vsel %vm612, %v4074, 0
    %v4112 = vsel %vm612, %v4075, 0
    %v4115 = vsel %vm612, %v4076, 0
    %v4118 = vsel %vm612, %v4077, 0
    %v4121 = vsel %vm612, %v4078, 0
    %v4124 = vsel %vm612, %v4079, 0
    %v4127 = vsel %vm612, %v4080, 0
    %4129 = vmatprep.subr.mxu0 0.0
    %4130 = vmatpush1.msra.mxu0 %v3675
    %4131 = vmatprep.subr.mxu0 0.0
    %4132 = vmatpush1.msra.mxu0 %v3680
    %4133 = vmatprep.subr.mxu0 0.0
    %4134 = vmatpush1.msra.mxu0 0.0
    %4135 = vmatprep.subr.mxu0 0.0
    %4136 = vmatpush1.msra.mxu0 0.0
    %4137 = vmatprep.subr.mxu0 0.0
    %4138 = vmatpush1.msra.mxu0 0.0
    %4139 = vmatprep.subr.mxu0 0.0
    %4140 = vmatpush1.msra.mxu0 0.0
    %4141 = vmatprep.subr.mxu0 0.0
    %4142 = vmatpush1.msra.mxu0 0.0
    %4143 = vmatprep.subr.mxu0 0.0
    %4144 = vmatpush1.msra.mxu0 0.0
    %4145 = vmatprep.subr.mxu0 0.0
    %4146 = vmatpush1.msra.mxu0 0.0
    %4147 = vmatprep.subr.mxu0 0.0
    %4148 = vmatpush1.msra.mxu0 0.0
    %4149 = vmatprep.subr.mxu0 0.0
    %4150 = vmatpush1.msra.mxu0 0.0
    %4151 = vmatprep.subr.mxu0 0.0
    %4152 = vmatpush1.msra.mxu0 0.0
    %4153 = vmatprep.subr.mxu0 0.0
    %4154 = vmatpush1.msra.mxu0 0.0
    %4155 = vmatprep.subr.mxu0 0.0
    %4156 = vmatpush1.msra.mxu0 0.0
    %4157 = vmatprep.subr.mxu0 0.0
    %4158 = vmatpush1.msra.mxu0 0.0
    %4159 = vmatprep.subr.mxu0 0.0
    %4160 = vmatpush1.msra.mxu0 0.0
    %4161 = vmatprep.subr.mxu0 0.0
    %4162 = vmatpush1.msra.mxu0 0.0
    %4163 = vmatprep.subr.mxu0 0.0
    %4164 = vmatpush1.msra.mxu0 0.0
    %4165 = vmatprep.subr.mxu0 0.0
    %4166 = vmatpush1.msra.mxu0 0.0
    %4167 = vmatprep.subr.mxu0 0.0
    %4168 = vmatpush1.msra.mxu0 0.0
    %4169 = vmatprep.subr.mxu0 0.0
    %4170 = vmatpush1.msra.mxu0 0.0
    %4171 = vmatprep.subr.mxu0 0.0
    %4172 = vmatpush1.msra.mxu0 0.0
    %4173 = vmatprep.subr.mxu0 0.0
    %4174 = vmatpush1.msra.mxu0 0.0
    %4175 = vmatprep.subr.mxu0 0.0
    %4176 = vmatpush1.msra.mxu0 0.0
    %4177 = vmatprep.subr.mxu0 0.0
    %4178 = vmatpush1.msra.mxu0 0.0
    %4179 = vmatprep.subr.mxu0 0.0
    %4180 = vmatpush1.msra.mxu0 0.0
    %4181 = vmatprep.subr.mxu0 0.0
    %4182 = vmatpush1.msra.mxu0 0.0
    %4183 = vmatprep.subr.mxu0 0.0
    %4184 = vmatpush1.msra.mxu0 0.0
    %4185 = vmatprep.subr.mxu0 0.0
    %4186 = vmatpush1.msra.mxu0 0.0
    %4187 = vmatprep.subr.mxu0 0.0
    %4188 = vmatpush1.msra.mxu0 0.0
    %4189 = vmatprep.subr.mxu0 0.0
    %4190 = vmatpush1.msra.mxu0 0.0
    %4191 = vmatprep.subr.mxu0 0.0
    %4192 = vmatpush1.msra.mxu0 0.0
    %4193 = vmatprep.mubr.f32.mxu0 0.0
    %4194 = vmatmul.mubr.f32.gmra.mrb[0].mxu0 %v4082
    %v4195 = vpop.f32.mrb[0].mxu0
    %v4196 = vadd.f32 0.0, %v4195
    %v4197 = vpop.f32.mrb[0].mxu0
    %4198 = vmatprep.mubr.f32.mxu0 0.0
    %4199 = vmatmul.mubr.f32.gmra.mrb[0].mxu0 %v4085
    %v4200 = vpop.f32.mrb[0].mxu0
    %v4201 = vadd.f32 0.0, %v4200
    %v4202 = vpop.f32.mrb[0].mxu0
    %4203 = vmatprep.mubr.f32.mxu0 0.0
    %4204 = vmatmul.mubr.f32.gmra.mrb[0].mxu0 %v4088
    %v4205 = vpop.f32.mrb[0].mxu0
    %v4206 = vadd.f32 0.0, %v4205
    %v4207 = vpop.f32.mrb[0].mxu0
    %4208 = vmatprep.mubr.f32.mxu0 0.0
    %4209 = vmatmul.mubr.f32.gmra.mrb[0].mxu0 %v4091
    %v4210 = vpop.f32.mrb[0].mxu0
    %v4211 = vadd.f32 0.0, %v4210
    %v4212 = vpop.f32.mrb[0].mxu0
    %4213 = vmatprep.mubr.f32.mxu0 0.0
    %4214 = vmatmul.mubr.f32.gmra.mrb[0].mxu0 %v4094
    %v4215 = vpop.f32.mrb[0].mxu0
    %v4216 = vadd.f32 0.0, %v4215
    %v4217 = vpop.f32.mrb[0].mxu0
    %4218 = vmatprep.mubr.f32.mxu0 0.0
    %4219 = vmatmul.mubr.f32.gmra.mrb[0].mxu0 %v4097
    %v4220 = vpop.f32.mrb[0].mxu0
    %v4221 = vadd.f32 0.0, %v4220
    %v4222 = vpop.f32.mrb[0].mxu0
    %4223 = vmatprep.mubr.f32.mxu0 0.0
    %4224 = vmatmul.mubr.f32.gmra.mrb[0].mxu0 %v4100
    %v4225 = vpop.f32.mrb[0].mxu0
    %v4226 = vadd.f32 0.0, %v4225
    %v4227 = vpop.f32.mrb[0].mxu0
    %4228 = vmatprep.mubr.f32.mxu0 0.0
    %4229 = vmatmul.mubr.f32.gmra.mrb[0].mxu0 %v4103
    %v4230 = vpop.f32.mrb[0].mxu0
    %v4231 = vadd.f32 0.0, %v4230
    %v4232 = vpop.f32.mrb[0].mxu0
    %4233 = vmatprep.mubr.f32.mxu0 0.0
    %4234 = vmatmul.mubr.f32.gmra.mrb[0].mxu0 %v4106
    %v4235 = vpop.f32.mrb[0].mxu0
    %v4236 = vadd.f32 0.0, %v4235
    %v4237 = vpop.f32.mrb[0].mxu0
    %4238 = vmatprep.mubr.f32.mxu0 0.0
    %4239 = vmatmul.mubr.f32.gmra.mrb[0].mxu0 %v4109
    %v4240 = vpop.f32.mrb[0].mxu0
    %v4241 = vadd.f32 0.0, %v4240
    %v4242 = vpop.f32.mrb[0].mxu0
    %4243 = vmatprep.mubr.f32.mxu0 0.0
    %4244 = vmatmul.mubr.f32.gmra.mrb[0].mxu0 %v4112
    %v4245 = vpop.f32.mrb[0].mxu0
    %v4246 = vadd.f32 0.0, %v4245
    %v4247 = vpop.f32.mrb[0].mxu0
    %4248 = vmatprep.mubr.f32.mxu0 0.0
    %4249 = vmatmul.mubr.f32.gmra.mrb[0].mxu0 %v4115
    %v4250 = vpop.f32.mrb[0].mxu0
    %v4251 = vadd.f32 0.0, %v4250
    %v4252 = vpop.f32.mrb[0].mxu0
    %4253 = vmatprep.mubr.f32.mxu0 0.0
    %4254 = vmatmul.mubr.f32.gmra.mrb[0].mxu0 %v4118
    %v4255 = vpop.f32.mrb[0].mxu0
    %v4256 = vadd.f32 0.0, %v4255
    %v4257 = vpop.f32.mrb[0].mxu0
    %4258 = vmatprep.mubr.f32.mxu0 0.0
    %4259 = vmatmul.mubr.f32.gmra.mrb[0].mxu0 %v4121
    %v4260 = vpop.f32.mrb[0].mxu0
    %v4261 = vadd.f32 0.0, %v4260
    %v4262 = vpop.f32.mrb[0].mxu0
    %4263 = vmatprep.mubr.f32.mxu0 0.0
    %4264 = vmatmul.mubr.f32.gmra.mrb[0].mxu0 %v4124
    %v4265 = vpop.f32.mrb[0].mxu0
    %v4266 = vadd.f32 0.0, %v4265
    %v4267 = vpop.f32.mrb[0].mxu0
    %4268 = vmatprep.mubr.f32.mxu0 0.0
    %4269 = vmatmul.mubr.f32.gmra.mrb[0].mxu0 %v4127
    %v4270 = vpop.f32.mrb[0].mxu0
    %v4271 = vadd.f32 0.0, %v4270
    %v4272 = vpop.f32.mrb[0].mxu0
    %4273 = vdwg.mxu0
    %v4274 = vmul.f32 %v4196, %v130
    %v4275 = vmul.f32 %v4201, %v131
    %v4276 = vmul.f32 %v4206, %v132
    %v4277 = vmul.f32 %v4211, %v133
    %v4278 = vmul.f32 %v4216, %v134
    %v4279 = vmul.f32 %v4221, %v135
    %v4280 = vmul.f32 %v4226, %v136
    %v4281 = vmul.f32 %v4231, %v137
    %v4282 = vmul.f32 %v4236, %v138
    %v4283 = vmul.f32 %v4241, %v139
    %v4284 = vmul.f32 %v4246, %v140
    %v4285 = vmul.f32 %v4251, %v141
    %v4286 = vmul.f32 %v4256, %v142
    %v4287 = vmul.f32 %v4261, %v143
    %v4288 = vmul.f32 %v4266, %v144
    %v4289 = vmul.f32 %v4271, %v145
    %v4290 = vsel %vm150, %v4274, 0.0
    %v4291 = vsel %vm150, %v4275, 0.0
    %v4292 = vadd.f32 %v4290, %v4291
    %v4293 = vsel %vm150, %v4276, 0.0
    %v4294 = vadd.f32 %v4292, %v4293
    %v4295 = vsel %vm150, %v4277, 0.0
    %v4296 = vadd.f32 %v4294, %v4295
    %v4297 = vsel %vm150, %v4278, 0.0
    %v4298 = vadd.f32 %v4296, %v4297
    %v4299 = vsel %vm150, %v4279, 0.0
    %v4300 = vadd.f32 %v4298, %v4299
    %v4301 = vsel %vm150, %v4280, 0.0
    %v4302 = vadd.f32 %v4300, %v4301
    %v4303 = vsel %vm150, %v4281, 0.0
    %v4304 = vadd.f32 %v4302, %v4303
    %v4305 = vsel %vm150, %v4282, 0.0
    %v4306 = vsel %vm150, %v4283, 0.0
    %v4307 = vadd.f32 %v4305, %v4306
    %v4308 = vsel %vm150, %v4284, 0.0
    %v4309 = vadd.f32 %v4307, %v4308
    %v4310 = vsel %vm150, %v4285, 0.0
    %v4311 = vadd.f32 %v4309, %v4310
    %v4312 = vsel %vm150, %v4286, 0.0
    %v4313 = vadd.f32 %v4311, %v4312
    %v4314 = vsel %vm150, %v4287, 0.0
    %v4315 = vadd.f32 %v4313, %v4314
    %v4316 = vsel %vm150, %v4288, 0.0
    %v4317 = vadd.f32 %v4315, %v4316
    %v4318 = vsel %vm150, %v4289, 0.0
    %v4319 = vadd.f32 %v4317, %v4318
    %v4321 = vlaneseq
    %v4322 = vshrl.u32 %v4321, 7
    %v4323 = vsub.s32 0, %v4322
    %v4324 = vrot.slane %v3689, %v4323
    %v4327 = vsel %vm150, %v4304, 0
    %v4330 = vsel %vm150, %v4319, 0
    %4332 = vmatprep.subr.mxu0 0.0
    %4333 = vmatpush1.msra.mxu0 %v3684
    %4334 = vmatprep.subr.mxu0 0.0
    %4335 = vmatpush1.msra.mxu0 %v3685
    %4336 = vmatprep.subr.mxu0 0.0
    %4337 = vmatpush1.msra.mxu0 %v3686
    %4338 = vmatprep.subr.mxu0 0.0
    %4339 = vmatpush1.msra.mxu0 %v3687
    %4340 = vmatprep.subr.mxu0 0.0
    %4341 = vmatpush1.msra.mxu0 0.0
    %4342 = vmatprep.subr.mxu0 0.0
    %4343 = vmatpush1.msra.mxu0 0.0
    %4344 = vmatprep.subr.mxu0 0.0
    %4345 = vmatpush1.msra.mxu0 0.0
    %4346 = vmatprep.subr.mxu0 0.0
    %4347 = vmatpush1.msra.mxu0 0.0
    %4348 = vmatprep.subr.mxu0 0.0
    %4349 = vmatpush1.msra.mxu0 0.0
    %4350 = vmatprep.subr.mxu0 0.0
    %4351 = vmatpush1.msra.mxu0 0.0
    %4352 = vmatprep.subr.mxu0 0.0
    %4353 = vmatpush1.msra.mxu0 0.0
    %4354 = vmatprep.subr.mxu0 0.0
    %4355 = vmatpush1.msra.mxu0 0.0
    %4356 = vmatprep.subr.mxu0 0.0
    %4357 = vmatpush1.msra.mxu0 0.0
    %4358 = vmatprep.subr.mxu0 0.0
    %4359 = vmatpush1.msra.mxu0 0.0
    %4360 = vmatprep.subr.mxu0 0.0
    %4361 = vmatpush1.msra.mxu0 0.0
    %4362 = vmatprep.subr.mxu0 0.0
    %4363 = vmatpush1.msra.mxu0 0.0
    %4364 = vmatprep.subr.mxu0 0.0
    %4365 = vmatpush1.msra.mxu0 0.0
    %4366 = vmatprep.subr.mxu0 0.0
    %4367 = vmatpush1.msra.mxu0 0.0
    %4368 = vmatprep.subr.mxu0 0.0
    %4369 = vmatpush1.msra.mxu0 0.0
    %4370 = vmatprep.subr.mxu0 0.0
    %4371 = vmatpush1.msra.mxu0 0.0
    %4372 = vmatprep.subr.mxu0 0.0
    %4373 = vmatpush1.msra.mxu0 0.0
    %4374 = vmatprep.subr.mxu0 0.0
    %4375 = vmatpush1.msra.mxu0 0.0
    %4376 = vmatprep.subr.mxu0 0.0
    %4377 = vmatpush1.msra.mxu0 0.0
    %4378 = vmatprep.subr.mxu0 0.0
    %4379 = vmatpush1.msra.mxu0 0.0
    %4380 = vmatprep.subr.mxu0 0.0
    %4381 = vmatpush1.msra.mxu0 0.0
    %4382 = vmatprep.subr.mxu0 0.0
    %4383 = vmatpush1.msra.mxu0 0.0
    %4384 = vmatprep.subr.mxu0 0.0
    %4385 = vmatpush1.msra.mxu0 0.0
    %4386 = vmatprep.subr.mxu0 0.0
    %4387 = vmatpush1.msra.mxu0 0.0
    %4388 = vmatprep.subr.mxu0 0.0
    %4389 = vmatpush1.msra.mxu0 0.0
    %4390 = vmatprep.subr.mxu0 0.0
    %4391 = vmatpush1.msra.mxu0 0.0
    %4392 = vmatprep.subr.mxu0 0.0
    %4393 = vmatpush1.msra.mxu0 0.0
    %4394 = vmatprep.subr.mxu0 0.0
    %4395 = vmatpush1.msra.mxu0 0.0
    %4396 = vmatprep.mubr.f32.mxu0 0.0
    %4397 = vmatmul.mubr.f32.gmra.mrb[0].mxu0 %v4327
    %v4398 = vpop.f32.mrb[0].mxu0
    %v4399 = vadd.f32 %v4324, %v4398
    %v4400 = vpop.f32.mrb[0].mxu0
    %4401 = vmatprep.mubr.f32.mxu0 0.0
    %4402 = vmatmul.mubr.f32.gmra.mrb[0].mxu0 %v4330
    %v4403 = vpop.f32.mrb[0].mxu0
    %v4404 = vadd.f32 %v4324, %v4403
    %v4405 = vpop.f32.mrb[0].mxu0
    %4406 = vdwg.mxu0
    %v4407 = vadd.f32 %v4399, %v3429
    %v4408 = vadd.f32 %v4404, %v3430
    %s4409 = scalar_lea.vmem %s14, 1
    %v4410 = vld [vmem:[%s4409] sm:$0x1]
    %s4411 = scalar_lea.vmem %s15, 1
    %v4412 = vld [vmem:[%s4411] sm:$0x1]
    %v4413 = vsel %vm150, %v4407, 0.0
    %4414 = vadd.xlane.f32.xlu0 %v4413
    %v4415 = vpop.xlane.xlu0 %4414
    %v4416 = vsel %vm150, %v4408, 0.0
    %4417 = vadd.xlane.f32.xlu0 %v4416
    %v4418 = vpop.xlane.xlu0 %4417
    %v4419 = vmul.f32 %v4415, %v1125
    %v4420 = vmul.f32 %v4418, %v1125
    %v4421 = vsub.f32 %v4407, %v4419
    %v4422 = vsub.f32 %v4408, %v4420
    %v4423 = vmul.f32 %v4421, %v4421
    %v4424 = vmul.f32 %v4422, %v4422
    %v4425 = vsel %vm150, %v4423, 0.0
    %4426 = vadd.xlane.f32.xlu0 %v4425
    %v4427 = vpop.xlane.xlu0 %4426
    %v4428 = vsel %vm150, %v4424, 0.0
    %4429 = vadd.xlane.f32.xlu0 %v4428
    %v4430 = vpop.xlane.xlu0 %4429
    %v4431 = vmul.f32 %v4427, %v1125
    %v4432 = vmul.f32 %v4430, %v1125
    %v4433 = vadd.f32 %v4431, 1e-05
    %v4434 = vadd.f32 %v4432, 1e-05
    %v4435 = vrsqrt.pop %v4433
    %v4436 = vrsqrt.pop %v4434
    %v4437 = vmul.f32 %v4421, %v4435
    %v4438 = vmul.f32 %v4422, %v4436
    %v4440 = vlaneseq
    %v4441 = vshrl.u32 %v4440, 7
    %v4442 = vsub.s32 0, %v4441
    %v4443 = vrot.slane %v4410, %v4442
    %v4445 = vmul.f32 %v4437, %v4443
    %v4446 = vmul.f32 %v4438, %v4443
    %v4448 = vlaneseq
    %v4449 = vshrl.u32 %v4448, 7
    %v4450 = vsub.s32 0, %v4449
    %v4451 = vrot.slane %v4412, %v4450
    %v4453 = vadd.f32 %v4445, %v4451
    %v4454 = vadd.f32 %v4446, %v4451
    %s4455 = scalar_lea.vmem %s16, 32
    %v4456 = vld [vmem:[%s4455] sm:$0xff]
    %v4457 = vld [vmem:[%s4455 + $0x8] sm:$0xff]
    %v4458 = vld [vmem:[%s4455 + $0x10] sm:$0xff]
    %v4459 = vld [vmem:[%s4455 + $0x18] sm:$0xff]
    %s4460 = scalar_lea.vmem %s17, 1
    %v4461 = vld [vmem:[%s4460] sm:$0x1]
    %v4463 = vlaneseq
    %v4464 = vshrl.u32 %v4463, 7
    %v4465 = vsub.s32 0, %v4464
    %v4466 = vrot.slane %v4461, %v4465
    %v4469 = vsel %vm150, %v4453, 0
    %v4472 = vsel %vm150, %v4454, 0
    %4474 = vmatprep.subr.mxu0 0.0
    %4475 = vmatpush1.msra.mxu0 %v4456
    %4476 = vmatprep.subr.mxu0 0.0
    %4477 = vmatpush1.msra.mxu0 %v4457
    %4478 = vmatprep.subr.mxu0 0.0
    %4479 = vmatpush1.msra.mxu0 %v4458
    %4480 = vmatprep.subr.mxu0 0.0
    %4481 = vmatpush1.msra.mxu0 %v4459
    %4482 = vmatprep.subr.mxu0 0.0
    %4483 = vmatpush1.msra.mxu0 0.0
    %4484 = vmatprep.subr.mxu0 0.0
    %4485 = vmatpush1.msra.mxu0 0.0
    %4486 = vmatprep.subr.mxu0 0.0
    %4487 = vmatpush1.msra.mxu0 0.0
    %4488 = vmatprep.subr.mxu0 0.0
    %4489 = vmatpush1.msra.mxu0 0.0
    %4490 = vmatprep.subr.mxu0 0.0
    %4491 = vmatpush1.msra.mxu0 0.0
    %4492 = vmatprep.subr.mxu0 0.0
    %4493 = vmatpush1.msra.mxu0 0.0
    %4494 = vmatprep.subr.mxu0 0.0
    %4495 = vmatpush1.msra.mxu0 0.0
    %4496 = vmatprep.subr.mxu0 0.0
    %4497 = vmatpush1.msra.mxu0 0.0
    %4498 = vmatprep.subr.mxu0 0.0
    %4499 = vmatpush1.msra.mxu0 0.0
    %4500 = vmatprep.subr.mxu0 0.0
    %4501 = vmatpush1.msra.mxu0 0.0
    %4502 = vmatprep.subr.mxu0 0.0
    %4503 = vmatpush1.msra.mxu0 0.0
    %4504 = vmatprep.subr.mxu0 0.0
    %4505 = vmatpush1.msra.mxu0 0.0
    %4506 = vmatprep.subr.mxu0 0.0
    %4507 = vmatpush1.msra.mxu0 0.0
    %4508 = vmatprep.subr.mxu0 0.0
    %4509 = vmatpush1.msra.mxu0 0.0
    %4510 = vmatprep.subr.mxu0 0.0
    %4511 = vmatpush1.msra.mxu0 0.0
    %4512 = vmatprep.subr.mxu0 0.0
    %4513 = vmatpush1.msra.mxu0 0.0
    %4514 = vmatprep.subr.mxu0 0.0
    %4515 = vmatpush1.msra.mxu0 0.0
    %4516 = vmatprep.subr.mxu0 0.0
    %4517 = vmatpush1.msra.mxu0 0.0
    %4518 = vmatprep.subr.mxu0 0.0
    %4519 = vmatpush1.msra.mxu0 0.0
    %4520 = vmatprep.subr.mxu0 0.0
    %4521 = vmatpush1.msra.mxu0 0.0
    %4522 = vmatprep.subr.mxu0 0.0
    %4523 = vmatpush1.msra.mxu0 0.0
    %4524 = vmatprep.subr.mxu0 0.0
    %4525 = vmatpush1.msra.mxu0 0.0
    %4526 = vmatprep.subr.mxu0 0.0
    %4527 = vmatpush1.msra.mxu0 0.0
    %4528 = vmatprep.subr.mxu0 0.0
    %4529 = vmatpush1.msra.mxu0 0.0
    %4530 = vmatprep.subr.mxu0 0.0
    %4531 = vmatpush1.msra.mxu0 0.0
    %4532 = vmatprep.subr.mxu0 0.0
    %4533 = vmatpush1.msra.mxu0 0.0
    %4534 = vmatprep.subr.mxu0 0.0
    %4535 = vmatpush1.msra.mxu0 0.0
    %4536 = vmatprep.subr.mxu0 0.0
    %4537 = vmatpush1.msra.mxu0 0.0
    %4538 = vmatprep.mubr.f32.mxu0 0.0
    %4539 = vmatmul.mubr.f32.gmra.mrb[0].mxu0 %v4469
    %v4540 = vpop.f32.mrb[0].mxu0
    %v4541 = vadd.f32 %v4466, %v4540
    %v4542 = vpop.f32.mrb[0].mxu0
    %4543 = vmatprep.mubr.f32.mxu0 0.0
    %4544 = vmatmul.mubr.f32.gmra.mrb[0].mxu0 %v4472
    %v4545 = vpop.f32.mrb[0].mxu0
    %v4546 = vadd.f32 %v4466, %v4545
    %v4547 = vpop.f32.mrb[0].mxu0
    %4548 = vdwg.mxu0
    %v4549 = vmax.f32 %v4541, 0.0
    %v4550 = vmax.f32 %v4546, 0.0
    %s4551 = scalar_lea.vmem %s18, 128
    %v4552 = vld [vmem:[%s4551] sm:$0xff]
    %v4553 = vld [vmem:[%s4551 + $0x8] sm:$0xff]
    %v4554 = vld [vmem:[%s4551 + $0x10] sm:$0xff]
    %v4555 = vld [vmem:[%s4551 + $0x18] sm:$0xff]
    %v4556 = vld [vmem:[%s4551 + $0x20] sm:$0xff]
    %v4557 = vld [vmem:[%s4551 + $0x28] sm:$0xff]
    %v4558 = vld [vmem:[%s4551 + $0x30] sm:$0xff]
    %v4559 = vld [vmem:[%s4551 + $0x38] sm:$0xff]
    %v4560 = vld [vmem:[%s4551 + $0x40] sm:$0xff]
    %v4561 = vld [vmem:[%s4551 + $0x48] sm:$0xff]
    %v4562 = vld [vmem:[%s4551 + $0x50] sm:$0xff]
    %v4563 = vld [vmem:[%s4551 + $0x58] sm:$0xff]
    %v4564 = vld [vmem:[%s4551 + $0x60] sm:$0xff]
    %v4565 = vld [vmem:[%s4551 + $0x68] sm:$0xff]
    %v4566 = vld [vmem:[%s4551 + $0x70] sm:$0xff]
    %v4567 = vld [vmem:[%s4551 + $0x78] sm:$0xff]
    %s4568 = scalar_lea.vmem %s19, 1
    %v4569 = vld [vmem:[%s4568] sm:$0x1]
    %v4571 = vlaneseq
    %v4572 = vshrl.u32 %v4571, 7
    %v4573 = vsub.s32 0, %v4572
    %v4574 = vrot.slane %v4569, %v4573
    %4576 = vmatprep.subr.mxu0 0.0
    %4577 = vmatpush1.msra.mxu0 %v4552
    %4578 = vmatprep.subr.mxu0 0.0
    %4579 = vmatpush1.msra.mxu0 %v4553
    %4580 = vmatprep.subr.mxu0 0.0
    %4581 = vmatpush1.msra.mxu0 %v4554
    %4582 = vmatprep.subr.mxu0 0.0
    %4583 = vmatpush1.msra.mxu0 %v4555
    %4584 = vmatprep.subr.mxu0 0.0
    %4585 = vmatpush1.msra.mxu0 %v4556
    %4586 = vmatprep.subr.mxu0 0.0
    %4587 = vmatpush1.msra.mxu0 %v4557
    %4588 = vmatprep.subr.mxu0 0.0
    %4589 = vmatpush1.msra.mxu0 %v4558
    %4590 = vmatprep.subr.mxu0 0.0
    %4591 = vmatpush1.msra.mxu0 %v4559
    %4592 = vmatprep.subr.mxu0 0.0
    %4593 = vmatpush1.msra.mxu0 %v4560
    %4594 = vmatprep.subr.mxu0 0.0
    %4595 = vmatpush1.msra.mxu0 %v4561
    %4596 = vmatprep.subr.mxu0 0.0
    %4597 = vmatpush1.msra.mxu0 %v4562
    %4598 = vmatprep.subr.mxu0 0.0
    %4599 = vmatpush1.msra.mxu0 %v4563
    %4600 = vmatprep.subr.mxu0 0.0
    %4601 = vmatpush1.msra.mxu0 %v4564
    %4602 = vmatprep.subr.mxu0 0.0
    %4603 = vmatpush1.msra.mxu0 %v4565
    %4604 = vmatprep.subr.mxu0 0.0
    %4605 = vmatpush1.msra.mxu0 %v4566
    %4606 = vmatprep.subr.mxu0 0.0
    %4607 = vmatpush1.msra.mxu0 %v4567
    %4608 = vmatprep.subr.mxu0 0.0
    %4609 = vmatpush1.msra.mxu0 0.0
    %4610 = vmatprep.subr.mxu0 0.0
    %4611 = vmatpush1.msra.mxu0 0.0
    %4612 = vmatprep.subr.mxu0 0.0
    %4613 = vmatpush1.msra.mxu0 0.0
    %4614 = vmatprep.subr.mxu0 0.0
    %4615 = vmatpush1.msra.mxu0 0.0
    %4616 = vmatprep.subr.mxu0 0.0
    %4617 = vmatpush1.msra.mxu0 0.0
    %4618 = vmatprep.subr.mxu0 0.0
    %4619 = vmatpush1.msra.mxu0 0.0
    %4620 = vmatprep.subr.mxu0 0.0
    %4621 = vmatpush1.msra.mxu0 0.0
    %4622 = vmatprep.subr.mxu0 0.0
    %4623 = vmatpush1.msra.mxu0 0.0
    %4624 = vmatprep.subr.mxu0 0.0
    %4625 = vmatpush1.msra.mxu0 0.0
    %4626 = vmatprep.subr.mxu0 0.0
    %4627 = vmatpush1.msra.mxu0 0.0
    %4628 = vmatprep.subr.mxu0 0.0
    %4629 = vmatpush1.msra.mxu0 0.0
    %4630 = vmatprep.subr.mxu0 0.0
    %4631 = vmatpush1.msra.mxu0 0.0
    %4632 = vmatprep.subr.mxu0 0.0
    %4633 = vmatpush1.msra.mxu0 0.0
    %4634 = vmatprep.subr.mxu0 0.0
    %4635 = vmatpush1.msra.mxu0 0.0
    %4636 = vmatprep.subr.mxu0 0.0
    %4637 = vmatpush1.msra.mxu0 0.0
    %4638 = vmatprep.subr.mxu0 0.0
    %4639 = vmatpush1.msra.mxu0 0.0
    %4640 = vmatprep.mubr.f32.mxu0 0.0
    %4641 = vmatmul.mubr.f32.gmra.mrb[0].mxu0 %v4549
    %v4642 = vpop.f32.mrb[0].mxu0
    %v4643 = vadd.f32 %v4574, %v4642
    %v4644 = vpop.f32.mrb[0].mxu0
    %4645 = vmatprep.mubr.f32.mxu0 0.0
    %4646 = vmatmul.mubr.f32.gmra.mrb[0].mxu0 %v4550
    %v4647 = vpop.f32.mrb[0].mxu0
    %v4648 = vadd.f32 %v4574, %v4647
    %v4649 = vpop.f32.mrb[0].mxu0
    %4650 = vdwg.mxu0
    %v4651 = vadd.f32 %v4643, %v4453
    %v4652 = vadd.f32 %v4648, %v4454
    %s4653 = scalar_lea.vmem %s20, 1
    %v4654 = vld [vmem:[%s4653] sm:$0x1]
    %s4655 = scalar_lea.vmem %s21, 1
    %v4656 = vld [vmem:[%s4655] sm:$0x1]
    %v4657 = vsel %vm150, %v4651, 0.0
    %4658 = vadd.xlane.f32.xlu0 %v4657
    %v4659 = vpop.xlane.xlu0 %4658
    %v4660 = vsel %vm150, %v4652, 0.0
    %4661 = vadd.xlane.f32.xlu0 %v4660
    %v4662 = vpop.xlane.xlu0 %4661
    %v4663 = vmul.f32 %v4659, %v1125
    %v4664 = vmul.f32 %v4662, %v1125
    %v4665 = vsub.f32 %v4651, %v4663
    %v4666 = vsub.f32 %v4652, %v4664
    %v4667 = vmul.f32 %v4665, %v4665
    %v4668 = vmul.f32 %v4666, %v4666
    %v4669 = vsel %vm150, %v4667, 0.0
    %4670 = vadd.xlane.f32.xlu0 %v4669
    %v4671 = vpop.xlane.xlu0 %4670
    %v4672 = vsel %vm150, %v4668, 0.0
    %4673 = vadd.xlane.f32.xlu0 %v4672
    %v4674 = vpop.xlane.xlu0 %4673
    %v4675 = vmul.f32 %v4671, %v1125
    %v4676 = vmul.f32 %v4674, %v1125
    %v4677 = vadd.f32 %v4675, 1e-05
    %v4678 = vadd.f32 %v4676, 1e-05
    %v4679 = vrsqrt.pop %v4677
    %v4680 = vrsqrt.pop %v4678
    %v4681 = vmul.f32 %v4665, %v4679
    %v4682 = vmul.f32 %v4666, %v4680
    %v4684 = vlaneseq
    %v4685 = vshrl.u32 %v4684, 7
    %v4686 = vsub.s32 0, %v4685
    %v4687 = vrot.slane %v4654, %v4686
    %v4689 = vmul.f32 %v4681, %v4687
    %v4690 = vmul.f32 %v4682, %v4687
    %v4692 = vlaneseq
    %v4693 = vshrl.u32 %v4692, 7
    %v4694 = vsub.s32 0, %v4693
    %v4695 = vrot.slane %v4656, %v4694
    %v4697 = vadd.f32 %v4689, %v4695
    %v4698 = vadd.f32 %v4690, %v4695
    %v4699 = vld [vmem:[%s22] sm:$0xff]
    %v4700 = vld [vmem:[%s22 + $0x8] sm:$0xff]
    %v4701 = vld [vmem:[%s22 + $0x10] sm:$0xff]
    %v4702 = vld [vmem:[%s22 + $0x18] sm:$0xff]
    %v4703 = vld [vmem:[%s23] sm:$0x1]
    %v4705 = vlaneseq
    %v4706 = vshrl.u32 %v4705, 7
    %v4707 = vsub.s32 0, %v4706
    %v4708 = vrot.slane %v4703, %v4707
    %v4711 = vsel %vm150, %v4697, 0
    %v4714 = vsel %vm150, %v4698, 0
    %4716 = vmatprep.subr.mxu0 0.0
    %4717 = vmatpush1.msra.mxu0 %v4699
    %4718 = vmatprep.subr.mxu0 0.0
    %4719 = vmatpush1.msra.mxu0 %v4700
    %4720 = vmatprep.subr.mxu0 0.0
    %4721 = vmatpush1.msra.mxu0 %v4701
    %4722 = vmatprep.subr.mxu0 0.0
    %4723 = vmatpush1.msra.mxu0 %v4702
    %4724 = vmatprep.subr.mxu0 0.0
    %4725 = vmatpush1.msra.mxu0 0.0
    %4726 = vmatprep.subr.mxu0 0.0
    %4727 = vmatpush1.msra.mxu0 0.0
    %4728 = vmatprep.subr.mxu0 0.0
    %4729 = vmatpush1.msra.mxu0 0.0
    %4730 = vmatprep.subr.mxu0 0.0
    %4731 = vmatpush1.msra.mxu0 0.0
    %4732 = vmatprep.subr.mxu0 0.0
    %4733 = vmatpush1.msra.mxu0 0.0
    %4734 = vmatprep.subr.mxu0 0.0
    %4735 = vmatpush1.msra.mxu0 0.0
    %4736 = vmatprep.subr.mxu0 0.0
    %4737 = vmatpush1.msra.mxu0 0.0
    %4738 = vmatprep.subr.mxu0 0.0
    %4739 = vmatpush1.msra.mxu0 0.0
    %4740 = vmatprep.subr.mxu0 0.0
    %4741 = vmatpush1.msra.mxu0 0.0
    %4742 = vmatprep.subr.mxu0 0.0
    %4743 = vmatpush1.msra.mxu0 0.0
    %4744 = vmatprep.subr.mxu0 0.0
    %4745 = vmatpush1.msra.mxu0 0.0
    %4746 = vmatprep.subr.mxu0 0.0
    %4747 = vmatpush1.msra.mxu0 0.0
    %4748 = vmatprep.subr.mxu0 0.0
    %4749 = vmatpush1.msra.mxu0 0.0
    %4750 = vmatprep.subr.mxu0 0.0
    %4751 = vmatpush1.msra.mxu0 0.0
    %4752 = vmatprep.subr.mxu0 0.0
    %4753 = vmatpush1.msra.mxu0 0.0
    %4754 = vmatprep.subr.mxu0 0.0
    %4755 = vmatpush1.msra.mxu0 0.0
    %4756 = vmatprep.subr.mxu0 0.0
    %4757 = vmatpush1.msra.mxu0 0.0
    %4758 = vmatprep.subr.mxu0 0.0
    %4759 = vmatpush1.msra.mxu0 0.0
    %4760 = vmatprep.subr.mxu0 0.0
    %4761 = vmatpush1.msra.mxu0 0.0
    %4762 = vmatprep.subr.mxu0 0.0
    %4763 = vmatpush1.msra.mxu0 0.0
    %4764 = vmatprep.subr.mxu0 0.0
    %4765 = vmatpush1.msra.mxu0 0.0
    %4766 = vmatprep.subr.mxu0 0.0
    %4767 = vmatpush1.msra.mxu0 0.0
    %4768 = vmatprep.subr.mxu0 0.0
    %4769 = vmatpush1.msra.mxu0 0.0
    %4770 = vmatprep.subr.mxu0 0.0
    %4771 = vmatpush1.msra.mxu0 0.0
    %4772 = vmatprep.subr.mxu0 0.0
    %4773 = vmatpush1.msra.mxu0 0.0
    %4774 = vmatprep.subr.mxu0 0.0
    %4775 = vmatpush1.msra.mxu0 0.0
    %4776 = vmatprep.subr.mxu0 0.0
    %4777 = vmatpush1.msra.mxu0 0.0
    %4778 = vmatprep.subr.mxu0 0.0
    %4779 = vmatpush1.msra.mxu0 0.0
    %4780 = vmatprep.mubr.f32.mxu0 0.0
    %4781 = vmatmul.mubr.f32.gmra.mrb[0].mxu0 %v4711
    %v4782 = vpop.f32.mrb[0].mxu0
    %v4783 = vadd.f32 %v4708, %v4782
    %v4784 = vpop.f32.mrb[0].mxu0
    %4785 = vmatprep.mubr.f32.mxu0 0.0
    %4786 = vmatmul.mubr.f32.gmra.mrb[0].mxu0 %v4714
    %v4787 = vpop.f32.mrb[0].mxu0
    %v4788 = vadd.f32 %v4708, %v4787
    %v4789 = vpop.f32.mrb[0].mxu0
    %4790 = vdwg.mxu0
    %v4791 = vmax.f32 %v4783, %v4788
    %v4792 = vsub.f32 %v4783, %v4791
    %v4793 = vsub.f32 %v4788, %v4791
    %v4794 = vmul.f32 %v4792, 1.442695
    %v4795 = vpow.pop %v4794
    %v4796 = vmul.f32 %v4793, 1.442695
    %v4797 = vpow.pop %v4796
    %v4798 = vadd.f32 %v4795, %v4797
    %v4799 = vrcp.pop %v4798
    %v4800 = vmul.f32 %v4795, %v4799
    %v4801 = vmul.f32 %v4797, %v4799
    %4802 = vst [vmem:[#allocation2] sm:$0xff] %v4800
    %4803 = vst [vmem:[#allocation2 + $0x8] sm:$0xff] %v4801
    // Predicated region
    $region98: #{decoder_forward.1} parent=1 // pred_check
      _
    $region99: #{decoder_forward.1} parent=1 // pred_check_branch
      %4805 = sbr.rel (0) target = $region101
    $region100: #{decoder_forward.1} parent=1 // pred_region
      %s4807 = ssub.s32 256, 256
      %4808 = vsyncadd [#allocation3], %s4807
      %s4809 = sshll.u32 [#allocation2], 4
      %s4810 = int_to_ptr.vmem [resolvable:$true] %s4809
      %4815 = dma.vmem_to_hbm [thread:$0]  %s4810, 256, %s24, [#allocation3], 128, 128, 8
    $region101: #{decoder_forward.1} parent=1 // pred_fallthru
      _
    // Predicated region
    $region102: #{decoder_forward.1} parent=1 // pred_check
      _
    $region103: #{decoder_forward.1} parent=1 // pred_check_branch
      %4817 = sbr.rel (0) target = $region105
    $region104: #{decoder_forward.1} parent=1 // pred_region
      %4818 = dma.done [#allocation3], 256
    $region105: #{decoder_forward.1} parent=1 // pred_fallthru
      _
    %4819 = vsyncpa [#allocation3], 1

</llo_original>
